<compile_context>
chip_gen: v5e
topology: v5e:2x2
jax: 0.10.0
libtpu: 0.0.40
codegen_flags: <defaults>
</compile_context>

<pallas_src>
import functools

import numpy as np
import jax
import jax.numpy as jnp
from jax import lax
from jax.experimental import pallas as pl
from jax.experimental.pallas import tpu as pltpu


# ------------------------------- fused kernel -------------------------------

def _rtgn_gat_kernel(
    x_ref, adj_ref, mask_ref,
    w0t_ref, b0_ref,
    cwt_ref, casrc_ref, cadst_ref, cb_ref,
    wih_ref, blstm_ref,
    w1t_ref, b1_ref,
    w2t_ref, b2_ref,
    w3t_ref, b3_ref,
    out_ref,
    qrh_ref,                       # persistent VMEM scratch: [q | r | hh]  (Gp, 3Hp) bf16
    *, num_layers, steps, hidden_pad):
    Hp = hidden_pad
    neg = jnp.float32(-1e30)
    bf16 = jnp.bfloat16
    contract = (((1,), (1,)), ((), ()))          # contract last dims, no batching

    # ---- GAT encoder: Linear(node_dim->H) + ReLU, then num_layers GATConv+ReLU ----
    x_b = x_ref[...].astype(bf16)
    h = jnp.maximum(
        jnp.dot(x_b, w0t_ref[...], preferred_element_type=jnp.float32) + b0_ref[...],
        0.0)                                                             # (Np, Hp) f32

    # hoisted additive edge-mask bias (computed once, reused across all layers)
    adj_bias = jnp.where(adj_ref[...] > 0, 0.0, neg)                     # (Np, Np) f32

    for l in range(num_layers):                                          # static unroll
        h_b = h.astype(bf16)
        wh = jnp.dot(h_b, cwt_ref[l], preferred_element_type=jnp.float32)  # (Np, Hp) f32
        wh_b = wh.astype(bf16)
        # dst attention term: lane reduce on the VPU/XLU (no 1-wide MXU matmul)
        e_dst = jnp.sum(wh * cadst_ref[l], axis=-1, keepdims=True)       # (Np, 1) f32
        # src attention term: (1,Hp) x (Np,Hp)^T -> (1,Np), lives in lanes
        e_src = lax.dot_general(casrc_ref[l], wh_b, contract,
                                preferred_element_type=jnp.float32)      # (1, Np)
        e = e_dst + e_src                                                # (dst, src)
        e = jnp.maximum(e, 0.2 * e)                                      # LeakyReLU(0.2)
        e = e + adj_bias                                                 # mask non-edges
        e = e - jnp.max(e, axis=-1, keepdims=True)
        p = jnp.exp(e)                                                   # masked entries underflow to 0
        inv = pl.reciprocal(jnp.sum(p, axis=-1, keepdims=True), approx=True)
        alpha_b = (p * inv).astype(bf16)                                 # softmax over src per dst
        h = jnp.maximum(
            jnp.dot(alpha_b, wh_b, preferred_element_type=jnp.float32) + cb_ref[l],
            0.0)

    # ---- Set2Set(hidden, processing_steps=steps), single-layer LSTM ----
    h_b = h.astype(bf16)                                                 # reused every step
    mask = mask_ref[...]                                                 # (Gp, Np) graph membership, f32
    mask_bias = jnp.where(mask > 0, 0.0, neg)
    wih = wih_ref[...]                                                   # (3Hp, 4Hp) bf16  [q|r|hh] -> gates
    blstm = blstm_ref[...]                                               # (1, 4Hp) f32 = b_ih + b_hh
    Gp = mask.shape[0]

    # scratch persists across grid steps -> must re-zero per graph-set (q_star=0, hh=0)
    qrh_ref[...] = jnp.zeros_like(qrh_ref)

    def s2s_step(_, cc):
        # single fused gate matmul per step (was 3 dependent small matmuls)
        gates = (jnp.dot(qrh_ref[...], wih, preferred_element_type=jnp.float32)
                 + blstm)                                                # (Gp, 4Hp) f32, lane-aligned gates
        i = jax.nn.sigmoid(gates[:, 0 * Hp:1 * Hp])                      # PyTorch gate order i,f,g,o
        f = jax.nn.sigmoid(gates[:, 1 * Hp:2 * Hp])
        g = jnp.tanh(gates[:, 2 * Hp:3 * Hp])
        o = jax.nn.sigmoid(gates[:, 3 * Hp:4 * Hp])
        cc = f * cc + i * g                                              # cell state stays f32
        hh = o * jnp.tanh(cc)
        q_b = hh.astype(bf16)                                            # (Gp, Hp)
        e = lax.dot_general(q_b, h_b, contract,
                            preferred_element_type=jnp.float32)          # (Gp, Np)
        e = e + mask_bias
        e = e - jnp.max(e, axis=-1, keepdims=True)
        p = jnp.exp(e) * mask
        denom = jnp.maximum(jnp.sum(p, axis=-1, keepdims=True), jnp.float32(1e-20))
        a_b = (p * pl.reciprocal(denom, approx=True)).astype(bf16)       # segment softmax per graph
        r = jnp.dot(a_b, h_b, preferred_element_type=jnp.float32)        # (Gp, Hp)
        # write next-step LSTM input [q | r | hh] into the persistent bf16 operand
        qrh_ref[:, 0 * Hp:1 * Hp] = q_b
        qrh_ref[:, 1 * Hp:2 * Hp] = r.astype(bf16)
        qrh_ref[:, 2 * Hp:3 * Hp] = q_b                                  # LSTM hidden == q
        return cc

    cc0 = jnp.zeros((Gp, Hp), jnp.float32)
    lax.fori_loop(0, steps, s2s_step, cc0, unroll=True)

    # ---- MLP value head: Linear(2H->H)+ReLU, Linear(H->H)+ReLU, Linear(H->1) ----
    qr_b = qrh_ref[:, 0:2 * Hp]                                          # (Gp, 2Hp) bf16 = q_star
    h1 = jnp.maximum(
        jnp.dot(qr_b, w1t_ref[...], preferred_element_type=jnp.float32) + b1_ref[...], 0.0)
    h2 = jnp.maximum(
        jnp.dot(h1.astype(bf16), w2t_ref[...], preferred_element_type=jnp.float32)
        + b2_ref[...], 0.0)
    # lane-dense (Gp, 128) store; real value sits in column 0.
    out_ref[...] = (jnp.dot(h2.astype(bf16), w3t_ref[...],
                            preferred_element_type=jnp.float32) + b3_ref[...])


# --------------------------- parameters & padding ---------------------------

def init_params(key, hidden_dim, node_dim, num_gat_layers=3):
    """PyTorch-layout parameters for RTGNGat (GAT + Set2Set LSTM + MLP head)."""
    def nrm(k, shape, scale=0.1):
        return scale * jax.random.normal(k, shape, jnp.float32)

    keys = iter(jax.random.split(key, 32))
    p = {
        "lin0_w": nrm(next(keys), (hidden_dim, node_dim)),
        "lin0_b": nrm(next(keys), (hidden_dim,)),
        "convs": [],
        "lstm_w_ih": nrm(next(keys), (4 * hidden_dim, 2 * hidden_dim)),
        "lstm_w_hh": nrm(next(keys), (4 * hidden_dim, hidden_dim)),
        "lstm_b_ih": nrm(next(keys), (4 * hidden_dim,)),
        "lstm_b_hh": nrm(next(keys), (4 * hidden_dim,)),
        "mlp1_w": nrm(next(keys), (hidden_dim, 2 * hidden_dim)),
        "mlp1_b": nrm(next(keys), (hidden_dim,)),
        "mlp2_w": nrm(next(keys), (hidden_dim, hidden_dim)),
        "mlp2_b": nrm(next(keys), (hidden_dim,)),
        "mlp3_w": nrm(next(keys), (1, hidden_dim)),
        "mlp3_b": nrm(next(keys), (1,)),
    }
    for _ in range(num_gat_layers):
        p["convs"].append(dict(
            w=nrm(next(keys), (hidden_dim, hidden_dim)),
            att_src=nrm(next(keys), (hidden_dim,)),
            att_dst=nrm(next(keys), (hidden_dim,)),
            bias=nrm(next(keys), (hidden_dim,)),
        ))
    return p


def prepare_params(p, hidden, node_dim, *, hidden_pad=128, node_pad=128, out_pad=128):
    """One-time: transpose to (in, out) layout, zero-pad to 128 lanes, cast matmul weights to bf16."""
    H, Hp, Dp = hidden, hidden_pad, node_pad
    bf16 = jnp.bfloat16

    def pad2(a, rows, cols):
        out = jnp.zeros((rows, cols), jnp.float32)
        return out.at[:a.shape[0], :a.shape[1]].set(a)

    def padT(w, rows, cols):                      # w: torch (out, in) -> (rows, cols)
        return pad2(jnp.asarray(w).T, rows, cols)

    def pad_row(b, cols):
        return pad2(jnp.asarray(b).reshape(1, -1), 1, cols)

    def pad_gates_T(w):                           # (4H, H) -> (Hp, 4Hp), lane-aligned gate blocks
        out = jnp.zeros((Hp, 4 * Hp), jnp.float32)
        for k in range(4):
            out = out.at[:H, k * Hp:k * Hp + H].set(jnp.asarray(w)[k * H:(k + 1) * H, :].T)
        return out

    def pad_gate_bias(b):                         # (4H,) -> (1, 4Hp)
        out = jnp.zeros((1, 4 * Hp), jnp.float32)
        for k in range(4):
            out = out.at[0, k * Hp:k * Hp + H].set(jnp.asarray(b)[k * H:(k + 1) * H])
        return out

    w_ih = jnp.asarray(p["lstm_w_ih"])
    mlp1_w = jnp.asarray(p["mlp1_w"])
    # stacked LSTM gate weight for the single fused [q|r|hh] matmul per Set2Set step
    wih = jnp.concatenate([pad_gates_T(w_ih[:, :H]),
                           pad_gates_T(w_ih[:, H:2 * H]),
                           pad_gates_T(p["lstm_w_hh"])], axis=0)          # (3Hp, 4Hp)
    # stacked MLP1 weight for the single fused [q|r] matmul
    w1t = jnp.concatenate([padT(mlp1_w[:, :H], Hp, Hp),
                           padT(mlp1_w[:, H:2 * H], Hp, Hp)], axis=0)     # (2Hp, Hp)
    return dict(
        w0t=padT(p["lin0_w"], Dp, Hp).astype(bf16),
        b0=pad_row(p["lin0_b"], Hp),
        conv_wt=jnp.stack([padT(c["w"], Hp, Hp) for c in p["convs"]]).astype(bf16),
        conv_asrc=jnp.stack([pad_row(c["att_src"], Hp) for c in p["convs"]]).astype(bf16),
        conv_adst=jnp.stack([pad_row(c["att_dst"], Hp) for c in p["convs"]]),   # f32 (VPU reduce)
        conv_b=jnp.stack([pad_row(c["bias"], Hp) for c in p["convs"]]),
        wih=wih.astype(bf16),
        blstm=pad_gate_bias(jnp.asarray(p["lstm_b_ih"]) + jnp.asarray(p["lstm_b_hh"])),
        w1t=w1t.astype(bf16),
        b1=pad_row(p["mlp1_b"], Hp),
        w2t=padT(p["mlp2_w"], Hp, Hp).astype(bf16),
        b2=pad_row(p["mlp2_b"], Hp),
        w3t=padT(p["mlp3_w"], Hp, out_pad).astype(bf16),
        b3=pad_row(p["mlp3_b"], out_pad),
    )


# ---------------------------------- forward ---------------------------------

def rtgn_gat_forward(prep, x_pad, adj, mask, *, num_graphs, num_layers=3, steps=6):
    """x_pad: (B, Np, Dp) f32; adj: (B, Np, Np) f32 (self-loops present); mask: (B, Gp, Np) f32."""
    B, Gp, Np = mask.shape
    Dp = x_pad.shape[-1]
    Hp = prep["w0t"].shape[1]
    out_pad = prep["w3t"].shape[1]

    weight_names = ["w0t", "b0", "conv_wt", "conv_asrc", "conv_adst", "conv_b",
                    "wih", "blstm", "w1t", "b1", "w2t", "b2", "w3t", "b3"]
    weights = [prep[k] for k in weight_names]

    def const_spec(a):
        # full-array block, constant index_map -> DMA'd once, VMEM-resident across grid steps
        return pl.BlockSpec(a.shape, lambda b, n=a.ndim: (0,) * n)

    in_specs = ([pl.BlockSpec((None, Np, Dp), lambda b: (b, 0, 0)),
                 pl.BlockSpec((None, Np, Np), lambda b: (b, 0, 0)),
                 pl.BlockSpec((None, Gp, Np), lambda b: (b, 0, 0))]
                + [const_spec(w) for w in weights])

    out = pl.pallas_call(
        functools.partial(_rtgn_gat_kernel,
                          num_layers=num_layers, steps=steps, hidden_pad=Hp),
        out_shape=jax.ShapeDtypeStruct((B, Gp, out_pad), jnp.float32),
        grid=(B,),
        in_specs=in_specs,
        out_specs=pl.BlockSpec((None, Gp, out_pad), lambda b: (b, 0, 0)),
        scratch_shapes=[pltpu.VMEM((Gp, 3 * Hp), jnp.bfloat16)],
        compiler_params=pltpu.CompilerParams(
            dimension_semantics=("parallel",),          # both TCs on v7x
            vmem_limit_bytes=32 * 1024 * 1024),
    )(x_pad, adj, mask, *weights)
    return out[:, :num_graphs, :1]                      # (B, num_graphs, 1) value


# ------------------------------------ main -----------------------------------

if __name__ == "__main__":
    HIDDEN, NODE_DIM = 32, 8
    NODES_PER_GRAPH, NUM_GRAPHS = 8, 2
    N = NODES_PER_GRAPH * NUM_GRAPHS
    B = 2                                           # graph-sets per call (parallel grid axis)
    NP, HP, DP, GP, OUTP = 128, 128, 128, 8, 128    # padded node / hidden / feat / graph / out dims

    key = jax.random.PRNGKey(0)
    kx, kp = jax.random.split(key)
    params = init_params(kp, HIDDEN, NODE_DIM)
    prep = prepare_params(params, HIDDEN, NODE_DIM, hidden_pad=HP, node_pad=DP, out_pad=OUTP)

    x = jax.random.normal(kx, (B, N, NODE_DIM), jnp.float32)
    x_pad = np.zeros((B, NP, DP), np.float32)
    x_pad[:, :N, :NODE_DIM] = np.asarray(x)

    # Two chain graphs (8 nodes each) per graph-set, bidirectional edges; densified edge_index/batch.
    adj1 = np.zeros((NP, NP), np.float32)
    batch = np.zeros((N,), np.int32)
    for g in range(NUM_GRAPHS):
        o = g * NODES_PER_GRAPH
        batch[o:o + NODES_PER_GRAPH] = g
        for i in range(NODES_PER_GRAPH - 1):
            adj1[o + i + 1, o + i] = 1.0
            adj1[o + i, o + i + 1] = 1.0
    adj1[np.arange(NP), np.arange(NP)] = 1.0        # self loops (PyG GATConv default); padded nodes too
    mask1 = np.zeros((GP, NP), np.float32)
    mask1[batch, np.arange(N)] = 1.0                # padded nodes / padded graphs stay 0
    adj = np.broadcast_to(adj1, (B, NP, NP)).copy()
    mask = np.broadcast_to(mask1, (B, GP, NP)).copy()

    fwd = jax.jit(functools.partial(rtgn_gat_forward, num_graphs=NUM_GRAPHS))
    v = fwd(prep, jnp.asarray(x_pad), jnp.asarray(adj), jnp.asarray(mask))
    v = jax.block_until_ready(v)
    assert v.shape == (B, NUM_GRAPHS, 1) and v.dtype == jnp.float32
    assert bool(jnp.all(jnp.isfinite(v)))
    print("KERNEL_OK")
</pallas_src>

<mosaic_0001>
module attributes {stable_mosaic.version = 11 : i64} {
  func.func @_rtgn_gat_kernel(%arg0: i32, %arg1: memref<1x128x128xf32, #tpu.memory_space<vmem>>, %arg2: memref<1x128x128xf32, #tpu.memory_space<vmem>>, %arg3: memref<1x8x128xf32, #tpu.memory_space<vmem>>, %arg4: memref<128x128xbf16, #tpu.memory_space<vmem>>, %arg5: memref<1x128xf32, #tpu.memory_space<vmem>>, %arg6: memref<3x128x128xbf16, #tpu.memory_space<vmem>>, %arg7: memref<3x1x128xbf16, #tpu.memory_space<vmem>>, %arg8: memref<3x1x128xf32, #tpu.memory_space<vmem>>, %arg9: memref<3x1x128xf32, #tpu.memory_space<vmem>>, %arg10: memref<384x512xbf16, #tpu.memory_space<vmem>>, %arg11: memref<1x512xf32, #tpu.memory_space<vmem>>, %arg12: memref<256x128xbf16, #tpu.memory_space<vmem>>, %arg13: memref<1x128xf32, #tpu.memory_space<vmem>>, %arg14: memref<128x128xbf16, #tpu.memory_space<vmem>>, %arg15: memref<1x128xf32, #tpu.memory_space<vmem>>, %arg16: memref<128x128xbf16, #tpu.memory_space<vmem>>, %arg17: memref<1x128xf32, #tpu.memory_space<vmem>>, %arg18: memref<1x8x128xf32, #tpu.memory_space<vmem>>, %arg19: memref<8x384xbf16, #tpu.memory_space<vmem>>) attributes {dimension_semantics = [#tpu.dimension_semantics<parallel>], iteration_bounds = array<i64: 2>, scalar_prefetch = 0 : i64, scratch_operands = 1 : i64, tpu.core_type = #tpu.core_type<tc>, window_params = [{transform_indices = @transform_0, window_bounds = array<i64: 1, 128, 128>}, {transform_indices = @transform_1, window_bounds = array<i64: 1, 128, 128>}, {transform_indices = @transform_2, window_bounds = array<i64: 1, 8, 128>}, {pipeline_mode = #tpu.pipeline_mode<synchronous>, transform_indices = @transform_3, window_bounds = array<i64: 128, 128>}, {pipeline_mode = #tpu.pipeline_mode<synchronous>, transform_indices = @transform_4, window_bounds = array<i64: 1, 128>}, {pipeline_mode = #tpu.pipeline_mode<synchronous>, transform_indices = @transform_5, window_bounds = array<i64: 3, 128, 128>}, {pipeline_mode = #tpu.pipeline_mode<synchronous>, transform_indices = @transform_6, window_bounds = array<i64: 3, 1, 128>}, {pipeline_mode = #tpu.pipeline_mode<synchronous>, transform_indices = @transform_7, window_bounds = array<i64: 3, 1, 128>}, {pipeline_mode = #tpu.pipeline_mode<synchronous>, transform_indices = @transform_8, window_bounds = array<i64: 3, 1, 128>}, {pipeline_mode = #tpu.pipeline_mode<synchronous>, transform_indices = @transform_9, window_bounds = array<i64: 384, 512>}, {pipeline_mode = #tpu.pipeline_mode<synchronous>, transform_indices = @transform_10, window_bounds = array<i64: 1, 512>}, {pipeline_mode = #tpu.pipeline_mode<synchronous>, transform_indices = @transform_11, window_bounds = array<i64: 256, 128>}, {pipeline_mode = #tpu.pipeline_mode<synchronous>, transform_indices = @transform_12, window_bounds = array<i64: 1, 128>}, {pipeline_mode = #tpu.pipeline_mode<synchronous>, transform_indices = @transform_13, window_bounds = array<i64: 128, 128>}, {pipeline_mode = #tpu.pipeline_mode<synchronous>, transform_indices = @transform_14, window_bounds = array<i64: 1, 128>}, {pipeline_mode = #tpu.pipeline_mode<synchronous>, transform_indices = @transform_15, window_bounds = array<i64: 128, 128>}, {pipeline_mode = #tpu.pipeline_mode<synchronous>, transform_indices = @transform_16, window_bounds = array<i64: 1, 128>}, {transform_indices = @transform_17, window_bounds = array<i64: 1, 8, 128>}]} {
    %c0 = arith.constant 0 : index
    %c0_0 = arith.constant 0 : index
    %c0_1 = arith.constant 0 : index
    %0 = vector.load %arg1[%c0, %c0_0, %c0_1] : memref<1x128x128xf32, #tpu.memory_space<vmem>>, vector<1x128x128xf32>
    %1 = vector.shape_cast %0 : vector<1x128x128xf32> to vector<128x128xf32>
    %2 = arith.truncf %1 : vector<128x128xf32> to vector<128x128xbf16>
    %c0_2 = arith.constant 0 : index
    %c0_3 = arith.constant 0 : index
    %3 = vector.load %arg4[%c0_2, %c0_3] : memref<128x128xbf16, #tpu.memory_space<vmem>>, vector<128x128xbf16>
    %cst = arith.constant dense<0.000000e+00> : vector<128x128xf32>
    %4 = tpu.matmul %2, %3, %cst {dimension_numbers = #tpu.dot_dimension_numbers<[1], [0], [0], [1], [0, 0, 1, 1], [], []>} : vector<128x128xbf16>, vector<128x128xbf16>, vector<128x128xf32> -> vector<128x128xf32>
    %c0_4 = arith.constant 0 : index
    %c0_5 = arith.constant 0 : index
    %5 = vector.load %arg5[%c0_4, %c0_5] : memref<1x128xf32, #tpu.memory_space<vmem>>, vector<1x128xf32>
    %6 = vector.broadcast %5 : vector<1x128xf32> to vector<128x128xf32>
    %7 = arith.addf %4, %6 : vector<128x128xf32>
    %cst_6 = arith.constant 0.000000e+00 : f32
    %8 = vector.broadcast %cst_6 : f32 to vector<128x128xf32>
    %9 = arith.maximumf %7, %8 : vector<128x128xf32>
    %c0_7 = arith.constant 0 : index
    %c0_8 = arith.constant 0 : index
    %c0_9 = arith.constant 0 : index
    %10 = vector.load %arg2[%c0_7, %c0_8, %c0_9] : memref<1x128x128xf32, #tpu.memory_space<vmem>>, vector<1x128x128xf32>
    %11 = vector.shape_cast %10 : vector<1x128x128xf32> to vector<128x128xf32>
    %cst_10 = arith.constant 0.000000e+00 : f32
    %12 = vector.broadcast %cst_10 : f32 to vector<128x128xf32>
    %13 = arith.cmpf ogt, %11, %12 : vector<128x128xf32>
    %cst_11 = arith.constant 0.000000e+00 : f32
    %cst_12 = arith.constant -1.000000e+30 : f32
    %14 = vector.broadcast %cst_11 : f32 to vector<128x128xf32>
    %15 = vector.broadcast %cst_12 : f32 to vector<128x128xf32>
    %16 = arith.select %13, %14, %15 : vector<128x128xi1>, vector<128x128xf32>
    %17 = arith.truncf %9 : vector<128x128xf32> to vector<128x128xbf16>
    %c0_13 = arith.constant 0 : index
    %c0_14 = arith.constant 0 : index
    %c0_15 = arith.constant 0 : index
    %18 = vector.load %arg6[%c0_13, %c0_14, %c0_15] : memref<3x128x128xbf16, #tpu.memory_space<vmem>>, vector<1x128x128xbf16>
    %19 = vector.shape_cast %18 : vector<1x128x128xbf16> to vector<128x128xbf16>
    %cst_16 = arith.constant dense<0.000000e+00> : vector<128x128xf32>
    %20 = tpu.matmul %17, %19, %cst_16 {dimension_numbers = #tpu.dot_dimension_numbers<[1], [0], [0], [1], [0, 0, 1, 1], [], []>} : vector<128x128xbf16>, vector<128x128xbf16>, vector<128x128xf32> -> vector<128x128xf32>
    %21 = arith.truncf %20 : vector<128x128xf32> to vector<128x128xbf16>
    %c0_17 = arith.constant 0 : index
    %c0_18 = arith.constant 0 : index
    %c0_19 = arith.constant 0 : index
    %22 = vector.load %arg8[%c0_17, %c0_18, %c0_19] : memref<3x1x128xf32, #tpu.memory_space<vmem>>, vector<1x1x128xf32>
    %23 = vector.shape_cast %22 : vector<1x1x128xf32> to vector<1x128xf32>
    %24 = vector.broadcast %23 : vector<1x128xf32> to vector<128x128xf32>
    %25 = arith.mulf %20, %24 : vector<128x128xf32>
    %cst_20 = arith.constant dense<0.000000e+00> : vector<128xf32>
    %26 = vector.multi_reduction <add>, %25, %cst_20 [1] : vector<128x128xf32> to vector<128xf32>
    %27 = vector.shape_cast %26 : vector<128xf32> to vector<128x1xf32>
    %c0_21 = arith.constant 0 : index
    %c0_22 = arith.constant 0 : index
    %c0_23 = arith.constant 0 : index
    %28 = vector.load %arg7[%c0_21, %c0_22, %c0_23] : memref<3x1x128xbf16, #tpu.memory_space<vmem>>, vector<1x1x128xbf16>
    %29 = vector.shape_cast %28 : vector<1x1x128xbf16> to vector<1x128xbf16>
    %cst_24 = arith.constant dense<0.000000e+00> : vector<1x128xf32>
    %30 = tpu.matmul %29, %21, %cst_24 {dimension_numbers = #tpu.dot_dimension_numbers<[1], [1], [0], [0], [0, 0, 1, 0], [], []>} : vector<1x128xbf16>, vector<128x128xbf16>, vector<1x128xf32> -> vector<1x128xf32>
    %31 = vector.broadcast %27 : vector<128x1xf32> to vector<128x128xf32>
    %32 = vector.broadcast %30 : vector<1x128xf32> to vector<128x128xf32>
    %33 = arith.addf %31, %32 : vector<128x128xf32>
    %cst_25 = arith.constant 2.000000e-01 : f32
    %34 = vector.broadcast %cst_25 : f32 to vector<128x128xf32>
    %35 = arith.mulf %34, %33 : vector<128x128xf32>
    %36 = arith.maximumf %33, %35 : vector<128x128xf32>
    %37 = arith.addf %36, %16 : vector<128x128xf32>
    %cst_26 = arith.constant dense<0xFF800000> : vector<128xf32>
    %38 = vector.multi_reduction <maximumf>, %37, %cst_26 [1] : vector<128x128xf32> to vector<128xf32>
    %39 = vector.shape_cast %38 : vector<128xf32> to vector<128x1xf32>
    %40 = vector.broadcast %39 : vector<128x1xf32> to vector<128x128xf32>
    %41 = arith.subf %37, %40 : vector<128x128xf32>
    %42 = math.exp %41 : vector<128x128xf32>
    %cst_27 = arith.constant dense<0.000000e+00> : vector<128xf32>
    %43 = vector.multi_reduction <add>, %42, %cst_27 [1] : vector<128x128xf32> to vector<128xf32>
    %44 = vector.shape_cast %43 : vector<128xf32> to vector<128x1xf32>
    %45 = tpu.reciprocal %44 {approx = true} : vector<128x1xf32> -> vector<128x1xf32>
    %46 = vector.broadcast %45 : vector<128x1xf32> to vector<128x128xf32>
    %47 = arith.mulf %42, %46 : vector<128x128xf32>
    %48 = arith.truncf %47 : vector<128x128xf32> to vector<128x128xbf16>
    %cst_28 = arith.constant dense<0.000000e+00> : vector<128x128xf32>
    %49 = tpu.matmul %48, %21, %cst_28 {dimension_numbers = #tpu.dot_dimension_numbers<[1], [0], [0], [1], [0, 0, 1, 1], [], []>} : vector<128x128xbf16>, vector<128x128xbf16>, vector<128x128xf32> -> vector<128x128xf32>
    %c0_29 = arith.constant 0 : index
    %c0_30 = arith.constant 0 : index
    %c0_31 = arith.constant 0 : index
    %50 = vector.load %arg9[%c0_29, %c0_30, %c0_31] : memref<3x1x128xf32, #tpu.memory_space<vmem>>, vector<1x1x128xf32>
    %51 = vector.shape_cast %50 : vector<1x1x128xf32> to vector<1x128xf32>
    %52 = vector.broadcast %51 : vector<1x128xf32> to vector<128x128xf32>
    %53 = arith.addf %49, %52 : vector<128x128xf32>
    %cst_32 = arith.constant 0.000000e+00 : f32
    %54 = vector.broadcast %cst_32 : f32 to vector<128x128xf32>
    %55 = arith.maximumf %53, %54 : vector<128x128xf32>
    %56 = arith.truncf %55 : vector<128x128xf32> to vector<128x128xbf16>
    %c1 = arith.constant 1 : index
    %c0_33 = arith.constant 0 : index
    %c0_34 = arith.constant 0 : index
    %57 = vector.load %arg6[%c1, %c0_33, %c0_34] : memref<3x128x128xbf16, #tpu.memory_space<vmem>>, vector<1x128x128xbf16>
    %58 = vector.shape_cast %57 : vector<1x128x128xbf16> to vector<128x128xbf16>
    %cst_35 = arith.constant dense<0.000000e+00> : vector<128x128xf32>
    %59 = tpu.matmul %56, %58, %cst_35 {dimension_numbers = #tpu.dot_dimension_numbers<[1], [0], [0], [1], [0, 0, 1, 1], [], []>} : vector<128x128xbf16>, vector<128x128xbf16>, vector<128x128xf32> -> vector<128x128xf32>
    %60 = arith.truncf %59 : vector<128x128xf32> to vector<128x128xbf16>
    %c1_36 = arith.constant 1 : index
    %c0_37 = arith.constant 0 : index
    %c0_38 = arith.constant 0 : index
    %61 = vector.load %arg8[%c1_36, %c0_37, %c0_38] : memref<3x1x128xf32, #tpu.memory_space<vmem>>, vector<1x1x128xf32>
    %62 = vector.shape_cast %61 : vector<1x1x128xf32> to vector<1x128xf32>
    %63 = vector.broadcast %62 : vector<1x128xf32> to vector<128x128xf32>
    %64 = arith.mulf %59, %63 : vector<128x128xf32>
    %cst_39 = arith.constant dense<0.000000e+00> : vector<128xf32>
    %65 = vector.multi_reduction <add>, %64, %cst_39 [1] : vector<128x128xf32> to vector<128xf32>
    %66 = vector.shape_cast %65 : vector<128xf32> to vector<128x1xf32>
    %c1_40 = arith.constant 1 : index
    %c0_41 = arith.constant 0 : index
    %c0_42 = arith.constant 0 : index
    %67 = vector.load %arg7[%c1_40, %c0_41, %c0_42] : memref<3x1x128xbf16, #tpu.memory_space<vmem>>, vector<1x1x128xbf16>
    %68 = vector.shape_cast %67 : vector<1x1x128xbf16> to vector<1x128xbf16>
    %cst_43 = arith.constant dense<0.000000e+00> : vector<1x128xf32>
    %69 = tpu.matmul %68, %60, %cst_43 {dimension_numbers = #tpu.dot_dimension_numbers<[1], [1], [0], [0], [0, 0, 1, 0], [], []>} : vector<1x128xbf16>, vector<128x128xbf16>, vector<1x128xf32> -> vector<1x128xf32>
    %70 = vector.broadcast %66 : vector<128x1xf32> to vector<128x128xf32>
    %71 = vector.broadcast %69 : vector<1x128xf32> to vector<128x128xf32>
    %72 = arith.addf %70, %71 : vector<128x128xf32>
    %cst_44 = arith.constant 2.000000e-01 : f32
    %73 = vector.broadcast %cst_44 : f32 to vector<128x128xf32>
    %74 = arith.mulf %73, %72 : vector<128x128xf32>
    %75 = arith.maximumf %72, %74 : vector<128x128xf32>
    %76 = arith.addf %75, %16 : vector<128x128xf32>
    %cst_45 = arith.constant dense<0xFF800000> : vector<128xf32>
    %77 = vector.multi_reduction <maximumf>, %76, %cst_45 [1] : vector<128x128xf32> to vector<128xf32>
    %78 = vector.shape_cast %77 : vector<128xf32> to vector<128x1xf32>
    %79 = vector.broadcast %78 : vector<128x1xf32> to vector<128x128xf32>
    %80 = arith.subf %76, %79 : vector<128x128xf32>
    %81 = math.exp %80 : vector<128x128xf32>
    %cst_46 = arith.constant dense<0.000000e+00> : vector<128xf32>
    %82 = vector.multi_reduction <add>, %81, %cst_46 [1] : vector<128x128xf32> to vector<128xf32>
    %83 = vector.shape_cast %82 : vector<128xf32> to vector<128x1xf32>
    %84 = tpu.reciprocal %83 {approx = true} : vector<128x1xf32> -> vector<128x1xf32>
    %85 = vector.broadcast %84 : vector<128x1xf32> to vector<128x128xf32>
    %86 = arith.mulf %81, %85 : vector<128x128xf32>
    %87 = arith.truncf %86 : vector<128x128xf32> to vector<128x128xbf16>
    %cst_47 = arith.constant dense<0.000000e+00> : vector<128x128xf32>
    %88 = tpu.matmul %87, %60, %cst_47 {dimension_numbers = #tpu.dot_dimension_numbers<[1], [0], [0], [1], [0, 0, 1, 1], [], []>} : vector<128x128xbf16>, vector<128x128xbf16>, vector<128x128xf32> -> vector<128x128xf32>
    %c1_48 = arith.constant 1 : index
    %c0_49 = arith.constant 0 : index
    %c0_50 = arith.constant 0 : index
    %89 = vector.load %arg9[%c1_48, %c0_49, %c0_50] : memref<3x1x128xf32, #tpu.memory_space<vmem>>, vector<1x1x128xf32>
    %90 = vector.shape_cast %89 : vector<1x1x128xf32> to vector<1x128xf32>
    %91 = vector.broadcast %90 : vector<1x128xf32> to vector<128x128xf32>
    %92 = arith.addf %88, %91 : vector<128x128xf32>
    %cst_51 = arith.constant 0.000000e+00 : f32
    %93 = vector.broadcast %cst_51 : f32 to vector<128x128xf32>
    %94 = arith.maximumf %92, %93 : vector<128x128xf32>
    %95 = arith.truncf %94 : vector<128x128xf32> to vector<128x128xbf16>
    %c2 = arith.constant 2 : index
    %c0_52 = arith.constant 0 : index
    %c0_53 = arith.constant 0 : index
    %96 = vector.load %arg6[%c2, %c0_52, %c0_53] : memref<3x128x128xbf16, #tpu.memory_space<vmem>>, vector<1x128x128xbf16>
    %97 = vector.shape_cast %96 : vector<1x128x128xbf16> to vector<128x128xbf16>
    %cst_54 = arith.constant dense<0.000000e+00> : vector<128x128xf32>
    %98 = tpu.matmul %95, %97, %cst_54 {dimension_numbers = #tpu.dot_dimension_numbers<[1], [0], [0], [1], [0, 0, 1, 1], [], []>} : vector<128x128xbf16>, vector<128x128xbf16>, vector<128x128xf32> -> vector<128x128xf32>
    %99 = arith.truncf %98 : vector<128x128xf32> to vector<128x128xbf16>
    %c2_55 = arith.constant 2 : index
    %c0_56 = arith.constant 0 : index
    %c0_57 = arith.constant 0 : index
    %100 = vector.load %arg8[%c2_55, %c0_56, %c0_57] : memref<3x1x128xf32, #tpu.memory_space<vmem>>, vector<1x1x128xf32>
    %101 = vector.shape_cast %100 : vector<1x1x128xf32> to vector<1x128xf32>
    %102 = vector.broadcast %101 : vector<1x128xf32> to vector<128x128xf32>
    %103 = arith.mulf %98, %102 : vector<128x128xf32>
    %cst_58 = arith.constant dense<0.000000e+00> : vector<128xf32>
    %104 = vector.multi_reduction <add>, %103, %cst_58 [1] : vector<128x128xf32> to vector<128xf32>
    %105 = vector.shape_cast %104 : vector<128xf32> to vector<128x1xf32>
    %c2_59 = arith.constant 2 : index
    %c0_60 = arith.constant 0 : index
    %c0_61 = arith.constant 0 : index
    %106 = vector.load %arg7[%c2_59, %c0_60, %c0_61] : memref<3x1x128xbf16, #tpu.memory_space<vmem>>, vector<1x1x128xbf16>
    %107 = vector.shape_cast %106 : vector<1x1x128xbf16> to vector<1x128xbf16>
    %cst_62 = arith.constant dense<0.000000e+00> : vector<1x128xf32>
    %108 = tpu.matmul %107, %99, %cst_62 {dimension_numbers = #tpu.dot_dimension_numbers<[1], [1], [0], [0], [0, 0, 1, 0], [], []>} : vector<1x128xbf16>, vector<128x128xbf16>, vector<1x128xf32> -> vector<1x128xf32>
    %109 = vector.broadcast %105 : vector<128x1xf32> to vector<128x128xf32>
    %110 = vector.broadcast %108 : vector<1x128xf32> to vector<128x128xf32>
    %111 = arith.addf %109, %110 : vector<128x128xf32>
    %cst_63 = arith.constant 2.000000e-01 : f32
    %112 = vector.broadcast %cst_63 : f32 to vector<128x128xf32>
    %113 = arith.mulf %112, %111 : vector<128x128xf32>
    %114 = arith.maximumf %111, %113 : vector<128x128xf32>
    %115 = arith.addf %114, %16 : vector<128x128xf32>
    %cst_64 = arith.constant dense<0xFF800000> : vector<128xf32>
    %116 = vector.multi_reduction <maximumf>, %115, %cst_64 [1] : vector<128x128xf32> to vector<128xf32>
    %117 = vector.shape_cast %116 : vector<128xf32> to vector<128x1xf32>
    %118 = vector.broadcast %117 : vector<128x1xf32> to vector<128x128xf32>
    %119 = arith.subf %115, %118 : vector<128x128xf32>
    %120 = math.exp %119 : vector<128x128xf32>
    %cst_65 = arith.constant dense<0.000000e+00> : vector<128xf32>
    %121 = vector.multi_reduction <add>, %120, %cst_65 [1] : vector<128x128xf32> to vector<128xf32>
    %122 = vector.shape_cast %121 : vector<128xf32> to vector<128x1xf32>
    %123 = tpu.reciprocal %122 {approx = true} : vector<128x1xf32> -> vector<128x1xf32>
    %124 = vector.broadcast %123 : vector<128x1xf32> to vector<128x128xf32>
    %125 = arith.mulf %120, %124 : vector<128x128xf32>
    %126 = arith.truncf %125 : vector<128x128xf32> to vector<128x128xbf16>
    %cst_66 = arith.constant dense<0.000000e+00> : vector<128x128xf32>
    %127 = tpu.matmul %126, %99, %cst_66 {dimension_numbers = #tpu.dot_dimension_numbers<[1], [0], [0], [1], [0, 0, 1, 1], [], []>} : vector<128x128xbf16>, vector<128x128xbf16>, vector<128x128xf32> -> vector<128x128xf32>
    %c2_67 = arith.constant 2 : index
    %c0_68 = arith.constant 0 : index
    %c0_69 = arith.constant 0 : index
    %128 = vector.load %arg9[%c2_67, %c0_68, %c0_69] : memref<3x1x128xf32, #tpu.memory_space<vmem>>, vector<1x1x128xf32>
    %129 = vector.shape_cast %128 : vector<1x1x128xf32> to vector<1x128xf32>
    %130 = vector.broadcast %129 : vector<1x128xf32> to vector<128x128xf32>
    %131 = arith.addf %127, %130 : vector<128x128xf32>
    %cst_70 = arith.constant 0.000000e+00 : f32
    %132 = vector.broadcast %cst_70 : f32 to vector<128x128xf32>
    %133 = arith.maximumf %131, %132 : vector<128x128xf32>
    %134 = arith.truncf %133 : vector<128x128xf32> to vector<128x128xbf16>
    %c0_71 = arith.constant 0 : index
    %c0_72 = arith.constant 0 : index
    %c0_73 = arith.constant 0 : index
    %135 = vector.load %arg3[%c0_71, %c0_72, %c0_73] : memref<1x8x128xf32, #tpu.memory_space<vmem>>, vector<1x8x128xf32>
    %136 = vector.shape_cast %135 : vector<1x8x128xf32> to vector<8x128xf32>
    %cst_74 = arith.constant 0.000000e+00 : f32
    %137 = vector.broadcast %cst_74 : f32 to vector<8x128xf32>
    %138 = arith.cmpf ogt, %136, %137 : vector<8x128xf32>
    %cst_75 = arith.constant 0.000000e+00 : f32
    %cst_76 = arith.constant -1.000000e+30 : f32
    %139 = vector.broadcast %cst_75 : f32 to vector<8x128xf32>
    %140 = vector.broadcast %cst_76 : f32 to vector<8x128xf32>
    %141 = arith.select %138, %139, %140 : vector<8x128xi1>, vector<8x128xf32>
    %c0_77 = arith.constant 0 : index
    %c0_78 = arith.constant 0 : index
    %142 = vector.load %arg10[%c0_77, %c0_78] : memref<384x512xbf16, #tpu.memory_space<vmem>>, vector<384x512xbf16>
    %c0_79 = arith.constant 0 : index
    %c0_80 = arith.constant 0 : index
    %143 = vector.load %arg11[%c0_79, %c0_80] : memref<1x512xf32, #tpu.memory_space<vmem>>, vector<1x512xf32>
    %cst_81 = arith.constant 0.000000e+00 : bf16
    %144 = vector.broadcast %cst_81 : bf16 to vector<8x384xbf16>
    %c0_82 = arith.constant 0 : index
    %c0_83 = arith.constant 0 : index
    %145 = vector.load %arg19[%c0_82, %c0_83] : memref<8x384xbf16, #tpu.memory_space<vmem>>, vector<8x384xbf16>
    tpu.vector_store %arg19[%c0_82, %c0_83], %144 {strides = array<i32>} : memref<8x384xbf16, #tpu.memory_space<vmem>>, vector<8x384xbf16>,
    %cst_84 = arith.constant 0.000000e+00 : f32
    %146 = vector.broadcast %cst_84 : f32 to vector<8x128xf32>
    %c0_i32 = arith.constant 0 : i32
    %c0_85 = arith.constant 0 : index
    %c0_86 = arith.constant 0 : index
    %147 = vector.load %arg19[%c0_85, %c0_86] : memref<8x384xbf16, #tpu.memory_space<vmem>>, vector<8x384xbf16>
    %cst_87 = arith.constant dense<0.000000e+00> : vector<8x512xf32>
    %148 = tpu.matmul %147, %142, %cst_87 {dimension_numbers = #tpu.dot_dimension_numbers<[1], [0], [0], [1], [0, 0, 1, 1], [], []>} : vector<8x384xbf16>, vector<384x512xbf16>, vector<8x512xf32> -> vector<8x512xf32>
    %149 = vector.broadcast %143 : vector<1x512xf32> to vector<8x512xf32>
    %150 = arith.addf %148, %149 : vector<8x512xf32>
    %151 = vector.extract_strided_slice %150 {offsets = [0, 0], sizes = [8, 128], strides = [1, 1]} : vector<8x512xf32> to vector<8x128xf32>
    %152 = arith.negf %151 : vector<8x128xf32>
    %153 = math.exp %152 : vector<8x128xf32>
    %cst_88 = arith.constant 1.000000e+00 : f32
    %154 = vector.broadcast %cst_88 : f32 to vector<8x128xf32>
    %155 = arith.addf %154, %153 : vector<8x128xf32>
    %156 = arith.divf %154, %155 : vector<8x128xf32>
    %157 = vector.extract_strided_slice %150 {offsets = [0, 128], sizes = [8, 128], strides = [1, 1]} : vector<8x512xf32> to vector<8x128xf32>
    %158 = arith.negf %157 : vector<8x128xf32>
    %159 = math.exp %158 : vector<8x128xf32>
    %cst_89 = arith.constant 1.000000e+00 : f32
    %160 = vector.broadcast %cst_89 : f32 to vector<8x128xf32>
    %161 = arith.addf %160, %159 : vector<8x128xf32>
    %162 = arith.divf %160, %161 : vector<8x128xf32>
    %163 = vector.extract_strided_slice %150 {offsets = [0, 256], sizes = [8, 128], strides = [1, 1]} : vector<8x512xf32> to vector<8x128xf32>
    %164 = math.tanh %163 : vector<8x128xf32>
    %165 = vector.extract_strided_slice %150 {offsets = [0, 384], sizes = [8, 128], strides = [1, 1]} : vector<8x512xf32> to vector<8x128xf32>
    %166 = arith.negf %165 : vector<8x128xf32>
    %167 = math.exp %166 : vector<8x128xf32>
    %cst_90 = arith.constant 1.000000e+00 : f32
    %168 = vector.broadcast %cst_90 : f32 to vector<8x128xf32>
    %169 = arith.addf %168, %167 : vector<8x128xf32>
    %170 = arith.divf %168, %169 : vector<8x128xf32>
    %171 = arith.mulf %162, %146 : vector<8x128xf32>
    %172 = arith.mulf %156, %164 : vector<8x128xf32>
    %173 = arith.addf %171, %172 : vector<8x128xf32>
    %174 = math.tanh %173 : vector<8x128xf32>
    %175 = arith.mulf %170, %174 : vector<8x128xf32>
    %176 = arith.truncf %175 : vector<8x128xf32> to vector<8x128xbf16>
    %cst_91 = arith.constant dense<0.000000e+00> : vector<8x128xf32>
    %177 = tpu.matmul %176, %134, %cst_91 {dimension_numbers = #tpu.dot_dimension_numbers<[1], [1], [0], [0], [0, 0, 1, 0], [], []>} : vector<8x128xbf16>, vector<128x128xbf16>, vector<8x128xf32> -> vector<8x128xf32>
    %178 = arith.addf %177, %141 : vector<8x128xf32>
    %cst_92 = arith.constant dense<0xFF800000> : vector<8xf32>
    %179 = vector.multi_reduction <maximumf>, %178, %cst_92 [1] : vector<8x128xf32> to vector<8xf32>
    %180 = vector.shape_cast %179 : vector<8xf32> to vector<8x1xf32>
    %181 = vector.broadcast %180 : vector<8x1xf32> to vector<8x128xf32>
    %182 = arith.subf %178, %181 : vector<8x128xf32>
    %183 = math.exp %182 : vector<8x128xf32>
    %184 = arith.mulf %183, %136 : vector<8x128xf32>
    %cst_93 = arith.constant dense<0.000000e+00> : vector<8xf32>
    %185 = vector.multi_reduction <add>, %184, %cst_93 [1] : vector<8x128xf32> to vector<8xf32>
    %186 = vector.shape_cast %185 : vector<8xf32> to vector<8x1xf32>
    %cst_94 = arith.constant 9.99999968E-21 : f32
    %187 = vector.broadcast %cst_94 : f32 to vector<8x1xf32>
    %188 = arith.maximumf %186, %187 : vector<8x1xf32>
    %189 = tpu.reciprocal %188 {approx = true} : vector<8x1xf32> -> vector<8x1xf32>
    %190 = vector.broadcast %189 : vector<8x1xf32> to vector<8x128xf32>
    %191 = arith.mulf %184, %190 : vector<8x128xf32>
    %192 = arith.truncf %191 : vector<8x128xf32> to vector<8x128xbf16>
    %cst_95 = arith.constant dense<0.000000e+00> : vector<8x128xf32>
    %193 = tpu.matmul %192, %134, %cst_95 {dimension_numbers = #tpu.dot_dimension_numbers<[1], [0], [0], [1], [0, 0, 1, 1], [], []>} : vector<8x128xbf16>, vector<128x128xbf16>, vector<8x128xf32> -> vector<8x128xf32>
    %c0_96 = arith.constant 0 : index
    %c0_97 = arith.constant 0 : index
    %194 = vector.load %arg19[%c0_96, %c0_97] : memref<8x384xbf16, #tpu.memory_space<vmem>>, vector<8x128xbf16>
    tpu.vector_store %arg19[%c0_96, %c0_97], %176 {strides = array<i32>} : memref<8x384xbf16, #tpu.memory_space<vmem>>, vector<8x128xbf16>,
    %195 = arith.truncf %193 : vector<8x128xf32> to vector<8x128xbf16>
    %c0_98 = arith.constant 0 : index
    %c128 = arith.constant 128 : index
    %196 = vector.load %arg19[%c0_98, %c128] : memref<8x384xbf16, #tpu.memory_space<vmem>>, vector<8x128xbf16>
    tpu.vector_store %arg19[%c0_98, %c128], %195 {strides = array<i32>} : memref<8x384xbf16, #tpu.memory_space<vmem>>, vector<8x128xbf16>,
    %c0_99 = arith.constant 0 : index
    %c256 = arith.constant 256 : index
    %197 = vector.load %arg19[%c0_99, %c256] : memref<8x384xbf16, #tpu.memory_space<vmem>>, vector<8x128xbf16>
    tpu.vector_store %arg19[%c0_99, %c256], %176 {strides = array<i32>} : memref<8x384xbf16, #tpu.memory_space<vmem>>, vector<8x128xbf16>,
    %c1_i32 = arith.constant 1 : i32
    %c0_100 = arith.constant 0 : index
    %c0_101 = arith.constant 0 : index
    %198 = vector.load %arg19[%c0_100, %c0_101] : memref<8x384xbf16, #tpu.memory_space<vmem>>, vector<8x384xbf16>
    %cst_102 = arith.constant dense<0.000000e+00> : vector<8x512xf32>
    %199 = tpu.matmul %198, %142, %cst_102 {dimension_numbers = #tpu.dot_dimension_numbers<[1], [0], [0], [1], [0, 0, 1, 1], [], []>} : vector<8x384xbf16>, vector<384x512xbf16>, vector<8x512xf32> -> vector<8x512xf32>
    %200 = vector.broadcast %143 : vector<1x512xf32> to vector<8x512xf32>
    %201 = arith.addf %199, %200 : vector<8x512xf32>
    %202 = vector.extract_strided_slice %201 {offsets = [0, 0], sizes = [8, 128], strides = [1, 1]} : vector<8x512xf32> to vector<8x128xf32>
    %203 = arith.negf %202 : vector<8x128xf32>
    %204 = math.exp %203 : vector<8x128xf32>
    %cst_103 = arith.constant 1.000000e+00 : f32
    %205 = vector.broadcast %cst_103 : f32 to vector<8x128xf32>
    %206 = arith.addf %205, %204 : vector<8x128xf32>
    %207 = arith.divf %205, %206 : vector<8x128xf32>
    %208 = vector.extract_strided_slice %201 {offsets = [0, 128], sizes = [8, 128], strides = [1, 1]} : vector<8x512xf32> to vector<8x128xf32>
    %209 = arith.negf %208 : vector<8x128xf32>
    %210 = math.exp %209 : vector<8x128xf32>
    %cst_104 = arith.constant 1.000000e+00 : f32
    %211 = vector.broadcast %cst_104 : f32 to vector<8x128xf32>
    %212 = arith.addf %211, %210 : vector<8x128xf32>
    %213 = arith.divf %211, %212 : vector<8x128xf32>
    %214 = vector.extract_strided_slice %201 {offsets = [0, 256], sizes = [8, 128], strides = [1, 1]} : vector<8x512xf32> to vector<8x128xf32>
    %215 = math.tanh %214 : vector<8x128xf32>
    %216 = vector.extract_strided_slice %201 {offsets = [0, 384], sizes = [8, 128], strides = [1, 1]} : vector<8x512xf32> to vector<8x128xf32>
    %217 = arith.negf %216 : vector<8x128xf32>
    %218 = math.exp %217 : vector<8x128xf32>
    %cst_105 = arith.constant 1.000000e+00 : f32
    %219 = vector.broadcast %cst_105 : f32 to vector<8x128xf32>
    %220 = arith.addf %219, %218 : vector<8x128xf32>
    %221 = arith.divf %219, %220 : vector<8x128xf32>
    %222 = arith.mulf %213, %173 : vector<8x128xf32>
    %223 = arith.mulf %207, %215 : vector<8x128xf32>
    %224 = arith.addf %222, %223 : vector<8x128xf32>
    %225 = math.tanh %224 : vector<8x128xf32>
    %226 = arith.mulf %221, %225 : vector<8x128xf32>
    %227 = arith.truncf %226 : vector<8x128xf32> to vector<8x128xbf16>
    %cst_106 = arith.constant dense<0.000000e+00> : vector<8x128xf32>
    %228 = tpu.matmul %227, %134, %cst_106 {dimension_numbers = #tpu.dot_dimension_numbers<[1], [1], [0], [0], [0, 0, 1, 0], [], []>} : vector<8x128xbf16>, vector<128x128xbf16>, vector<8x128xf32> -> vector<8x128xf32>
    %229 = arith.addf %228, %141 : vector<8x128xf32>
    %cst_107 = arith.constant dense<0xFF800000> : vector<8xf32>
    %230 = vector.multi_reduction <maximumf>, %229, %cst_107 [1] : vector<8x128xf32> to vector<8xf32>
    %231 = vector.shape_cast %230 : vector<8xf32> to vector<8x1xf32>
    %232 = vector.broadcast %231 : vector<8x1xf32> to vector<8x128xf32>
    %233 = arith.subf %229, %232 : vector<8x128xf32>
    %234 = math.exp %233 : vector<8x128xf32>
    %235 = arith.mulf %234, %136 : vector<8x128xf32>
    %cst_108 = arith.constant dense<0.000000e+00> : vector<8xf32>
    %236 = vector.multi_reduction <add>, %235, %cst_108 [1] : vector<8x128xf32> to vector<8xf32>
    %237 = vector.shape_cast %236 : vector<8xf32> to vector<8x1xf32>
    %cst_109 = arith.constant 9.99999968E-21 : f32
    %238 = vector.broadcast %cst_109 : f32 to vector<8x1xf32>
    %239 = arith.maximumf %237, %238 : vector<8x1xf32>
    %240 = tpu.reciprocal %239 {approx = true} : vector<8x1xf32> -> vector<8x1xf32>
    %241 = vector.broadcast %240 : vector<8x1xf32> to vector<8x128xf32>
    %242 = arith.mulf %235, %241 : vector<8x128xf32>
    %243 = arith.truncf %242 : vector<8x128xf32> to vector<8x128xbf16>
    %cst_110 = arith.constant dense<0.000000e+00> : vector<8x128xf32>
    %244 = tpu.matmul %243, %134, %cst_110 {dimension_numbers = #tpu.dot_dimension_numbers<[1], [0], [0], [1], [0, 0, 1, 1], [], []>} : vector<8x128xbf16>, vector<128x128xbf16>, vector<8x128xf32> -> vector<8x128xf32>
    %c0_111 = arith.constant 0 : index
    %c0_112 = arith.constant 0 : index
    %245 = vector.load %arg19[%c0_111, %c0_112] : memref<8x384xbf16, #tpu.memory_space<vmem>>, vector<8x128xbf16>
    tpu.vector_store %arg19[%c0_111, %c0_112], %227 {strides = array<i32>} : memref<8x384xbf16, #tpu.memory_space<vmem>>, vector<8x128xbf16>,
    %246 = arith.truncf %244 : vector<8x128xf32> to vector<8x128xbf16>
    %c0_113 = arith.constant 0 : index
    %c128_114 = arith.constant 128 : index
    %247 = vector.load %arg19[%c0_113, %c128_114] : memref<8x384xbf16, #tpu.memory_space<vmem>>, vector<8x128xbf16>
    tpu.vector_store %arg19[%c0_113, %c128_114], %246 {strides = array<i32>} : memref<8x384xbf16, #tpu.memory_space<vmem>>, vector<8x128xbf16>,
    %c0_115 = arith.constant 0 : index
    %c256_116 = arith.constant 256 : index
    %248 = vector.load %arg19[%c0_115, %c256_116] : memref<8x384xbf16, #tpu.memory_space<vmem>>, vector<8x128xbf16>
    tpu.vector_store %arg19[%c0_115, %c256_116], %227 {strides = array<i32>} : memref<8x384xbf16, #tpu.memory_space<vmem>>, vector<8x128xbf16>,
    %c2_i32 = arith.constant 2 : i32
    %c0_117 = arith.constant 0 : index
    %c0_118 = arith.constant 0 : index
    %249 = vector.load %arg19[%c0_117, %c0_118] : memref<8x384xbf16, #tpu.memory_space<vmem>>, vector<8x384xbf16>
    %cst_119 = arith.constant dense<0.000000e+00> : vector<8x512xf32>
    %250 = tpu.matmul %249, %142, %cst_119 {dimension_numbers = #tpu.dot_dimension_numbers<[1], [0], [0], [1], [0, 0, 1, 1], [], []>} : vector<8x384xbf16>, vector<384x512xbf16>, vector<8x512xf32> -> vector<8x512xf32>
    %251 = vector.broadcast %143 : vector<1x512xf32> to vector<8x512xf32>
    %252 = arith.addf %250, %251 : vector<8x512xf32>
    %253 = vector.extract_strided_slice %252 {offsets = [0, 0], sizes = [8, 128], strides = [1, 1]} : vector<8x512xf32> to vector<8x128xf32>
    %254 = arith.negf %253 : vector<8x128xf32>
    %255 = math.exp %254 : vector<8x128xf32>
    %cst_120 = arith.constant 1.000000e+00 : f32
    %256 = vector.broadcast %cst_120 : f32 to vector<8x128xf32>
    %257 = arith.addf %256, %255 : vector<8x128xf32>
    %258 = arith.divf %256, %257 : vector<8x128xf32>
    %259 = vector.extract_strided_slice %252 {offsets = [0, 128], sizes = [8, 128], strides = [1, 1]} : vector<8x512xf32> to vector<8x128xf32>
    %260 = arith.negf %259 : vector<8x128xf32>
    %261 = math.exp %260 : vector<8x128xf32>
    %cst_121 = arith.constant 1.000000e+00 : f32
    %262 = vector.broadcast %cst_121 : f32 to vector<8x128xf32>
    %263 = arith.addf %262, %261 : vector<8x128xf32>
    %264 = arith.divf %262, %263 : vector<8x128xf32>
    %265 = vector.extract_strided_slice %252 {offsets = [0, 256], sizes = [8, 128], strides = [1, 1]} : vector<8x512xf32> to vector<8x128xf32>
    %266 = math.tanh %265 : vector<8x128xf32>
    %267 = vector.extract_strided_slice %252 {offsets = [0, 384], sizes = [8, 128], strides = [1, 1]} : vector<8x512xf32> to vector<8x128xf32>
    %268 = arith.negf %267 : vector<8x128xf32>
    %269 = math.exp %268 : vector<8x128xf32>
    %cst_122 = arith.constant 1.000000e+00 : f32
    %270 = vector.broadcast %cst_122 : f32 to vector<8x128xf32>
    %271 = arith.addf %270, %269 : vector<8x128xf32>
    %272 = arith.divf %270, %271 : vector<8x128xf32>
    %273 = arith.mulf %264, %224 : vector<8x128xf32>
    %274 = arith.mulf %258, %266 : vector<8x128xf32>
    %275 = arith.addf %273, %274 : vector<8x128xf32>
    %276 = math.tanh %275 : vector<8x128xf32>
    %277 = arith.mulf %272, %276 : vector<8x128xf32>
    %278 = arith.truncf %277 : vector<8x128xf32> to vector<8x128xbf16>
    %cst_123 = arith.constant dense<0.000000e+00> : vector<8x128xf32>
    %279 = tpu.matmul %278, %134, %cst_123 {dimension_numbers = #tpu.dot_dimension_numbers<[1], [1], [0], [0], [0, 0, 1, 0], [], []>} : vector<8x128xbf16>, vector<128x128xbf16>, vector<8x128xf32> -> vector<8x128xf32>
    %280 = arith.addf %279, %141 : vector<8x128xf32>
    %cst_124 = arith.constant dense<0xFF800000> : vector<8xf32>
    %281 = vector.multi_reduction <maximumf>, %280, %cst_124 [1] : vector<8x128xf32> to vector<8xf32>
    %282 = vector.shape_cast %281 : vector<8xf32> to vector<8x1xf32>
    %283 = vector.broadcast %282 : vector<8x1xf32> to vector<8x128xf32>
    %284 = arith.subf %280, %283 : vector<8x128xf32>
    %285 = math.exp %284 : vector<8x128xf32>
    %286 = arith.mulf %285, %136 : vector<8x128xf32>
    %cst_125 = arith.constant dense<0.000000e+00> : vector<8xf32>
    %287 = vector.multi_reduction <add>, %286, %cst_125 [1] : vector<8x128xf32> to vector<8xf32>
    %288 = vector.shape_cast %287 : vector<8xf32> to vector<8x1xf32>
    %cst_126 = arith.constant 9.99999968E-21 : f32
    %289 = vector.broadcast %cst_126 : f32 to vector<8x1xf32>
    %290 = arith.maximumf %288, %289 : vector<8x1xf32>
    %291 = tpu.reciprocal %290 {approx = true} : vector<8x1xf32> -> vector<8x1xf32>
    %292 = vector.broadcast %291 : vector<8x1xf32> to vector<8x128xf32>
    %293 = arith.mulf %286, %292 : vector<8x128xf32>
    %294 = arith.truncf %293 : vector<8x128xf32> to vector<8x128xbf16>
    %cst_127 = arith.constant dense<0.000000e+00> : vector<8x128xf32>
    %295 = tpu.matmul %294, %134, %cst_127 {dimension_numbers = #tpu.dot_dimension_numbers<[1], [0], [0], [1], [0, 0, 1, 1], [], []>} : vector<8x128xbf16>, vector<128x128xbf16>, vector<8x128xf32> -> vector<8x128xf32>
    %c0_128 = arith.constant 0 : index
    %c0_129 = arith.constant 0 : index
    %296 = vector.load %arg19[%c0_128, %c0_129] : memref<8x384xbf16, #tpu.memory_space<vmem>>, vector<8x128xbf16>
    tpu.vector_store %arg19[%c0_128, %c0_129], %278 {strides = array<i32>} : memref<8x384xbf16, #tpu.memory_space<vmem>>, vector<8x128xbf16>,
    %297 = arith.truncf %295 : vector<8x128xf32> to vector<8x128xbf16>
    %c0_130 = arith.constant 0 : index
    %c128_131 = arith.constant 128 : index
    %298 = vector.load %arg19[%c0_130, %c128_131] : memref<8x384xbf16, #tpu.memory_space<vmem>>, vector<8x128xbf16>
    tpu.vector_store %arg19[%c0_130, %c128_131], %297 {strides = array<i32>} : memref<8x384xbf16, #tpu.memory_space<vmem>>, vector<8x128xbf16>,
    %c0_132 = arith.constant 0 : index
    %c256_133 = arith.constant 256 : index
    %299 = vector.load %arg19[%c0_132, %c256_133] : memref<8x384xbf16, #tpu.memory_space<vmem>>, vector<8x128xbf16>
    tpu.vector_store %arg19[%c0_132, %c256_133], %278 {strides = array<i32>} : memref<8x384xbf16, #tpu.memory_space<vmem>>, vector<8x128xbf16>,
    %c3_i32 = arith.constant 3 : i32
    %c0_134 = arith.constant 0 : index
    %c0_135 = arith.constant 0 : index
    %300 = vector.load %arg19[%c0_134, %c0_135] : memref<8x384xbf16, #tpu.memory_space<vmem>>, vector<8x384xbf16>
    %cst_136 = arith.constant dense<0.000000e+00> : vector<8x512xf32>
    %301 = tpu.matmul %300, %142, %cst_136 {dimension_numbers = #tpu.dot_dimension_numbers<[1], [0], [0], [1], [0, 0, 1, 1], [], []>} : vector<8x384xbf16>, vector<384x512xbf16>, vector<8x512xf32> -> vector<8x512xf32>
    %302 = vector.broadcast %143 : vector<1x512xf32> to vector<8x512xf32>
    %303 = arith.addf %301, %302 : vector<8x512xf32>
    %304 = vector.extract_strided_slice %303 {offsets = [0, 0], sizes = [8, 128], strides = [1, 1]} : vector<8x512xf32> to vector<8x128xf32>
    %305 = arith.negf %304 : vector<8x128xf32>
    %306 = math.exp %305 : vector<8x128xf32>
    %cst_137 = arith.constant 1.000000e+00 : f32
    %307 = vector.broadcast %cst_137 : f32 to vector<8x128xf32>
    %308 = arith.addf %307, %306 : vector<8x128xf32>
    %309 = arith.divf %307, %308 : vector<8x128xf32>
    %310 = vector.extract_strided_slice %303 {offsets = [0, 128], sizes = [8, 128], strides = [1, 1]} : vector<8x512xf32> to vector<8x128xf32>
    %311 = arith.negf %310 : vector<8x128xf32>
    %312 = math.exp %311 : vector<8x128xf32>
    %cst_138 = arith.constant 1.000000e+00 : f32
    %313 = vector.broadcast %cst_138 : f32 to vector<8x128xf32>
    %314 = arith.addf %313, %312 : vector<8x128xf32>
    %315 = arith.divf %313, %314 : vector<8x128xf32>
    %316 = vector.extract_strided_slice %303 {offsets = [0, 256], sizes = [8, 128], strides = [1, 1]} : vector<8x512xf32> to vector<8x128xf32>
    %317 = math.tanh %316 : vector<8x128xf32>
    %318 = vector.extract_strided_slice %303 {offsets = [0, 384], sizes = [8, 128], strides = [1, 1]} : vector<8x512xf32> to vector<8x128xf32>
    %319 = arith.negf %318 : vector<8x128xf32>
    %320 = math.exp %319 : vector<8x128xf32>
    %cst_139 = arith.constant 1.000000e+00 : f32
    %321 = vector.broadcast %cst_139 : f32 to vector<8x128xf32>
    %322 = arith.addf %321, %320 : vector<8x128xf32>
    %323 = arith.divf %321, %322 : vector<8x128xf32>
    %324 = arith.mulf %315, %275 : vector<8x128xf32>
    %325 = arith.mulf %309, %317 : vector<8x128xf32>
    %326 = arith.addf %324, %325 : vector<8x128xf32>
    %327 = math.tanh %326 : vector<8x128xf32>
    %328 = arith.mulf %323, %327 : vector<8x128xf32>
    %329 = arith.truncf %328 : vector<8x128xf32> to vector<8x128xbf16>
    %cst_140 = arith.constant dense<0.000000e+00> : vector<8x128xf32>
    %330 = tpu.matmul %329, %134, %cst_140 {dimension_numbers = #tpu.dot_dimension_numbers<[1], [1], [0], [0], [0, 0, 1, 0], [], []>} : vector<8x128xbf16>, vector<128x128xbf16>, vector<8x128xf32> -> vector<8x128xf32>
    %331 = arith.addf %330, %141 : vector<8x128xf32>
    %cst_141 = arith.constant dense<0xFF800000> : vector<8xf32>
    %332 = vector.multi_reduction <maximumf>, %331, %cst_141 [1] : vector<8x128xf32> to vector<8xf32>
    %333 = vector.shape_cast %332 : vector<8xf32> to vector<8x1xf32>
    %334 = vector.broadcast %333 : vector<8x1xf32> to vector<8x128xf32>
    %335 = arith.subf %331, %334 : vector<8x128xf32>
    %336 = math.exp %335 : vector<8x128xf32>
    %337 = arith.mulf %336, %136 : vector<8x128xf32>
    %cst_142 = arith.constant dense<0.000000e+00> : vector<8xf32>
    %338 = vector.multi_reduction <add>, %337, %cst_142 [1] : vector<8x128xf32> to vector<8xf32>
    %339 = vector.shape_cast %338 : vector<8xf32> to vector<8x1xf32>
    %cst_143 = arith.constant 9.99999968E-21 : f32
    %340 = vector.broadcast %cst_143 : f32 to vector<8x1xf32>
    %341 = arith.maximumf %339, %340 : vector<8x1xf32>
    %342 = tpu.reciprocal %341 {approx = true} : vector<8x1xf32> -> vector<8x1xf32>
    %343 = vector.broadcast %342 : vector<8x1xf32> to vector<8x128xf32>
    %344 = arith.mulf %337, %343 : vector<8x128xf32>
    %345 = arith.truncf %344 : vector<8x128xf32> to vector<8x128xbf16>
    %cst_144 = arith.constant dense<0.000000e+00> : vector<8x128xf32>
    %346 = tpu.matmul %345, %134, %cst_144 {dimension_numbers = #tpu.dot_dimension_numbers<[1], [0], [0], [1], [0, 0, 1, 1], [], []>} : vector<8x128xbf16>, vector<128x128xbf16>, vector<8x128xf32> -> vector<8x128xf32>
    %c0_145 = arith.constant 0 : index
    %c0_146 = arith.constant 0 : index
    %347 = vector.load %arg19[%c0_145, %c0_146] : memref<8x384xbf16, #tpu.memory_space<vmem>>, vector<8x128xbf16>
    tpu.vector_store %arg19[%c0_145, %c0_146], %329 {strides = array<i32>} : memref<8x384xbf16, #tpu.memory_space<vmem>>, vector<8x128xbf16>,
    %348 = arith.truncf %346 : vector<8x128xf32> to vector<8x128xbf16>
    %c0_147 = arith.constant 0 : index
    %c128_148 = arith.constant 128 : index
    %349 = vector.load %arg19[%c0_147, %c128_148] : memref<8x384xbf16, #tpu.memory_space<vmem>>, vector<8x128xbf16>
    tpu.vector_store %arg19[%c0_147, %c128_148], %348 {strides = array<i32>} : memref<8x384xbf16, #tpu.memory_space<vmem>>, vector<8x128xbf16>,
    %c0_149 = arith.constant 0 : index
    %c256_150 = arith.constant 256 : index
    %350 = vector.load %arg19[%c0_149, %c256_150] : memref<8x384xbf16, #tpu.memory_space<vmem>>, vector<8x128xbf16>
    tpu.vector_store %arg19[%c0_149, %c256_150], %329 {strides = array<i32>} : memref<8x384xbf16, #tpu.memory_space<vmem>>, vector<8x128xbf16>,
    %c4_i32 = arith.constant 4 : i32
    %c0_151 = arith.constant 0 : index
    %c0_152 = arith.constant 0 : index
    %351 = vector.load %arg19[%c0_151, %c0_152] : memref<8x384xbf16, #tpu.memory_space<vmem>>, vector<8x384xbf16>
    %cst_153 = arith.constant dense<0.000000e+00> : vector<8x512xf32>
    %352 = tpu.matmul %351, %142, %cst_153 {dimension_numbers = #tpu.dot_dimension_numbers<[1], [0], [0], [1], [0, 0, 1, 1], [], []>} : vector<8x384xbf16>, vector<384x512xbf16>, vector<8x512xf32> -> vector<8x512xf32>
    %353 = vector.broadcast %143 : vector<1x512xf32> to vector<8x512xf32>
    %354 = arith.addf %352, %353 : vector<8x512xf32>
    %355 = vector.extract_strided_slice %354 {offsets = [0, 0], sizes = [8, 128], strides = [1, 1]} : vector<8x512xf32> to vector<8x128xf32>
    %356 = arith.negf %355 : vector<8x128xf32>
    %357 = math.exp %356 : vector<8x128xf32>
    %cst_154 = arith.constant 1.000000e+00 : f32
    %358 = vector.broadcast %cst_154 : f32 to vector<8x128xf32>
    %359 = arith.addf %358, %357 : vector<8x128xf32>
    %360 = arith.divf %358, %359 : vector<8x128xf32>
    %361 = vector.extract_strided_slice %354 {offsets = [0, 128], sizes = [8, 128], strides = [1, 1]} : vector<8x512xf32> to vector<8x128xf32>
    %362 = arith.negf %361 : vector<8x128xf32>
    %363 = math.exp %362 : vector<8x128xf32>
    %cst_155 = arith.constant 1.000000e+00 : f32
    %364 = vector.broadcast %cst_155 : f32 to vector<8x128xf32>
    %365 = arith.addf %364, %363 : vector<8x128xf32>
    %366 = arith.divf %364, %365 : vector<8x128xf32>
    %367 = vector.extract_strided_slice %354 {offsets = [0, 256], sizes = [8, 128], strides = [1, 1]} : vector<8x512xf32> to vector<8x128xf32>
    %368 = math.tanh %367 : vector<8x128xf32>
    %369 = vector.extract_strided_slice %354 {offsets = [0, 384], sizes = [8, 128], strides = [1, 1]} : vector<8x512xf32> to vector<8x128xf32>
    %370 = arith.negf %369 : vector<8x128xf32>
    %371 = math.exp %370 : vector<8x128xf32>
    %cst_156 = arith.constant 1.000000e+00 : f32
    %372 = vector.broadcast %cst_156 : f32 to vector<8x128xf32>
    %373 = arith.addf %372, %371 : vector<8x128xf32>
    %374 = arith.divf %372, %373 : vector<8x128xf32>
    %375 = arith.mulf %366, %326 : vector<8x128xf32>
    %376 = arith.mulf %360, %368 : vector<8x128xf32>
    %377 = arith.addf %375, %376 : vector<8x128xf32>
    %378 = math.tanh %377 : vector<8x128xf32>
    %379 = arith.mulf %374, %378 : vector<8x128xf32>
    %380 = arith.truncf %379 : vector<8x128xf32> to vector<8x128xbf16>
    %cst_157 = arith.constant dense<0.000000e+00> : vector<8x128xf32>
    %381 = tpu.matmul %380, %134, %cst_157 {dimension_numbers = #tpu.dot_dimension_numbers<[1], [1], [0], [0], [0, 0, 1, 0], [], []>} : vector<8x128xbf16>, vector<128x128xbf16>, vector<8x128xf32> -> vector<8x128xf32>
    %382 = arith.addf %381, %141 : vector<8x128xf32>
    %cst_158 = arith.constant dense<0xFF800000> : vector<8xf32>
    %383 = vector.multi_reduction <maximumf>, %382, %cst_158 [1] : vector<8x128xf32> to vector<8xf32>
    %384 = vector.shape_cast %383 : vector<8xf32> to vector<8x1xf32>
    %385 = vector.broadcast %384 : vector<8x1xf32> to vector<8x128xf32>
    %386 = arith.subf %382, %385 : vector<8x128xf32>
    %387 = math.exp %386 : vector<8x128xf32>
    %388 = arith.mulf %387, %136 : vector<8x128xf32>
    %cst_159 = arith.constant dense<0.000000e+00> : vector<8xf32>
    %389 = vector.multi_reduction <add>, %388, %cst_159 [1] : vector<8x128xf32> to vector<8xf32>
    %390 = vector.shape_cast %389 : vector<8xf32> to vector<8x1xf32>
    %cst_160 = arith.constant 9.99999968E-21 : f32
    %391 = vector.broadcast %cst_160 : f32 to vector<8x1xf32>
    %392 = arith.maximumf %390, %391 : vector<8x1xf32>
    %393 = tpu.reciprocal %392 {approx = true} : vector<8x1xf32> -> vector<8x1xf32>
    %394 = vector.broadcast %393 : vector<8x1xf32> to vector<8x128xf32>
    %395 = arith.mulf %388, %394 : vector<8x128xf32>
    %396 = arith.truncf %395 : vector<8x128xf32> to vector<8x128xbf16>
    %cst_161 = arith.constant dense<0.000000e+00> : vector<8x128xf32>
    %397 = tpu.matmul %396, %134, %cst_161 {dimension_numbers = #tpu.dot_dimension_numbers<[1], [0], [0], [1], [0, 0, 1, 1], [], []>} : vector<8x128xbf16>, vector<128x128xbf16>, vector<8x128xf32> -> vector<8x128xf32>
    %c0_162 = arith.constant 0 : index
    %c0_163 = arith.constant 0 : index
    %398 = vector.load %arg19[%c0_162, %c0_163] : memref<8x384xbf16, #tpu.memory_space<vmem>>, vector<8x128xbf16>
    tpu.vector_store %arg19[%c0_162, %c0_163], %380 {strides = array<i32>} : memref<8x384xbf16, #tpu.memory_space<vmem>>, vector<8x128xbf16>,
    %399 = arith.truncf %397 : vector<8x128xf32> to vector<8x128xbf16>
    %c0_164 = arith.constant 0 : index
    %c128_165 = arith.constant 128 : index
    %400 = vector.load %arg19[%c0_164, %c128_165] : memref<8x384xbf16, #tpu.memory_space<vmem>>, vector<8x128xbf16>
    tpu.vector_store %arg19[%c0_164, %c128_165], %399 {strides = array<i32>} : memref<8x384xbf16, #tpu.memory_space<vmem>>, vector<8x128xbf16>,
    %c0_166 = arith.constant 0 : index
    %c256_167 = arith.constant 256 : index
    %401 = vector.load %arg19[%c0_166, %c256_167] : memref<8x384xbf16, #tpu.memory_space<vmem>>, vector<8x128xbf16>
    tpu.vector_store %arg19[%c0_166, %c256_167], %380 {strides = array<i32>} : memref<8x384xbf16, #tpu.memory_space<vmem>>, vector<8x128xbf16>,
    %c5_i32 = arith.constant 5 : i32
    %c0_168 = arith.constant 0 : index
    %c0_169 = arith.constant 0 : index
    %402 = vector.load %arg19[%c0_168, %c0_169] : memref<8x384xbf16, #tpu.memory_space<vmem>>, vector<8x384xbf16>
    %cst_170 = arith.constant dense<0.000000e+00> : vector<8x512xf32>
    %403 = tpu.matmul %402, %142, %cst_170 {dimension_numbers = #tpu.dot_dimension_numbers<[1], [0], [0], [1], [0, 0, 1, 1], [], []>} : vector<8x384xbf16>, vector<384x512xbf16>, vector<8x512xf32> -> vector<8x512xf32>
    %404 = vector.broadcast %143 : vector<1x512xf32> to vector<8x512xf32>
    %405 = arith.addf %403, %404 : vector<8x512xf32>
    %406 = vector.extract_strided_slice %405 {offsets = [0, 0], sizes = [8, 128], strides = [1, 1]} : vector<8x512xf32> to vector<8x128xf32>
    %407 = arith.negf %406 : vector<8x128xf32>
    %408 = math.exp %407 : vector<8x128xf32>
    %cst_171 = arith.constant 1.000000e+00 : f32
    %409 = vector.broadcast %cst_171 : f32 to vector<8x128xf32>
    %410 = arith.addf %409, %408 : vector<8x128xf32>
    %411 = arith.divf %409, %410 : vector<8x128xf32>
    %412 = vector.extract_strided_slice %405 {offsets = [0, 128], sizes = [8, 128], strides = [1, 1]} : vector<8x512xf32> to vector<8x128xf32>
    %413 = arith.negf %412 : vector<8x128xf32>
    %414 = math.exp %413 : vector<8x128xf32>
    %cst_172 = arith.constant 1.000000e+00 : f32
    %415 = vector.broadcast %cst_172 : f32 to vector<8x128xf32>
    %416 = arith.addf %415, %414 : vector<8x128xf32>
    %417 = arith.divf %415, %416 : vector<8x128xf32>
    %418 = vector.extract_strided_slice %405 {offsets = [0, 256], sizes = [8, 128], strides = [1, 1]} : vector<8x512xf32> to vector<8x128xf32>
    %419 = math.tanh %418 : vector<8x128xf32>
    %420 = vector.extract_strided_slice %405 {offsets = [0, 384], sizes = [8, 128], strides = [1, 1]} : vector<8x512xf32> to vector<8x128xf32>
    %421 = arith.negf %420 : vector<8x128xf32>
    %422 = math.exp %421 : vector<8x128xf32>
    %cst_173 = arith.constant 1.000000e+00 : f32
    %423 = vector.broadcast %cst_173 : f32 to vector<8x128xf32>
    %424 = arith.addf %423, %422 : vector<8x128xf32>
    %425 = arith.divf %423, %424 : vector<8x128xf32>
    %426 = arith.mulf %417, %377 : vector<8x128xf32>
    %427 = arith.mulf %411, %419 : vector<8x128xf32>
    %428 = arith.addf %426, %427 : vector<8x128xf32>
    %429 = math.tanh %428 : vector<8x128xf32>
    %430 = arith.mulf %425, %429 : vector<8x128xf32>
    %431 = arith.truncf %430 : vector<8x128xf32> to vector<8x128xbf16>
    %cst_174 = arith.constant dense<0.000000e+00> : vector<8x128xf32>
    %432 = tpu.matmul %431, %134, %cst_174 {dimension_numbers = #tpu.dot_dimension_numbers<[1], [1], [0], [0], [0, 0, 1, 0], [], []>} : vector<8x128xbf16>, vector<128x128xbf16>, vector<8x128xf32> -> vector<8x128xf32>
    %433 = arith.addf %432, %141 : vector<8x128xf32>
    %cst_175 = arith.constant dense<0xFF800000> : vector<8xf32>
    %434 = vector.multi_reduction <maximumf>, %433, %cst_175 [1] : vector<8x128xf32> to vector<8xf32>
    %435 = vector.shape_cast %434 : vector<8xf32> to vector<8x1xf32>
    %436 = vector.broadcast %435 : vector<8x1xf32> to vector<8x128xf32>
    %437 = arith.subf %433, %436 : vector<8x128xf32>
    %438 = math.exp %437 : vector<8x128xf32>
    %439 = arith.mulf %438, %136 : vector<8x128xf32>
    %cst_176 = arith.constant dense<0.000000e+00> : vector<8xf32>
    %440 = vector.multi_reduction <add>, %439, %cst_176 [1] : vector<8x128xf32> to vector<8xf32>
    %441 = vector.shape_cast %440 : vector<8xf32> to vector<8x1xf32>
    %cst_177 = arith.constant 9.99999968E-21 : f32
    %442 = vector.broadcast %cst_177 : f32 to vector<8x1xf32>
    %443 = arith.maximumf %441, %442 : vector<8x1xf32>
    %444 = tpu.reciprocal %443 {approx = true} : vector<8x1xf32> -> vector<8x1xf32>
    %445 = vector.broadcast %444 : vector<8x1xf32> to vector<8x128xf32>
    %446 = arith.mulf %439, %445 : vector<8x128xf32>
    %447 = arith.truncf %446 : vector<8x128xf32> to vector<8x128xbf16>
    %cst_178 = arith.constant dense<0.000000e+00> : vector<8x128xf32>
    %448 = tpu.matmul %447, %134, %cst_178 {dimension_numbers = #tpu.dot_dimension_numbers<[1], [0], [0], [1], [0, 0, 1, 1], [], []>} : vector<8x128xbf16>, vector<128x128xbf16>, vector<8x128xf32> -> vector<8x128xf32>
    %c0_179 = arith.constant 0 : index
    %c0_180 = arith.constant 0 : index
    %449 = vector.load %arg19[%c0_179, %c0_180] : memref<8x384xbf16, #tpu.memory_space<vmem>>, vector<8x128xbf16>
    tpu.vector_store %arg19[%c0_179, %c0_180], %431 {strides = array<i32>} : memref<8x384xbf16, #tpu.memory_space<vmem>>, vector<8x128xbf16>,
    %450 = arith.truncf %448 : vector<8x128xf32> to vector<8x128xbf16>
    %c0_181 = arith.constant 0 : index
    %c128_182 = arith.constant 128 : index
    %451 = vector.load %arg19[%c0_181, %c128_182] : memref<8x384xbf16, #tpu.memory_space<vmem>>, vector<8x128xbf16>
    tpu.vector_store %arg19[%c0_181, %c128_182], %450 {strides = array<i32>} : memref<8x384xbf16, #tpu.memory_space<vmem>>, vector<8x128xbf16>,
    %c0_183 = arith.constant 0 : index
    %c256_184 = arith.constant 256 : index
    %452 = vector.load %arg19[%c0_183, %c256_184] : memref<8x384xbf16, #tpu.memory_space<vmem>>, vector<8x128xbf16>
    tpu.vector_store %arg19[%c0_183, %c256_184], %431 {strides = array<i32>} : memref<8x384xbf16, #tpu.memory_space<vmem>>, vector<8x128xbf16>,
    %c0_185 = arith.constant 0 : index
    %c0_186 = arith.constant 0 : index
    %453 = vector.load %arg19[%c0_185, %c0_186] : memref<8x384xbf16, #tpu.memory_space<vmem>>, vector<8x256xbf16>
    %c0_187 = arith.constant 0 : index
    %c0_188 = arith.constant 0 : index
    %454 = vector.load %arg12[%c0_187, %c0_188] : memref<256x128xbf16, #tpu.memory_space<vmem>>, vector<256x128xbf16>
    %cst_189 = arith.constant dense<0.000000e+00> : vector<8x128xf32>
    %455 = tpu.matmul %453, %454, %cst_189 {dimension_numbers = #tpu.dot_dimension_numbers<[1], [0], [0], [1], [0, 0, 1, 1], [], []>} : vector<8x256xbf16>, vector<256x128xbf16>, vector<8x128xf32> -> vector<8x128xf32>
    %c0_190 = arith.constant 0 : index
    %c0_191 = arith.constant 0 : index
    %456 = vector.load %arg13[%c0_190, %c0_191] : memref<1x128xf32, #tpu.memory_space<vmem>>, vector<1x128xf32>
    %457 = vector.broadcast %456 : vector<1x128xf32> to vector<8x128xf32>
    %458 = arith.addf %455, %457 : vector<8x128xf32>
    %cst_192 = arith.constant 0.000000e+00 : f32
    %459 = vector.broadcast %cst_192 : f32 to vector<8x128xf32>
    %460 = arith.maximumf %458, %459 : vector<8x128xf32>
    %461 = arith.truncf %460 : vector<8x128xf32> to vector<8x128xbf16>
    %c0_193 = arith.constant 0 : index
    %c0_194 = arith.constant 0 : index
    %462 = vector.load %arg14[%c0_193, %c0_194] : memref<128x128xbf16, #tpu.memory_space<vmem>>, vector<128x128xbf16>
    %cst_195 = arith.constant dense<0.000000e+00> : vector<8x128xf32>
    %463 = tpu.matmul %461, %462, %cst_195 {dimension_numbers = #tpu.dot_dimension_numbers<[1], [0], [0], [1], [0, 0, 1, 1], [], []>} : vector<8x128xbf16>, vector<128x128xbf16>, vector<8x128xf32> -> vector<8x128xf32>
    %c0_196 = arith.constant 0 : index
    %c0_197 = arith.constant 0 : index
    %464 = vector.load %arg15[%c0_196, %c0_197] : memref<1x128xf32, #tpu.memory_space<vmem>>, vector<1x128xf32>
    %465 = vector.broadcast %464 : vector<1x128xf32> to vector<8x128xf32>
    %466 = arith.addf %463, %465 : vector<8x128xf32>
    %cst_198 = arith.constant 0.000000e+00 : f32
    %467 = vector.broadcast %cst_198 : f32 to vector<8x128xf32>
    %468 = arith.maximumf %466, %467 : vector<8x128xf32>
    %469 = arith.truncf %468 : vector<8x128xf32> to vector<8x128xbf16>
    %c0_199 = arith.constant 0 : index
    %c0_200 = arith.constant 0 : index
    %470 = vector.load %arg16[%c0_199, %c0_200] : memref<128x128xbf16, #tpu.memory_space<vmem>>, vector<128x128xbf16>
    %cst_201 = arith.constant dense<0.000000e+00> : vector<8x128xf32>
    %471 = tpu.matmul %469, %470, %cst_201 {dimension_numbers = #tpu.dot_dimension_numbers<[1], [0], [0], [1], [0, 0, 1, 1], [], []>} : vector<8x128xbf16>, vector<128x128xbf16>, vector<8x128xf32> -> vector<8x128xf32>
    %c0_202 = arith.constant 0 : index
    %c0_203 = arith.constant 0 : index
    %472 = vector.load %arg17[%c0_202, %c0_203] : memref<1x128xf32, #tpu.memory_space<vmem>>, vector<1x128xf32>
    %473 = vector.broadcast %472 : vector<1x128xf32> to vector<8x128xf32>
    %474 = arith.addf %471, %473 : vector<8x128xf32>
    %c0_204 = arith.constant 0 : index
    %c0_205 = arith.constant 0 : index
    %c0_206 = arith.constant 0 : index
    %475 = vector.load %arg18[%c0_204, %c0_205, %c0_206] : memref<1x8x128xf32, #tpu.memory_space<vmem>>, vector<1x8x128xf32>
    %476 = vector.shape_cast %475 : vector<1x8x128xf32> to vector<8x128xf32>
    %477 = vector.shape_cast %474 : vector<8x128xf32> to vector<1x8x128xf32>
    tpu.vector_store %arg18[%c0_204, %c0_205, %c0_206], %477 {strides = array<i32>} : memref<1x8x128xf32, #tpu.memory_space<vmem>>, vector<1x8x128xf32>,
    return
  }
  func.func @transform_0(%arg0: i32) -> (i32, i32, i32) {
    %c0_i32 = arith.constant 0 : i32
    %c0_i32_0 = arith.constant 0 : i32
    %c0_i32_1 = arith.constant 0 : i32
    return %arg0, %c0_i32, %c0_i32_0 : i32, i32, i32
  }
  func.func @transform_1(%arg0: i32) -> (i32, i32, i32) {
    %c0_i32 = arith.constant 0 : i32
    %c0_i32_0 = arith.constant 0 : i32
    %c0_i32_1 = arith.constant 0 : i32
    return %arg0, %c0_i32, %c0_i32_0 : i32, i32, i32
  }
  func.func @transform_2(%arg0: i32) -> (i32, i32, i32) {
    %c0_i32 = arith.constant 0 : i32
    %c0_i32_0 = arith.constant 0 : i32
    %c0_i32_1 = arith.constant 0 : i32
    return %arg0, %c0_i32, %c0_i32_0 : i32, i32, i32
  }
  func.func @transform_3(%arg0: i32) -> (i32, i32) {
    %c0_i32 = arith.constant 0 : i32
    %c0_i32_0 = arith.constant 0 : i32
    %c0_i32_1 = arith.constant 0 : i32
    return %c0_i32, %c0_i32_0 : i32, i32
  }
  func.func @transform_4(%arg0: i32) -> (i32, i32) {
    %c0_i32 = arith.constant 0 : i32
    %c0_i32_0 = arith.constant 0 : i32
    %c0_i32_1 = arith.constant 0 : i32
    return %c0_i32, %c0_i32_0 : i32, i32
  }
  func.func @transform_5(%arg0: i32) -> (i32, i32, i32) {
    %c0_i32 = arith.constant 0 : i32
    %c0_i32_0 = arith.constant 0 : i32
    %c0_i32_1 = arith.constant 0 : i32
    %c0_i32_2 = arith.constant 0 : i32
    return %c0_i32, %c0_i32_0, %c0_i32_1 : i32, i32, i32
  }
  func.func @transform_6(%arg0: i32) -> (i32, i32, i32) {
    %c0_i32 = arith.constant 0 : i32
    %c0_i32_0 = arith.constant 0 : i32
    %c0_i32_1 = arith.constant 0 : i32
    %c0_i32_2 = arith.constant 0 : i32
    return %c0_i32, %c0_i32_0, %c0_i32_1 : i32, i32, i32
  }
  func.func @transform_7(%arg0: i32) -> (i32, i32, i32) {
    %c0_i32 = arith.constant 0 : i32
    %c0_i32_0 = arith.constant 0 : i32
    %c0_i32_1 = arith.constant 0 : i32
    %c0_i32_2 = arith.constant 0 : i32
    return %c0_i32, %c0_i32_0, %c0_i32_1 : i32, i32, i32
  }
  func.func @transform_8(%arg0: i32) -> (i32, i32, i32) {
    %c0_i32 = arith.constant 0 : i32
    %c0_i32_0 = arith.constant 0 : i32
    %c0_i32_1 = arith.constant 0 : i32
    %c0_i32_2 = arith.constant 0 : i32
    return %c0_i32, %c0_i32_0, %c0_i32_1 : i32, i32, i32
  }
  func.func @transform_9(%arg0: i32) -> (i32, i32) {
    %c0_i32 = arith.constant 0 : i32
    %c0_i32_0 = arith.constant 0 : i32
    %c0_i32_1 = arith.constant 0 : i32
    return %c0_i32, %c0_i32_0 : i32, i32
  }
  func.func @transform_10(%arg0: i32) -> (i32, i32) {
    %c0_i32 = arith.constant 0 : i32
    %c0_i32_0 = arith.constant 0 : i32
    %c0_i32_1 = arith.constant 0 : i32
    return %c0_i32, %c0_i32_0 : i32, i32
  }
  func.func @transform_11(%arg0: i32) -> (i32, i32) {
    %c0_i32 = arith.constant 0 : i32
    %c0_i32_0 = arith.constant 0 : i32
    %c0_i32_1 = arith.constant 0 : i32
    return %c0_i32, %c0_i32_0 : i32, i32
  }
  func.func @transform_12(%arg0: i32) -> (i32, i32) {
    %c0_i32 = arith.constant 0 : i32
    %c0_i32_0 = arith.constant 0 : i32
    %c0_i32_1 = arith.constant 0 : i32
    return %c0_i32, %c0_i32_0 : i32, i32
  }
  func.func @transform_13(%arg0: i32) -> (i32, i32) {
    %c0_i32 = arith.constant 0 : i32
    %c0_i32_0 = arith.constant 0 : i32
    %c0_i32_1 = arith.constant 0 : i32
    return %c0_i32, %c0_i32_0 : i32, i32
  }
  func.func @transform_14(%arg0: i32) -> (i32, i32) {
    %c0_i32 = arith.constant 0 : i32
    %c0_i32_0 = arith.constant 0 : i32
    %c0_i32_1 = arith.constant 0 : i32
    return %c0_i32, %c0_i32_0 : i32, i32
  }
  func.func @transform_15(%arg0: i32) -> (i32, i32) {
    %c0_i32 = arith.constant 0 : i32
    %c0_i32_0 = arith.constant 0 : i32
    %c0_i32_1 = arith.constant 0 : i32
    return %c0_i32, %c0_i32_0 : i32, i32
  }
  func.func @transform_16(%arg0: i32) -> (i32, i32) {
    %c0_i32 = arith.constant 0 : i32
    %c0_i32_0 = arith.constant 0 : i32
    %c0_i32_1 = arith.constant 0 : i32
    return %c0_i32, %c0_i32_0 : i32, i32
  }
  func.func @transform_17(%arg0: i32) -> (i32, i32, i32) {
    %c0_i32 = arith.constant 0 : i32
    %c0_i32_0 = arith.constant 0 : i32
    %c0_i32_1 = arith.constant 0 : i32
    return %arg0, %c0_i32, %c0_i32_0 : i32, i32, i32
  }
}

</mosaic_0001>

<llo_original>
// kernel: rtgn_gat_forward.1
$region0: #{rtgn_gat_forward.1}
  #allocation0 [shape = 'u32[]', space=smem, size = 0x4, offset = 0x4, fixed_abs, tag = 'smem constant byte address 0x4 - core index']
  #allocation1 [shape = 'u32[72,128]{1,0:T(1,128)}', space=vmem, size = 0x9000, scoped, tag = 'internal scratch']
  #allocation2 [shape = 'bf16[8,384]{1,0:T(8,128)(2,1)}', space=vmem, size = 0x1800, scoped, tag = 'scratch operand']
  %s0 = inlined_call_operand.hbm [shape: f32[2,128,128], index: 0, kind: input, shape index: {}]
  %s1 = inlined_call_operand.hbm [shape: f32[2,128,128], index: 1, kind: input, shape index: {}]
  %s2 = inlined_call_operand.hbm [shape: f32[2,8,128], index: 2, kind: input, shape index: {}]
  %s3 = inlined_call_operand.hbm [shape: bf16[128,128], index: 3, kind: input, shape index: {}]
  %s4 = inlined_call_operand.vmem [shape: f32[1,128], index: 4, kind: input, shape index: {}]
  %s5 = inlined_call_operand.hbm [shape: bf16[3,128,128], index: 5, kind: input, shape index: {}]
  %s6 = inlined_call_operand.vmem [shape: bf16[3,1,128], index: 6, kind: input, shape index: {}]
  %s7 = inlined_call_operand.hbm [shape: f32[3,1,128], index: 7, kind: input, shape index: {}]
  %s8 = inlined_call_operand.vmem [shape: f32[3,1,128], index: 8, kind: input, shape index: {}]
  %s9 = inlined_call_operand.hbm [shape: bf16[384,512], index: 9, kind: input, shape index: {}]
  %s10 = inlined_call_operand.vmem [shape: f32[1,512], index: 10, kind: input, shape index: {}]
  %s11 = inlined_call_operand.hbm [shape: bf16[256,128], index: 11, kind: input, shape index: {}]
  %s12 = inlined_call_operand.hbm [shape: f32[1,128], index: 12, kind: input, shape index: {}]
  %s13 = inlined_call_operand.hbm [shape: bf16[128,128], index: 13, kind: input, shape index: {}]
  %s14 = inlined_call_operand.hbm [shape: f32[1,128], index: 14, kind: input, shape index: {}]
  %s15 = inlined_call_operand.hbm [shape: bf16[128,128], index: 15, kind: input, shape index: {}]
  %s16 = inlined_call_operand.hbm [shape: f32[1,128], index: 16, kind: input, shape index: {}]
  %s17 = inlined_call_operand.vmem [shape: f32[2,8,128], index: 17, kind: output, shape index: {}]
  %s18 = sld [smem:[#allocation0]]
  $region153: #{rtgn_gat_forward.1} parent=0
    _
  %s20 = ssub.s32 1, %s18
  %s21 = scalar_select 0, %s20, %s18
  $region1: #{rtgn_gat_forward.1} parent=0
    #allocation3 [shape = 'u8[131072]{0}', space=vmem, size = 0x20000, scoped, tag = 'input window, operand 0']
    #allocation4 [shape = 's32[2]{0}', space=sflag, size = 0x8, scoped, tag = 'scoped memory for rtgn_gat_forward.1']
    #allocation5 [shape = 'u8[131072]{0}', space=vmem, size = 0x20000, scoped, tag = 'input window, operand 1']
    #allocation6 [shape = 's32[2]{0}', space=sflag, size = 0x8, scoped, tag = 'scoped memory for rtgn_gat_forward.1']
    #allocation7 [shape = 'u8[8192]{0}', space=vmem, size = 0x2000, scoped, tag = 'input window, operand 2']
    #allocation8 [shape = 'u8[32768]{0}', space=vmem, size = 0x8000, scoped, tag = 'input window, operand 3, single buffered']
    #allocation9 [shape = 's32[1]{0}', space=sflag, size = 0x4, scoped, tag = 'scoped memory for rtgn_gat_forward.1']
    #allocation10 [shape = 'u8[98304]{0}', space=vmem, size = 0x18000, scoped, tag = 'input window, operand 5, single buffered']
    #allocation11 [shape = 'u8[1536]{0}', space=vmem, size = 0x800, scoped, tag = 'input window, operand 7, single buffered']
    #allocation12 [shape = 's32[1]{0}', space=sflag, size = 0x4, scoped, tag = 'scoped memory for rtgn_gat_forward.1']
    #allocation13 [shape = 'u8[393216]{0}', space=vmem, size = 0x60000, scoped, tag = 'input window, operand 9, single buffered']
    #allocation14 [shape = 'u8[65536]{0}', space=vmem, size = 0x10000, scoped, tag = 'input window, operand 11, single buffered']
    #allocation15 [shape = 's32[1]{0}', space=sflag, size = 0x4, scoped, tag = 'scoped memory for rtgn_gat_forward.1']
    #allocation16 [shape = 'u8[512]{0}', space=vmem, size = 0x400, scoped, tag = 'input window, operand 12, single buffered']
    #allocation17 [shape = 'u8[32768]{0}', space=vmem, size = 0x8000, scoped, tag = 'input window, operand 13, single buffered']
    #allocation18 [shape = 's32[1]{0}', space=sflag, size = 0x4, scoped, tag = 'scoped memory for rtgn_gat_forward.1']
    #allocation19 [shape = 'u8[512]{0}', space=vmem, size = 0x400, scoped, tag = 'input window, operand 14, single buffered']
    #allocation20 [shape = 'u8[32768]{0}', space=vmem, size = 0x8000, scoped, tag = 'input window, operand 15, single buffered']
    #allocation21 [shape = 's32[1]{0}', space=sflag, size = 0x4, scoped, tag = 'scoped memory for rtgn_gat_forward.1']
    #allocation22 [shape = 'u8[512]{0}', space=vmem, size = 0x400, scoped, tag = 'input window, operand 16, single buffered']
    %22 = vsyncpa [#allocation4], 0
    %s23 = scalar_lea.sflag [#allocation4], 1
    %24 = vsyncpa %s23, 0
    %25 = vsyncpa [#allocation6], 0
    %s26 = scalar_lea.sflag [#allocation6], 1
    %27 = vsyncpa %s26, 0
    %28 = vsyncpa [#allocation9], 0
    %29 = vsyncpa [#allocation12], 0
    %30 = vsyncpa [#allocation15], 0
    %31 = vsyncpa [#allocation18], 0
    %32 = vsyncpa [#allocation21], 0
    loop: start=0, step=1, limit=4
    $region2: #{rtgn_gat_forward.1} parent=1 // loop_pre_header
      _
    $region3: #{rtgn_gat_forward.1} parent=1 // loop_header
      %s34 = sphi 0, %s38
      %p35 = scmp.ge.s32.totalorder %s34, 4
      %s44 = sphi 0, %s46
      %s47 = sphi 0, %s44
      %s48 = sphi 0, %s47
      %s64 = sphi 0, %s48
      %s70 = sphi 0, %s72
      %s73 = sphi 0, %s70
      %s74 = sphi 0, %s73
      %s90 = sphi 0, %s74
      %s96 = sphi 0, %s98
      %s99 = sphi 0, %s96
      %s100 = sphi 0, %s99
      %s116 = sphi 0, %s100
      %s120 = sphi 0, %s120
      %s122 = sphi 0, %s120
      %s123 = sphi 0, %s122
      %s137 = sphi 0, %s123
      %s141 = sphi 0, %s141
      %s143 = sphi 0, %s141
      %s144 = sphi 0, %s143
      %s158 = sphi 0, %s144
      %s162 = sphi 0, %s162
      %s164 = sphi 0, %s162
      %s165 = sphi 0, %s164
      %s179 = sphi 0, %s165
      %s183 = sphi 0, %s183
      %s185 = sphi 0, %s183
      %s186 = sphi 0, %s185
      %s200 = sphi 0, %s186
      %s204 = sphi 0, %s204
      %s206 = sphi 0, %s204
      %s207 = sphi 0, %s206
      %s221 = sphi 0, %s207
      %s225 = sphi 0, %s225
      %s227 = sphi 0, %s225
      %s228 = sphi 0, %s227
      %s242 = sphi 0, %s228
      %s246 = sphi 0, %s246
      %s248 = sphi 0, %s246
      %s249 = sphi 0, %s248
      %s263 = sphi 0, %s249
      %s267 = sphi 0, %s267
      %s269 = sphi 0, %s267
      %s270 = sphi 0, %s269
      %s284 = sphi 0, %s270
      %s288 = sphi 0, %s288
      %s290 = sphi 0, %s288
      %s291 = sphi 0, %s290
      %s305 = sphi 0, %s291
      %s309 = sphi 0, %s309
      %s311 = sphi 0, %s309
      %s312 = sphi 0, %s311
      %s326 = sphi 0, %s312
      %s330 = sphi 0, %s330
      %s332 = sphi 0, %s330
      %s333 = sphi 0, %s332
      %s347 = sphi 0, %s333
      %s351 = sphi 0, %s351
      %s353 = sphi 0, %s351
      %s354 = sphi 0, %s353
      %s368 = sphi 0, %s354
      %s372 = sphi 0, %s372
      %s374 = sphi 0, %s372
      %s375 = sphi 0, %s374
      %s389 = sphi 0, %s375
      %s393 = sphi 0, %s393
      %s395 = sphi 0, %s393
      %s396 = sphi 0, %s395
      %s410 = sphi 0, %s396
      %s416 = sphi 0, %s418
      %s419 = sphi 0, %s416
      %s420 = sphi 0, %s419
      %s436 = sphi 0, %s420
    $region4: #{rtgn_gat_forward.1} parent=1 // loop_header_branch
      %37 = sbr.rel (%p35) target = $region8
    $region5: #{rtgn_gat_forward.1} parent=1 // loop_body
      %s39 = ssub.s32 %s34, 1
      %s40 = ssub.s32 %s34, 2
      %s41 = sadd.s32 %s34, 1
      %s42 = ssub.s32 %s34, %s41
      %p43 = scmp.eq.s32.totalorder %s42, 0
      %s45 = sadd.s32 %s44, 1
      %s46 = scalar_select %p43, %s44, %s45
      %p49 = pneg %p43
      %p50 = scmp.eq.s32.totalorder %s34, 1
      %p51 = por %p49, %p50
      %p52 = scmp.ne.s32.totalorder %s44, %s47
      %p53 = scmp.eq.s32.totalorder %s34, 0
      %p54 = por %p52, %p53
      %p55 = scmp.ne.s32.totalorder %s44, %s47
      %p56 = scmp.eq.s32.totalorder %s39, 1
      %p57 = por %p55, %p56
      %p58 = scmp.ne.s32.totalorder %s47, %s48
      %p59 = scmp.eq.s32.totalorder %s39, 0
      %p60 = por %p58, %p59
      %p61 = scmp.ne.s32.totalorder %s47, %s48
      %p62 = scmp.eq.s32.totalorder %s40, 1
      %p63 = por %p61, %p62
      %p65 = scmp.ne.s32.totalorder %s48, %s64
      %p66 = scmp.eq.s32.totalorder %s40, 0
      %p67 = por %p65, %p66
      %s68 = ssub.s32 %s34, %s41
      %p69 = scmp.eq.s32.totalorder %s68, 0
      %s71 = sadd.s32 %s70, 1
      %s72 = scalar_select %p69, %s70, %s71
      %p75 = pneg %p69
      %p76 = scmp.eq.s32.totalorder %s34, 1
      %p77 = por %p75, %p76
      %p78 = scmp.ne.s32.totalorder %s70, %s73
      %p79 = scmp.eq.s32.totalorder %s34, 0
      %p80 = por %p78, %p79
      %p81 = scmp.ne.s32.totalorder %s70, %s73
      %p82 = scmp.eq.s32.totalorder %s39, 1
      %p83 = por %p81, %p82
      %p84 = scmp.ne.s32.totalorder %s73, %s74
      %p85 = scmp.eq.s32.totalorder %s39, 0
      %p86 = por %p84, %p85
      %p87 = scmp.ne.s32.totalorder %s73, %s74
      %p88 = scmp.eq.s32.totalorder %s40, 1
      %p89 = por %p87, %p88
      %p91 = scmp.ne.s32.totalorder %s74, %s90
      %p92 = scmp.eq.s32.totalorder %s40, 0
      %p93 = por %p91, %p92
      %s94 = ssub.s32 %s34, %s41
      %p95 = scmp.eq.s32.totalorder %s94, 0
      %s97 = sadd.s32 %s96, 1
      %s98 = scalar_select %p95, %s96, %s97
      %p101 = pneg %p95
      %p102 = scmp.eq.s32.totalorder %s34, 1
      %p103 = por %p101, %p102
      %p104 = scmp.ne.s32.totalorder %s96, %s99
      %p105 = scmp.eq.s32.totalorder %s34, 0
      %p106 = por %p104, %p105
      %p107 = scmp.ne.s32.totalorder %s96, %s99
      %p108 = scmp.eq.s32.totalorder %s39, 1
      %p109 = por %p107, %p108
      %p110 = scmp.ne.s32.totalorder %s99, %s100
      %p111 = scmp.eq.s32.totalorder %s39, 0
      %p112 = por %p110, %p111
      %p113 = scmp.ne.s32.totalorder %s99, %s100
      %p114 = scmp.eq.s32.totalorder %s40, 1
      %p115 = por %p113, %p114
      %p117 = scmp.ne.s32.totalorder %s100, %s116
      %p118 = scmp.eq.s32.totalorder %s40, 0
      %p119 = por %p117, %p118
      %s121 = sadd.s32 %s120, 1
      %p124 = scmp.eq.s32.totalorder %s34, 1
      %p125 = scmp.ne.s32.totalorder %s120, %s122
      %p126 = scmp.eq.s32.totalorder %s34, 0
      %p127 = por %p125, %p126
      %p128 = scmp.ne.s32.totalorder %s120, %s122
      %p129 = scmp.eq.s32.totalorder %s39, 1
      %p130 = por %p128, %p129
      %p131 = scmp.ne.s32.totalorder %s122, %s123
      %p132 = scmp.eq.s32.totalorder %s39, 0
      %p133 = por %p131, %p132
      %p134 = scmp.ne.s32.totalorder %s122, %s123
      %p135 = scmp.eq.s32.totalorder %s40, 1
      %p136 = por %p134, %p135
      %p138 = scmp.ne.s32.totalorder %s123, %s137
      %p139 = scmp.eq.s32.totalorder %s40, 0
      %p140 = por %p138, %p139
      %s142 = sadd.s32 %s141, 1
      %p145 = scmp.eq.s32.totalorder %s34, 1
      %p146 = scmp.ne.s32.totalorder %s141, %s143
      %p147 = scmp.eq.s32.totalorder %s34, 0
      %p148 = por %p146, %p147
      %p149 = scmp.ne.s32.totalorder %s141, %s143
      %p150 = scmp.eq.s32.totalorder %s39, 1
      %p151 = por %p149, %p150
      %p152 = scmp.ne.s32.totalorder %s143, %s144
      %p153 = scmp.eq.s32.totalorder %s39, 0
      %p154 = por %p152, %p153
      %p155 = scmp.ne.s32.totalorder %s143, %s144
      %p156 = scmp.eq.s32.totalorder %s40, 1
      %p157 = por %p155, %p156
      %p159 = scmp.ne.s32.totalorder %s144, %s158
      %p160 = scmp.eq.s32.totalorder %s40, 0
      %p161 = por %p159, %p160
      %s163 = sadd.s32 %s162, 1
      %p166 = scmp.eq.s32.totalorder %s34, 1
      %p167 = scmp.ne.s32.totalorder %s162, %s164
      %p168 = scmp.eq.s32.totalorder %s34, 0
      %p169 = por %p167, %p168
      %p170 = scmp.ne.s32.totalorder %s162, %s164
      %p171 = scmp.eq.s32.totalorder %s39, 1
      %p172 = por %p170, %p171
      %p173 = scmp.ne.s32.totalorder %s164, %s165
      %p174 = scmp.eq.s32.totalorder %s39, 0
      %p175 = por %p173, %p174
      %p176 = scmp.ne.s32.totalorder %s164, %s165
      %p177 = scmp.eq.s32.totalorder %s40, 1
      %p178 = por %p176, %p177
      %p180 = scmp.ne.s32.totalorder %s165, %s179
      %p181 = scmp.eq.s32.totalorder %s40, 0
      %p182 = por %p180, %p181
      %s184 = sadd.s32 %s183, 1
      %p187 = scmp.eq.s32.totalorder %s34, 1
      %p188 = scmp.ne.s32.totalorder %s183, %s185
      %p189 = scmp.eq.s32.totalorder %s34, 0
      %p190 = por %p188, %p189
      %p191 = scmp.ne.s32.totalorder %s183, %s185
      %p192 = scmp.eq.s32.totalorder %s39, 1
      %p193 = por %p191, %p192
      %p194 = scmp.ne.s32.totalorder %s185, %s186
      %p195 = scmp.eq.s32.totalorder %s39, 0
      %p196 = por %p194, %p195
      %p197 = scmp.ne.s32.totalorder %s185, %s186
      %p198 = scmp.eq.s32.totalorder %s40, 1
      %p199 = por %p197, %p198
      %p201 = scmp.ne.s32.totalorder %s186, %s200
      %p202 = scmp.eq.s32.totalorder %s40, 0
      %p203 = por %p201, %p202
      %s205 = sadd.s32 %s204, 1
      %p208 = scmp.eq.s32.totalorder %s34, 1
      %p209 = scmp.ne.s32.totalorder %s204, %s206
      %p210 = scmp.eq.s32.totalorder %s34, 0
      %p211 = por %p209, %p210
      %p212 = scmp.ne.s32.totalorder %s204, %s206
      %p213 = scmp.eq.s32.totalorder %s39, 1
      %p214 = por %p212, %p213
      %p215 = scmp.ne.s32.totalorder %s206, %s207
      %p216 = scmp.eq.s32.totalorder %s39, 0
      %p217 = por %p215, %p216
      %p218 = scmp.ne.s32.totalorder %s206, %s207
      %p219 = scmp.eq.s32.totalorder %s40, 1
      %p220 = por %p218, %p219
      %p222 = scmp.ne.s32.totalorder %s207, %s221
      %p223 = scmp.eq.s32.totalorder %s40, 0
      %p224 = por %p222, %p223
      %s226 = sadd.s32 %s225, 1
      %p229 = scmp.eq.s32.totalorder %s34, 1
      %p230 = scmp.ne.s32.totalorder %s225, %s227
      %p231 = scmp.eq.s32.totalorder %s34, 0
      %p232 = por %p230, %p231
      %p233 = scmp.ne.s32.totalorder %s225, %s227
      %p234 = scmp.eq.s32.totalorder %s39, 1
      %p235 = por %p233, %p234
      %p236 = scmp.ne.s32.totalorder %s227, %s228
      %p237 = scmp.eq.s32.totalorder %s39, 0
      %p238 = por %p236, %p237
      %p239 = scmp.ne.s32.totalorder %s227, %s228
      %p240 = scmp.eq.s32.totalorder %s40, 1
      %p241 = por %p239, %p240
      %p243 = scmp.ne.s32.totalorder %s228, %s242
      %p244 = scmp.eq.s32.totalorder %s40, 0
      %p245 = por %p243, %p244
      %s247 = sadd.s32 %s246, 1
      %p250 = scmp.eq.s32.totalorder %s34, 1
      %p251 = scmp.ne.s32.totalorder %s246, %s248
      %p252 = scmp.eq.s32.totalorder %s34, 0
      %p253 = por %p251, %p252
      %p254 = scmp.ne.s32.totalorder %s246, %s248
      %p255 = scmp.eq.s32.totalorder %s39, 1
      %p256 = por %p254, %p255
      %p257 = scmp.ne.s32.totalorder %s248, %s249
      %p258 = scmp.eq.s32.totalorder %s39, 0
      %p259 = por %p257, %p258
      %p260 = scmp.ne.s32.totalorder %s248, %s249
      %p261 = scmp.eq.s32.totalorder %s40, 1
      %p262 = por %p260, %p261
      %p264 = scmp.ne.s32.totalorder %s249, %s263
      %p265 = scmp.eq.s32.totalorder %s40, 0
      %p266 = por %p264, %p265
      %s268 = sadd.s32 %s267, 1
      %p271 = scmp.eq.s32.totalorder %s34, 1
      %p272 = scmp.ne.s32.totalorder %s267, %s269
      %p273 = scmp.eq.s32.totalorder %s34, 0
      %p274 = por %p272, %p273
      %p275 = scmp.ne.s32.totalorder %s267, %s269
      %p276 = scmp.eq.s32.totalorder %s39, 1
      %p277 = por %p275, %p276
      %p278 = scmp.ne.s32.totalorder %s269, %s270
      %p279 = scmp.eq.s32.totalorder %s39, 0
      %p280 = por %p278, %p279
      %p281 = scmp.ne.s32.totalorder %s269, %s270
      %p282 = scmp.eq.s32.totalorder %s40, 1
      %p283 = por %p281, %p282
      %p285 = scmp.ne.s32.totalorder %s270, %s284
      %p286 = scmp.eq.s32.totalorder %s40, 0
      %p287 = por %p285, %p286
      %s289 = sadd.s32 %s288, 1
      %p292 = scmp.eq.s32.totalorder %s34, 1
      %p293 = scmp.ne.s32.totalorder %s288, %s290
      %p294 = scmp.eq.s32.totalorder %s34, 0
      %p295 = por %p293, %p294
      %p296 = scmp.ne.s32.totalorder %s288, %s290
      %p297 = scmp.eq.s32.totalorder %s39, 1
      %p298 = por %p296, %p297
      %p299 = scmp.ne.s32.totalorder %s290, %s291
      %p300 = scmp.eq.s32.totalorder %s39, 0
      %p301 = por %p299, %p300
      %p302 = scmp.ne.s32.totalorder %s290, %s291
      %p303 = scmp.eq.s32.totalorder %s40, 1
      %p304 = por %p302, %p303
      %p306 = scmp.ne.s32.totalorder %s291, %s305
      %p307 = scmp.eq.s32.totalorder %s40, 0
      %p308 = por %p306, %p307
      %s310 = sadd.s32 %s309, 1
      %p313 = scmp.eq.s32.totalorder %s34, 1
      %p314 = scmp.ne.s32.totalorder %s309, %s311
      %p315 = scmp.eq.s32.totalorder %s34, 0
      %p316 = por %p314, %p315
      %p317 = scmp.ne.s32.totalorder %s309, %s311
      %p318 = scmp.eq.s32.totalorder %s39, 1
      %p319 = por %p317, %p318
      %p320 = scmp.ne.s32.totalorder %s311, %s312
      %p321 = scmp.eq.s32.totalorder %s39, 0
      %p322 = por %p320, %p321
      %p323 = scmp.ne.s32.totalorder %s311, %s312
      %p324 = scmp.eq.s32.totalorder %s40, 1
      %p325 = por %p323, %p324
      %p327 = scmp.ne.s32.totalorder %s312, %s326
      %p328 = scmp.eq.s32.totalorder %s40, 0
      %p329 = por %p327, %p328
      %s331 = sadd.s32 %s330, 1
      %p334 = scmp.eq.s32.totalorder %s34, 1
      %p335 = scmp.ne.s32.totalorder %s330, %s332
      %p336 = scmp.eq.s32.totalorder %s34, 0
      %p337 = por %p335, %p336
      %p338 = scmp.ne.s32.totalorder %s330, %s332
      %p339 = scmp.eq.s32.totalorder %s39, 1
      %p340 = por %p338, %p339
      %p341 = scmp.ne.s32.totalorder %s332, %s333
      %p342 = scmp.eq.s32.totalorder %s39, 0
      %p343 = por %p341, %p342
      %p344 = scmp.ne.s32.totalorder %s332, %s333
      %p345 = scmp.eq.s32.totalorder %s40, 1
      %p346 = por %p344, %p345
      %p348 = scmp.ne.s32.totalorder %s333, %s347
      %p349 = scmp.eq.s32.totalorder %s40, 0
      %p350 = por %p348, %p349
      %s352 = sadd.s32 %s351, 1
      %p355 = scmp.eq.s32.totalorder %s34, 1
      %p356 = scmp.ne.s32.totalorder %s351, %s353
      %p357 = scmp.eq.s32.totalorder %s34, 0
      %p358 = por %p356, %p357
      %p359 = scmp.ne.s32.totalorder %s351, %s353
      %p360 = scmp.eq.s32.totalorder %s39, 1
      %p361 = por %p359, %p360
      %p362 = scmp.ne.s32.totalorder %s353, %s354
      %p363 = scmp.eq.s32.totalorder %s39, 0
      %p364 = por %p362, %p363
      %p365 = scmp.ne.s32.totalorder %s353, %s354
      %p366 = scmp.eq.s32.totalorder %s40, 1
      %p367 = por %p365, %p366
      %p369 = scmp.ne.s32.totalorder %s354, %s368
      %p370 = scmp.eq.s32.totalorder %s40, 0
      %p371 = por %p369, %p370
      %s373 = sadd.s32 %s372, 1
      %p376 = scmp.eq.s32.totalorder %s34, 1
      %p377 = scmp.ne.s32.totalorder %s372, %s374
      %p378 = scmp.eq.s32.totalorder %s34, 0
      %p379 = por %p377, %p378
      %p380 = scmp.ne.s32.totalorder %s372, %s374
      %p381 = scmp.eq.s32.totalorder %s39, 1
      %p382 = por %p380, %p381
      %p383 = scmp.ne.s32.totalorder %s374, %s375
      %p384 = scmp.eq.s32.totalorder %s39, 0
      %p385 = por %p383, %p384
      %p386 = scmp.ne.s32.totalorder %s374, %s375
      %p387 = scmp.eq.s32.totalorder %s40, 1
      %p388 = por %p386, %p387
      %p390 = scmp.ne.s32.totalorder %s375, %s389
      %p391 = scmp.eq.s32.totalorder %s40, 0
      %p392 = por %p390, %p391
      %s394 = sadd.s32 %s393, 1
      %p397 = scmp.eq.s32.totalorder %s34, 1
      %p398 = scmp.ne.s32.totalorder %s393, %s395
      %p399 = scmp.eq.s32.totalorder %s34, 0
      %p400 = por %p398, %p399
      %p401 = scmp.ne.s32.totalorder %s393, %s395
      %p402 = scmp.eq.s32.totalorder %s39, 1
      %p403 = por %p401, %p402
      %p404 = scmp.ne.s32.totalorder %s395, %s396
      %p405 = scmp.eq.s32.totalorder %s39, 0
      %p406 = por %p404, %p405
      %p407 = scmp.ne.s32.totalorder %s395, %s396
      %p408 = scmp.eq.s32.totalorder %s40, 1
      %p409 = por %p407, %p408
      %p411 = scmp.ne.s32.totalorder %s396, %s410
      %p412 = scmp.eq.s32.totalorder %s40, 0
      %p413 = por %p411, %p412
      %s414 = ssub.s32 %s34, %s41
      %p415 = scmp.eq.s32.totalorder %s414, 0
      %s417 = sadd.s32 %s416, 1
      %s418 = scalar_select %p415, %s416, %s417
      %p421 = pneg %p415
      %p422 = scmp.eq.s32.totalorder %s34, 1
      %p423 = por %p421, %p422
      %p424 = scmp.ne.s32.totalorder %s416, %s419
      %p425 = scmp.eq.s32.totalorder %s34, 0
      %p426 = por %p424, %p425
      %p427 = scmp.ne.s32.totalorder %s416, %s419
      %p428 = scmp.eq.s32.totalorder %s39, 1
      %p429 = por %p427, %p428
      %p430 = scmp.ne.s32.totalorder %s419, %s420
      %p431 = scmp.eq.s32.totalorder %s39, 0
      %p432 = por %p430, %p431
      %p433 = scmp.ne.s32.totalorder %s419, %s420
      %p434 = scmp.eq.s32.totalorder %s40, 1
      %p435 = por %p433, %p434
      %p437 = scmp.ne.s32.totalorder %s420, %s436
      %p438 = scmp.eq.s32.totalorder %s40, 0
      %p439 = por %p437, %p438
      %p440 = scmp.le.s32.totalorder 1, %s34
      %p441 = scmp.lt.s32.totalorder %s34, 3
      %p442 = pnand %p440, %p441
      %p443 = pneg %p442
      // Predicated region
      $region9: #{rtgn_gat_forward.1} parent=5 // pred_check
        _
      $region10: #{rtgn_gat_forward.1} parent=5 // pred_check_branch
        %445 = sbr.rel (%p442) target = $region12
      $region11: #{rtgn_gat_forward.1} parent=5 // pred_region
        %s446 = ssub.s32 %s34, 1
        // Predicated region
        $region13: #{rtgn_gat_forward.1} parent=11 // pred_check
          %p447 = pneg %p133
        $region14: #{rtgn_gat_forward.1} parent=11 // pred_check_branch
          %449 = sbr.rel (%p447) target = $region16
        $region15: #{rtgn_gat_forward.1} parent=11 // pred_region
          %451 = vsyncadd [#allocation9], 0
          %s452 = sshll.u32 %s3, 4
          %s453 = int_to_ptr.hbm [resolvable:$true] %s452
          %s454 = sshll.u32 [#allocation8], 4
          %s455 = int_to_ptr.vmem [resolvable:$true] %s454
          %460 = dma.hbm_to_vmem [thread:$0]  %s453, 1024, %s455, [#allocation9], 64, 64, 4
        $region16: #{rtgn_gat_forward.1} parent=11 // pred_fallthru
          _
        // Predicated region
        $region17: #{rtgn_gat_forward.1} parent=11 // pred_check
          %p461 = pneg %p154
        $region18: #{rtgn_gat_forward.1} parent=11 // pred_check_branch
          %463 = sbr.rel (%p461) target = $region20
        $region19: #{rtgn_gat_forward.1} parent=11 // pred_region
          _
        $region20: #{rtgn_gat_forward.1} parent=11 // pred_fallthru
          _
        // Predicated region
        $region21: #{rtgn_gat_forward.1} parent=11 // pred_check
          %p464 = pneg %p175
        $region22: #{rtgn_gat_forward.1} parent=11 // pred_check_branch
          %466 = sbr.rel (%p464) target = $region24
        $region23: #{rtgn_gat_forward.1} parent=11 // pred_region
          %468 = vsyncadd [#allocation9], 0
          %s469 = sshll.u32 %s5, 4
          %s470 = int_to_ptr.hbm [resolvable:$true] %s469
          %s471 = sshll.u32 [#allocation10], 4
          %s472 = int_to_ptr.vmem [resolvable:$true] %s471
          %477 = dma.hbm_to_vmem [thread:$0]  %s470, 3072, %s472, [#allocation9], 64, 64, 4
        $region24: #{rtgn_gat_forward.1} parent=11 // pred_fallthru
          _
        // Predicated region
        $region25: #{rtgn_gat_forward.1} parent=11 // pred_check
          %p478 = pneg %p196
        $region26: #{rtgn_gat_forward.1} parent=11 // pred_check_branch
          %480 = sbr.rel (%p478) target = $region28
        $region27: #{rtgn_gat_forward.1} parent=11 // pred_region
          _
        $region28: #{rtgn_gat_forward.1} parent=11 // pred_fallthru
          _
        // Predicated region
        $region29: #{rtgn_gat_forward.1} parent=11 // pred_check
          %p481 = pneg %p217
        $region30: #{rtgn_gat_forward.1} parent=11 // pred_check_branch
          %483 = sbr.rel (%p481) target = $region32
        $region31: #{rtgn_gat_forward.1} parent=11 // pred_region
          %485 = vsyncadd [#allocation12], 0
          %s486 = sshll.u32 %s7, 4
          %s487 = int_to_ptr.hbm [resolvable:$true] %s486
          %s488 = sshll.u32 [#allocation11], 4
          %s489 = int_to_ptr.vmem [resolvable:$true] %s488
          %494 = dma.hbm_to_vmem [thread:$0]  %s487, 48, %s489, [#allocation12], 16, 16, 1
        $region32: #{rtgn_gat_forward.1} parent=11 // pred_fallthru
          _
        // Predicated region
        $region33: #{rtgn_gat_forward.1} parent=11 // pred_check
          %p495 = pneg %p238
        $region34: #{rtgn_gat_forward.1} parent=11 // pred_check_branch
          %497 = sbr.rel (%p495) target = $region36
        $region35: #{rtgn_gat_forward.1} parent=11 // pred_region
          _
        $region36: #{rtgn_gat_forward.1} parent=11 // pred_fallthru
          _
        // Predicated region
        $region37: #{rtgn_gat_forward.1} parent=11 // pred_check
          %p498 = pneg %p259
        $region38: #{rtgn_gat_forward.1} parent=11 // pred_check_branch
          %500 = sbr.rel (%p498) target = $region40
        $region39: #{rtgn_gat_forward.1} parent=11 // pred_region
          %502 = vsyncadd [#allocation12], 0
          %s503 = sshll.u32 %s9, 4
          %s504 = int_to_ptr.hbm [resolvable:$true] %s503
          %s505 = sshll.u32 [#allocation13], 4
          %s506 = int_to_ptr.vmem [resolvable:$true] %s505
          %511 = dma.hbm_to_vmem [thread:$0]  %s504, 12288, %s506, [#allocation12], 256, 256, 16
        $region40: #{rtgn_gat_forward.1} parent=11 // pred_fallthru
          _
        // Predicated region
        $region41: #{rtgn_gat_forward.1} parent=11 // pred_check
          %p512 = pneg %p280
        $region42: #{rtgn_gat_forward.1} parent=11 // pred_check_branch
          %514 = sbr.rel (%p512) target = $region44
        $region43: #{rtgn_gat_forward.1} parent=11 // pred_region
          _
        $region44: #{rtgn_gat_forward.1} parent=11 // pred_fallthru
          _
        // Predicated region
        $region45: #{rtgn_gat_forward.1} parent=11 // pred_check
          %p515 = pneg %p301
        $region46: #{rtgn_gat_forward.1} parent=11 // pred_check_branch
          %517 = sbr.rel (%p515) target = $region48
        $region47: #{rtgn_gat_forward.1} parent=11 // pred_region
          %519 = vsyncadd [#allocation15], 0
          %s520 = sshll.u32 %s11, 4
          %s521 = int_to_ptr.hbm [resolvable:$true] %s520
          %s522 = sshll.u32 [#allocation14], 4
          %s523 = int_to_ptr.vmem [resolvable:$true] %s522
          %528 = dma.hbm_to_vmem [thread:$0]  %s521, 2048, %s523, [#allocation15], 64, 64, 4
        $region48: #{rtgn_gat_forward.1} parent=11 // pred_fallthru
          _
        // Predicated region
        $region49: #{rtgn_gat_forward.1} parent=11 // pred_check
          %p529 = pneg %p322
        $region50: #{rtgn_gat_forward.1} parent=11 // pred_check_branch
          %531 = sbr.rel (%p529) target = $region52
        $region51: #{rtgn_gat_forward.1} parent=11 // pred_region
          %533 = vsyncadd [#allocation15], 0
          %s535 = sshll.u32 %s12, 4
          %s536 = int_to_ptr.hbm [resolvable:$true] %s535
          %s537 = sshll.u32 [#allocation16], 4
          %s538 = int_to_ptr.vmem [resolvable:$true] %s537
          %540 = dma.hbm_to_vmem [thread:$0]  %s536, 16, %s538, [#allocation15]
        $region52: #{rtgn_gat_forward.1} parent=11 // pred_fallthru
          _
        // Predicated region
        $region53: #{rtgn_gat_forward.1} parent=11 // pred_check
          %p541 = pneg %p343
        $region54: #{rtgn_gat_forward.1} parent=11 // pred_check_branch
          %543 = sbr.rel (%p541) target = $region56
        $region55: #{rtgn_gat_forward.1} parent=11 // pred_region
          %545 = vsyncadd [#allocation18], 0
          %s546 = sshll.u32 %s13, 4
          %s547 = int_to_ptr.hbm [resolvable:$true] %s546
          %s548 = sshll.u32 [#allocation17], 4
          %s549 = int_to_ptr.vmem [resolvable:$true] %s548
          %554 = dma.hbm_to_vmem [thread:$0]  %s547, 1024, %s549, [#allocation18], 64, 64, 4
        $region56: #{rtgn_gat_forward.1} parent=11 // pred_fallthru
          _
        // Predicated region
        $region57: #{rtgn_gat_forward.1} parent=11 // pred_check
          %p555 = pneg %p364
        $region58: #{rtgn_gat_forward.1} parent=11 // pred_check_branch
          %557 = sbr.rel (%p555) target = $region60
        $region59: #{rtgn_gat_forward.1} parent=11 // pred_region
          %559 = vsyncadd [#allocation18], 0
          %s561 = sshll.u32 %s14, 4
          %s562 = int_to_ptr.hbm [resolvable:$true] %s561
          %s563 = sshll.u32 [#allocation19], 4
          %s564 = int_to_ptr.vmem [resolvable:$true] %s563
          %566 = dma.hbm_to_vmem [thread:$0]  %s562, 16, %s564, [#allocation18]
        $region60: #{rtgn_gat_forward.1} parent=11 // pred_fallthru
          _
        // Predicated region
        $region61: #{rtgn_gat_forward.1} parent=11 // pred_check
          %p567 = pneg %p385
        $region62: #{rtgn_gat_forward.1} parent=11 // pred_check_branch
          %569 = sbr.rel (%p567) target = $region64
        $region63: #{rtgn_gat_forward.1} parent=11 // pred_region
          %571 = vsyncadd [#allocation21], 0
          %s572 = sshll.u32 %s15, 4
          %s573 = int_to_ptr.hbm [resolvable:$true] %s572
          %s574 = sshll.u32 [#allocation20], 4
          %s575 = int_to_ptr.vmem [resolvable:$true] %s574
          %580 = dma.hbm_to_vmem [thread:$0]  %s573, 1024, %s575, [#allocation21], 64, 64, 4
        $region64: #{rtgn_gat_forward.1} parent=11 // pred_fallthru
          _
        // Predicated region
        $region65: #{rtgn_gat_forward.1} parent=11 // pred_check
          %p581 = pneg %p406
        $region66: #{rtgn_gat_forward.1} parent=11 // pred_check_branch
          %583 = sbr.rel (%p581) target = $region68
        $region67: #{rtgn_gat_forward.1} parent=11 // pred_region
          %585 = vsyncadd [#allocation21], 0
          %s587 = sshll.u32 %s16, 4
          %s588 = int_to_ptr.hbm [resolvable:$true] %s587
          %s589 = sshll.u32 [#allocation22], 4
          %s590 = int_to_ptr.vmem [resolvable:$true] %s589
          %592 = dma.hbm_to_vmem [thread:$0]  %s588, 16, %s590, [#allocation21]
        $region68: #{rtgn_gat_forward.1} parent=11 // pred_fallthru
          _
      $region12: #{rtgn_gat_forward.1} parent=5 // pred_fallthru
        _
      %p593 = scmp.lt.s32.totalorder %s34, 2
      // Predicated region
      $region69: #{rtgn_gat_forward.1} parent=5 // pred_check
        %p594 = pneg %p593
      $region70: #{rtgn_gat_forward.1} parent=5 // pred_check_branch
        %596 = sbr.rel (%p594) target = $region72
      $region71: #{rtgn_gat_forward.1} parent=5 // pred_region
        // Predicated region
        $region73: #{rtgn_gat_forward.1} parent=71 // pred_check
          %p597 = pneg %p54
        $region74: #{rtgn_gat_forward.1} parent=71 // pred_check_branch
          %599 = sbr.rel (%p597) target = $region76
        $region75: #{rtgn_gat_forward.1} parent=71 // pred_region
          %s600 = sand.u32 %s44, 1
          %s601 = scalar_lea.sflag [#allocation4], %s600
          %s602 = sand.u32 %s44, 1
          %s603 = smul.addr %s602, 128
          %s604 = scalar_lea.vmem [#allocation3], %s603
          %606 = vsyncadd %s601, 0
          %s607 = smul.addr %s34, 16
          %s608 = smul.addr %s607, 8
          %s609 = scalar_lea.hbm %s0, %s608
          %s610 = sshll.u32 %s609, 4
          %s611 = int_to_ptr.hbm [resolvable:$true] %s610
          %s612 = sshll.u32 %s604, 4
          %s613 = int_to_ptr.vmem [resolvable:$true] %s612
          %618 = dma.hbm_to_vmem [thread:$0]  %s611, 2048, %s613, %s601, 128, 128, 8
        $region76: #{rtgn_gat_forward.1} parent=71 // pred_fallthru
          _
        // Predicated region
        $region77: #{rtgn_gat_forward.1} parent=71 // pred_check
          %p619 = pneg %p80
        $region78: #{rtgn_gat_forward.1} parent=71 // pred_check_branch
          %621 = sbr.rel (%p619) target = $region80
        $region79: #{rtgn_gat_forward.1} parent=71 // pred_region
          %s622 = sand.u32 %s34, 1
          %s623 = scalar_lea.sflag [#allocation6], %s622
          %s624 = sand.u32 %s70, 1
          %s625 = smul.addr %s624, 128
          %s626 = scalar_lea.vmem [#allocation5], %s625
          %628 = vsyncadd %s623, 0
          %s629 = smul.addr %s34, 16
          %s630 = smul.addr %s629, 8
          %s631 = scalar_lea.hbm %s1, %s630
          %s632 = sshll.u32 %s631, 4
          %s633 = int_to_ptr.hbm [resolvable:$true] %s632
          %s634 = sshll.u32 %s626, 4
          %s635 = int_to_ptr.vmem [resolvable:$true] %s634
          %640 = dma.hbm_to_vmem [thread:$0]  %s633, 2048, %s635, %s623, 128, 128, 8
        $region80: #{rtgn_gat_forward.1} parent=71 // pred_fallthru
          _
        // Predicated region
        $region81: #{rtgn_gat_forward.1} parent=71 // pred_check
          %p641 = pneg %p106
        $region82: #{rtgn_gat_forward.1} parent=71 // pred_check_branch
          %643 = sbr.rel (%p641) target = $region84
        $region83: #{rtgn_gat_forward.1} parent=71 // pred_region
          %s644 = sand.u32 %s34, 1
          %s645 = scalar_lea.sflag [#allocation6], %s644
          %s646 = sand.u32 %s96, 1
          %s647 = smul.addr %s646, 8
          %s648 = scalar_lea.vmem [#allocation7], %s647
          %650 = vsyncadd %s645, 0
          %s651 = smul.addr %s34, 8
          %s652 = scalar_lea.hbm %s2, %s651
          %s654 = sshll.u32 %s652, 4
          %s655 = int_to_ptr.hbm [resolvable:$true] %s654
          %s656 = sshll.u32 %s648, 4
          %s657 = int_to_ptr.vmem [resolvable:$true] %s656
          %659 = dma.hbm_to_vmem [thread:$0]  %s655, 128, %s657, %s645
        $region84: #{rtgn_gat_forward.1} parent=71 // pred_fallthru
          _
      $region72: #{rtgn_gat_forward.1} parent=5 // pred_fallthru
        _
      %p660 = scmp.le.s32.totalorder 1, %s34
      %p661 = scmp.lt.s32.totalorder %s34, 3
      %p662 = pnand %p660, %p661
      %p663 = pneg %p662
      // Predicated region
      $region85: #{rtgn_gat_forward.1} parent=5 // pred_check
        _
      $region86: #{rtgn_gat_forward.1} parent=5 // pred_check_branch
        %665 = sbr.rel (%p662) target = $region88
      $region87: #{rtgn_gat_forward.1} parent=5 // pred_region
        %s666 = ssub.s32 %s34, 1
        %s667 = sand.u32 %s47, 1
        %s668 = scalar_lea.sflag [#allocation4], %s667
        %s669 = sand.u32 %s47, 1
        %s670 = smul.addr %s669, 128
        %s671 = scalar_lea.vmem [#allocation3], %s670
        // Predicated region
        $region89: #{rtgn_gat_forward.1} parent=87 // pred_check
          %p672 = pneg %p60
        $region90: #{rtgn_gat_forward.1} parent=87 // pred_check_branch
          %674 = sbr.rel (%p672) target = $region92
        $region91: #{rtgn_gat_forward.1} parent=87 // pred_region
          %676 = dma.done %s668, 2048
        $region92: #{rtgn_gat_forward.1} parent=87 // pred_fallthru
          _
        %s677 = sand.u32 %s39, 1
        %s678 = scalar_lea.sflag [#allocation6], %s677
        %s679 = sand.u32 %s73, 1
        %s680 = smul.addr %s679, 128
        %s681 = scalar_lea.vmem [#allocation5], %s680
        // Predicated region
        $region93: #{rtgn_gat_forward.1} parent=87 // pred_check
          %p682 = pneg %p86
        $region94: #{rtgn_gat_forward.1} parent=87 // pred_check_branch
          %684 = sbr.rel (%p682) target = $region96
        $region95: #{rtgn_gat_forward.1} parent=87 // pred_region
          %686 = dma.done %s678, 2048
        $region96: #{rtgn_gat_forward.1} parent=87 // pred_fallthru
          _
        %s687 = sand.u32 %s39, 1
        %s688 = scalar_lea.sflag [#allocation6], %s687
        %s689 = sand.u32 %s99, 1
        %s690 = smul.addr %s689, 8
        %s691 = scalar_lea.vmem [#allocation7], %s690
        // Predicated region
        $region97: #{rtgn_gat_forward.1} parent=87 // pred_check
          %p692 = pneg %p112
        $region98: #{rtgn_gat_forward.1} parent=87 // pred_check_branch
          %694 = sbr.rel (%p692) target = $region100
        $region99: #{rtgn_gat_forward.1} parent=87 // pred_region
          %696 = dma.done %s688, 128
        $region100: #{rtgn_gat_forward.1} parent=87 // pred_fallthru
          _
        // Predicated region
        $region101: #{rtgn_gat_forward.1} parent=87 // pred_check
          %p697 = pneg %p133
        $region102: #{rtgn_gat_forward.1} parent=87 // pred_check_branch
          %699 = sbr.rel (%p697) target = $region104
        $region103: #{rtgn_gat_forward.1} parent=87 // pred_region
          %701 = dma.done [#allocation9], 1024
        $region104: #{rtgn_gat_forward.1} parent=87 // pred_fallthru
          _
        // Predicated region
        $region105: #{rtgn_gat_forward.1} parent=87 // pred_check
          %p702 = pneg %p175
        $region106: #{rtgn_gat_forward.1} parent=87 // pred_check_branch
          %704 = sbr.rel (%p702) target = $region108
        $region107: #{rtgn_gat_forward.1} parent=87 // pred_region
          %706 = dma.done [#allocation9], 3072
        $region108: #{rtgn_gat_forward.1} parent=87 // pred_fallthru
          _
        // Predicated region
        $region109: #{rtgn_gat_forward.1} parent=87 // pred_check
          %p707 = pneg %p217
        $region110: #{rtgn_gat_forward.1} parent=87 // pred_check_branch
          %709 = sbr.rel (%p707) target = $region112
        $region111: #{rtgn_gat_forward.1} parent=87 // pred_region
          %711 = dma.done [#allocation12], 48
        $region112: #{rtgn_gat_forward.1} parent=87 // pred_fallthru
          _
        // Predicated region
        $region113: #{rtgn_gat_forward.1} parent=87 // pred_check
          %p712 = pneg %p259
        $region114: #{rtgn_gat_forward.1} parent=87 // pred_check_branch
          %714 = sbr.rel (%p712) target = $region116
        $region115: #{rtgn_gat_forward.1} parent=87 // pred_region
          %716 = dma.done [#allocation12], 12288
        $region116: #{rtgn_gat_forward.1} parent=87 // pred_fallthru
          _
        // Predicated region
        $region117: #{rtgn_gat_forward.1} parent=87 // pred_check
          %p717 = pneg %p301
        $region118: #{rtgn_gat_forward.1} parent=87 // pred_check_branch
          %719 = sbr.rel (%p717) target = $region120
        $region119: #{rtgn_gat_forward.1} parent=87 // pred_region
          %721 = dma.done [#allocation15], 2048
        $region120: #{rtgn_gat_forward.1} parent=87 // pred_fallthru
          _
        // Predicated region
        $region121: #{rtgn_gat_forward.1} parent=87 // pred_check
          %p722 = pneg %p322
        $region122: #{rtgn_gat_forward.1} parent=87 // pred_check_branch
          %724 = sbr.rel (%p722) target = $region124
        $region123: #{rtgn_gat_forward.1} parent=87 // pred_region
          %726 = dma.done [#allocation15], 16
        $region124: #{rtgn_gat_forward.1} parent=87 // pred_fallthru
          _
        // Predicated region
        $region125: #{rtgn_gat_forward.1} parent=87 // pred_check
          %p727 = pneg %p343
        $region126: #{rtgn_gat_forward.1} parent=87 // pred_check_branch
          %729 = sbr.rel (%p727) target = $region128
        $region127: #{rtgn_gat_forward.1} parent=87 // pred_region
          %731 = dma.done [#allocation18], 1024
        $region128: #{rtgn_gat_forward.1} parent=87 // pred_fallthru
          _
        // Predicated region
        $region129: #{rtgn_gat_forward.1} parent=87 // pred_check
          %p732 = pneg %p364
        $region130: #{rtgn_gat_forward.1} parent=87 // pred_check_branch
          %734 = sbr.rel (%p732) target = $region132
        $region131: #{rtgn_gat_forward.1} parent=87 // pred_region
          %736 = dma.done [#allocation18], 16
        $region132: #{rtgn_gat_forward.1} parent=87 // pred_fallthru
          _
        // Predicated region
        $region133: #{rtgn_gat_forward.1} parent=87 // pred_check
          %p737 = pneg %p385
        $region134: #{rtgn_gat_forward.1} parent=87 // pred_check_branch
          %739 = sbr.rel (%p737) target = $region136
        $region135: #{rtgn_gat_forward.1} parent=87 // pred_region
          %741 = dma.done [#allocation21], 1024
        $region136: #{rtgn_gat_forward.1} parent=87 // pred_fallthru
          _
        // Predicated region
        $region137: #{rtgn_gat_forward.1} parent=87 // pred_check
          %p742 = pneg %p406
        $region138: #{rtgn_gat_forward.1} parent=87 // pred_check_branch
          %744 = sbr.rel (%p742) target = $region140
        $region139: #{rtgn_gat_forward.1} parent=87 // pred_region
          %746 = dma.done [#allocation21], 16
        $region140: #{rtgn_gat_forward.1} parent=87 // pred_fallthru
          _
        %s747 = sand.u32 %s47, 1
        %s748 = scalar_lea.sflag [#allocation4], %s747
        %s749 = sand.u32 %s47, 1
        %s750 = smul.addr %s749, 128
        %s751 = scalar_lea.vmem [#allocation3], %s750
        %p752 = pneg %p60
        %p753 = pneg %p57
        %s754 = sand.u32 %s39, 1
        %s755 = scalar_lea.sflag [#allocation6], %s754
        %s756 = sand.u32 %s73, 1
        %s757 = smul.addr %s756, 128
        %s758 = scalar_lea.vmem [#allocation5], %s757
        %p759 = pneg %p86
        %p760 = pneg %p83
        %s761 = sand.u32 %s39, 1
        %s762 = scalar_lea.sflag [#allocation6], %s761
        %s763 = sand.u32 %s99, 1
        %s764 = smul.addr %s763, 8
        %s765 = scalar_lea.vmem [#allocation7], %s764
        %p766 = pneg %p112
        %p767 = pneg %p109
        %p768 = pneg %p133
        %p769 = pneg %p130
        %p770 = pneg %p154
        %p771 = pneg %p151
        %p772 = pneg %p175
        %p773 = pneg %p172
        %p774 = pneg %p196
        %p775 = pneg %p193
        %p776 = pneg %p217
        %p777 = pneg %p214
        %p778 = pneg %p238
        %p779 = pneg %p235
        %p780 = pneg %p259
        %p781 = pneg %p256
        %p782 = pneg %p280
        %p783 = pneg %p277
        %p784 = pneg %p301
        %p785 = pneg %p298
        %p786 = pneg %p322
        %p787 = pneg %p319
        %p788 = pneg %p343
        %p789 = pneg %p340
        %p790 = pneg %p364
        %p791 = pneg %p361
        %p792 = pneg %p385
        %p793 = pneg %p382
        %p794 = pneg %p406
        %p795 = pneg %p403
        %p796 = pneg %p432
        %p797 = pneg %p429
        %p798 = scmp.lt.s32.totalorder %s39, 1
        %s799 = scalar_select %p798, %s39, 1
        %s800 = smul.addr %s799, 8
        %s801 = scalar_lea.vmem %s17, %s800
        %p802 = scmp.lt.s32.totalorder %s39, 1
        %s803 = scalar_select %p802, %s39, 1
        %s804 = smul.addr %s803, 8
        %s805 = scalar_lea.vmem %s17, %s804
        %v807 = vld [vmem:[%s671] sm:$0xff]
        %v808 = vld [vmem:[%s671 + $0x8] sm:$0xff]
        %v809 = vld [vmem:[%s671 + $0x10] sm:$0xff]
        %v810 = vld [vmem:[%s671 + $0x18] sm:$0xff]
        %v811 = vld [vmem:[%s671 + $0x20] sm:$0xff]
        %v812 = vld [vmem:[%s671 + $0x28] sm:$0xff]
        %v813 = vld [vmem:[%s671 + $0x30] sm:$0xff]
        %v814 = vld [vmem:[%s671 + $0x38] sm:$0xff]
        %v815 = vld [vmem:[%s671 + $0x40] sm:$0xff]
        %v816 = vld [vmem:[%s671 + $0x48] sm:$0xff]
        %v817 = vld [vmem:[%s671 + $0x50] sm:$0xff]
        %v818 = vld [vmem:[%s671 + $0x58] sm:$0xff]
        %v819 = vld [vmem:[%s671 + $0x60] sm:$0xff]
        %v820 = vld [vmem:[%s671 + $0x68] sm:$0xff]
        %v821 = vld [vmem:[%s671 + $0x70] sm:$0xff]
        %v822 = vld [vmem:[%s671 + $0x78] sm:$0xff]
        %v823 = vpack.c.bf16 %v808, %v807
        %v824 = vpack.c.bf16 %v810, %v809
        %v825 = vpack.c.bf16 %v812, %v811
        %v826 = vpack.c.bf16 %v814, %v813
        %v827 = vpack.c.bf16 %v816, %v815
        %v828 = vpack.c.bf16 %v818, %v817
        %v829 = vpack.c.bf16 %v820, %v819
        %v830 = vpack.c.bf16 %v822, %v821
        %v831 = vld [vmem:[#allocation8] sm:$0xf]
        %v832 = vld [vmem:[#allocation8 + $0x4] sm:$0xf]
        %v833 = vld [vmem:[#allocation8 + $0x8] sm:$0xf]
        %v834 = vld [vmem:[#allocation8 + $0xc] sm:$0xf]
        %v835 = vld [vmem:[#allocation8 + $0x10] sm:$0xf]
        %v836 = vld [vmem:[#allocation8 + $0x14] sm:$0xf]
        %v837 = vld [vmem:[#allocation8 + $0x18] sm:$0xf]
        %v838 = vld [vmem:[#allocation8 + $0x1c] sm:$0xf]
        %v839 = vld [vmem:[#allocation8 + $0x20] sm:$0xf]
        %v840 = vld [vmem:[#allocation8 + $0x24] sm:$0xf]
        %v841 = vld [vmem:[#allocation8 + $0x28] sm:$0xf]
        %v842 = vld [vmem:[#allocation8 + $0x2c] sm:$0xf]
        %v843 = vld [vmem:[#allocation8 + $0x30] sm:$0xf]
        %v844 = vld [vmem:[#allocation8 + $0x34] sm:$0xf]
        %v845 = vld [vmem:[#allocation8 + $0x38] sm:$0xf]
        %v846 = vld [vmem:[#allocation8 + $0x3c] sm:$0xf]
        %v847 = vld [vmem:[%s4] sm:$0x1]
        %v849 = vperm.slane %v847, 0
        %v867 = vunpack.c.l.b16 %v831
        %v868 = vunpack.c.l.b16 %v832
        %v869 = vunpack.c.l.b16 %v833
        %v870 = vunpack.c.l.b16 %v834
        %v871 = vunpack.c.l.b16 %v835
        %v872 = vunpack.c.l.b16 %v836
        %v873 = vunpack.c.l.b16 %v837
        %v874 = vunpack.c.l.b16 %v838
        %v875 = vunpack.c.l.b16 %v839
        %v876 = vunpack.c.l.b16 %v840
        %v877 = vunpack.c.l.b16 %v841
        %v878 = vunpack.c.l.b16 %v842
        %v879 = vunpack.c.l.b16 %v843
        %v880 = vunpack.c.l.b16 %v844
        %v881 = vunpack.c.l.b16 %v845
        %v882 = vunpack.c.l.b16 %v846
        %v883 = vpack.c.b16 %v868, %v867
        %v884 = vpack.c.b16 %v870, %v869
        %v885 = vpack.c.b16 %v872, %v871
        %v886 = vpack.c.b16 %v874, %v873
        %v887 = vpack.c.b16 %v876, %v875
        %v888 = vpack.c.b16 %v878, %v877
        %v889 = vpack.c.b16 %v880, %v879
        %v890 = vpack.c.b16 %v882, %v881
        %899 = vmatpush.bf16.msra.mxu0 %v890
        %900 = vmatpush.bf16.msra.mxu0 %v889
        %901 = vmatpush.bf16.msra.mxu0 %v888
        %902 = vmatpush.bf16.msra.mxu0 %v887
        %903 = vmatpush.bf16.msra.mxu0 %v886
        %904 = vmatpush.bf16.msra.mxu0 %v885
        %905 = vmatpush.bf16.msra.mxu0 %v884
        %906 = vmatpush.bf16.msra.mxu0 %v883
        %907 = vmatmul.bf16.gmra.mxu0 %v823
        %v908 = vpop.f32.mrf.mxu0
        %v909 = vadd.f32 %v849, %v908
        %v910 = vpop.f32.mrf.mxu0
        %v911 = vadd.f32 %v849, %v910
        %912 = vmatmul.bf16.gmra.mxu0 %v824
        %v913 = vpop.f32.mrf.mxu0
        %v914 = vadd.f32 %v849, %v913
        %v915 = vpop.f32.mrf.mxu0
        %v916 = vadd.f32 %v849, %v915
        %917 = vmatmul.bf16.gmra.mxu0 %v825
        %v918 = vpop.f32.mrf.mxu0
        %v919 = vadd.f32 %v849, %v918
        %v920 = vpop.f32.mrf.mxu0
        %v921 = vadd.f32 %v849, %v920
        %922 = vmatmul.bf16.gmra.mxu0 %v826
        %v923 = vpop.f32.mrf.mxu0
        %v924 = vadd.f32 %v849, %v923
        %v925 = vpop.f32.mrf.mxu0
        %v926 = vadd.f32 %v849, %v925
        %927 = vmatmul.bf16.gmra.mxu0 %v827
        %v928 = vpop.f32.mrf.mxu0
        %v929 = vadd.f32 %v849, %v928
        %v930 = vpop.f32.mrf.mxu0
        %v931 = vadd.f32 %v849, %v930
        %932 = vmatmul.bf16.gmra.mxu0 %v828
        %v933 = vpop.f32.mrf.mxu0
        %v934 = vadd.f32 %v849, %v933
        %v935 = vpop.f32.mrf.mxu0
        %v936 = vadd.f32 %v849, %v935
        %937 = vmatmul.bf16.gmra.mxu0 %v829
        %v938 = vpop.f32.mrf.mxu0
        %v939 = vadd.f32 %v849, %v938
        %v940 = vpop.f32.mrf.mxu0
        %v941 = vadd.f32 %v849, %v940
        %942 = vmatmul.bf16.gmra.mxu0 %v830
        %v943 = vpop.f32.mrf.mxu0
        %v944 = vadd.f32 %v849, %v943
        %v945 = vpop.f32.mrf.mxu0
        %v946 = vadd.f32 %v849, %v945
        %947 = vdwg.mxu0
        %v948 = vmax.f32 %v909, 0.0
        %v949 = vmax.f32 %v911, 0.0
        %v950 = vmax.f32 %v914, 0.0
        %v951 = vmax.f32 %v916, 0.0
        %v952 = vmax.f32 %v919, 0.0
        %v953 = vmax.f32 %v921, 0.0
        %v954 = vmax.f32 %v924, 0.0
        %v955 = vmax.f32 %v926, 0.0
        %v956 = vmax.f32 %v929, 0.0
        %v957 = vmax.f32 %v931, 0.0
        %v958 = vmax.f32 %v934, 0.0
        %v959 = vmax.f32 %v936, 0.0
        %v960 = vmax.f32 %v939, 0.0
        %v961 = vmax.f32 %v941, 0.0
        %v962 = vmax.f32 %v944, 0.0
        %v963 = vmax.f32 %v946, 0.0
        %v964 = vld [vmem:[%s681] sm:$0xff]
        %v965 = vld [vmem:[%s681 + $0x8] sm:$0xff]
        %v966 = vld [vmem:[%s681 + $0x10] sm:$0xff]
        %v967 = vld [vmem:[%s681 + $0x18] sm:$0xff]
        %v968 = vld [vmem:[%s681 + $0x20] sm:$0xff]
        %v969 = vld [vmem:[%s681 + $0x28] sm:$0xff]
        %v970 = vld [vmem:[%s681 + $0x30] sm:$0xff]
        %v971 = vld [vmem:[%s681 + $0x38] sm:$0xff]
        %v972 = vld [vmem:[%s681 + $0x40] sm:$0xff]
        %v973 = vld [vmem:[%s681 + $0x48] sm:$0xff]
        %v974 = vld [vmem:[%s681 + $0x50] sm:$0xff]
        %v975 = vld [vmem:[%s681 + $0x58] sm:$0xff]
        %v976 = vld [vmem:[%s681 + $0x60] sm:$0xff]
        %v977 = vld [vmem:[%s681 + $0x68] sm:$0xff]
        %v978 = vld [vmem:[%s681 + $0x70] sm:$0xff]
        %v979 = vld [vmem:[%s681 + $0x78] sm:$0xff]
        %vm980 = vcmp.gt.f32.partialorder %v964, 0.0
        %vm981 = vcmp.gt.f32.partialorder %v965, 0.0
        %vm982 = vcmp.gt.f32.partialorder %v966, 0.0
        %vm983 = vcmp.gt.f32.partialorder %v967, 0.0
        %vm984 = vcmp.gt.f32.partialorder %v968, 0.0
        %vm985 = vcmp.gt.f32.partialorder %v969, 0.0
        %vm986 = vcmp.gt.f32.partialorder %v970, 0.0
        %vm987 = vcmp.gt.f32.partialorder %v971, 0.0
        %vm988 = vcmp.gt.f32.partialorder %v972, 0.0
        %vm989 = vcmp.gt.f32.partialorder %v973, 0.0
        %vm990 = vcmp.gt.f32.partialorder %v974, 0.0
        %vm991 = vcmp.gt.f32.partialorder %v975, 0.0
        %vm992 = vcmp.gt.f32.partialorder %v976, 0.0
        %vm993 = vcmp.gt.f32.partialorder %v977, 0.0
        %vm994 = vcmp.gt.f32.partialorder %v978, 0.0
        %vm995 = vcmp.gt.f32.partialorder %v979, 0.0
        %v996 = vsel %vm980, 0.0, -1e+30
        %v997 = vsel %vm981, 0.0, -1e+30
        %v998 = vsel %vm982, 0.0, -1e+30
        %v999 = vsel %vm983, 0.0, -1e+30
        %v1000 = vsel %vm984, 0.0, -1e+30
        %v1001 = vsel %vm985, 0.0, -1e+30
        %v1002 = vsel %vm986, 0.0, -1e+30
        %v1003 = vsel %vm987, 0.0, -1e+30
        %v1004 = vsel %vm988, 0.0, -1e+30
        %v1005 = vsel %vm989, 0.0, -1e+30
        %v1006 = vsel %vm990, 0.0, -1e+30
        %v1007 = vsel %vm991, 0.0, -1e+30
        %v1008 = vsel %vm992, 0.0, -1e+30
        %v1009 = vsel %vm993, 0.0, -1e+30
        %v1010 = vsel %vm994, 0.0, -1e+30
        %v1011 = vsel %vm995, 0.0, -1e+30
        %v1012 = vpack.c.bf16 %v949, %v948
        %v1013 = vpack.c.bf16 %v951, %v950
        %v1014 = vpack.c.bf16 %v953, %v952
        %v1015 = vpack.c.bf16 %v955, %v954
        %v1016 = vpack.c.bf16 %v957, %v956
        %v1017 = vpack.c.bf16 %v959, %v958
        %v1018 = vpack.c.bf16 %v961, %v960
        %v1019 = vpack.c.bf16 %v963, %v962
        %v1020 = vld [vmem:[#allocation10] sm:$0xf]
        %v1021 = vld [vmem:[#allocation10 + $0x4] sm:$0xf]
        %v1022 = vld [vmem:[#allocation10 + $0x8] sm:$0xf]
        %v1023 = vld [vmem:[#allocation10 + $0xc] sm:$0xf]
        %v1024 = vld [vmem:[#allocation10 + $0x10] sm:$0xf]
        %v1025 = vld [vmem:[#allocation10 + $0x14] sm:$0xf]
        %v1026 = vld [vmem:[#allocation10 + $0x18] sm:$0xf]
        %v1027 = vld [vmem:[#allocation10 + $0x1c] sm:$0xf]
        %v1028 = vld [vmem:[#allocation10 + $0x20] sm:$0xf]
        %v1029 = vld [vmem:[#allocation10 + $0x24] sm:$0xf]
        %v1030 = vld [vmem:[#allocation10 + $0x28] sm:$0xf]
        %v1031 = vld [vmem:[#allocation10 + $0x2c] sm:$0xf]
        %v1032 = vld [vmem:[#allocation10 + $0x30] sm:$0xf]
        %v1033 = vld [vmem:[#allocation10 + $0x34] sm:$0xf]
        %v1034 = vld [vmem:[#allocation10 + $0x38] sm:$0xf]
        %v1035 = vld [vmem:[#allocation10 + $0x3c] sm:$0xf]
        %v1052 = vunpack.c.l.b16 %v1020
        %v1053 = vunpack.c.l.b16 %v1021
        %v1054 = vunpack.c.l.b16 %v1022
        %v1055 = vunpack.c.l.b16 %v1023
        %v1056 = vunpack.c.l.b16 %v1024
        %v1057 = vunpack.c.l.b16 %v1025
        %v1058 = vunpack.c.l.b16 %v1026
        %v1059 = vunpack.c.l.b16 %v1027
        %v1060 = vunpack.c.l.b16 %v1028
        %v1061 = vunpack.c.l.b16 %v1029
        %v1062 = vunpack.c.l.b16 %v1030
        %v1063 = vunpack.c.l.b16 %v1031
        %v1064 = vunpack.c.l.b16 %v1032
        %v1065 = vunpack.c.l.b16 %v1033
        %v1066 = vunpack.c.l.b16 %v1034
        %v1067 = vunpack.c.l.b16 %v1035
        %v1068 = vpack.c.b16 %v1053, %v1052
        %v1069 = vpack.c.b16 %v1055, %v1054
        %v1070 = vpack.c.b16 %v1057, %v1056
        %v1071 = vpack.c.b16 %v1059, %v1058
        %v1072 = vpack.c.b16 %v1061, %v1060
        %v1073 = vpack.c.b16 %v1063, %v1062
        %v1074 = vpack.c.b16 %v1065, %v1064
        %v1075 = vpack.c.b16 %v1067, %v1066
        %1084 = vmatpush.bf16.msra.mxu0 %v1075
        %1085 = vmatpush.bf16.msra.mxu0 %v1074
        %1086 = vmatpush.bf16.msra.mxu0 %v1073
        %1087 = vmatpush.bf16.msra.mxu0 %v1072
        %1088 = vmatpush.bf16.msra.mxu0 %v1071
        %1089 = vmatpush.bf16.msra.mxu0 %v1070
        %1090 = vmatpush.bf16.msra.mxu0 %v1069
        %1091 = vmatpush.bf16.msra.mxu0 %v1068
        %1092 = vmatmul.bf16.gmra.mxu0 %v1012
        %v1093 = vpop.f32.mrf.mxu0
        %v1094 = vadd.f32 0.0, %v1093
        %v1095 = vpop.f32.mrf.mxu0
        %v1096 = vadd.f32 0.0, %v1095
        %1097 = vmatmul.bf16.gmra.mxu0 %v1013
        %v1098 = vpop.f32.mrf.mxu0
        %v1099 = vadd.f32 0.0, %v1098
        %v1100 = vpop.f32.mrf.mxu0
        %v1101 = vadd.f32 0.0, %v1100
        %1102 = vmatmul.bf16.gmra.mxu0 %v1014
        %v1103 = vpop.f32.mrf.mxu0
        %v1104 = vadd.f32 0.0, %v1103
        %v1105 = vpop.f32.mrf.mxu0
        %v1106 = vadd.f32 0.0, %v1105
        %1107 = vmatmul.bf16.gmra.mxu0 %v1015
        %v1108 = vpop.f32.mrf.mxu0
        %v1109 = vadd.f32 0.0, %v1108
        %v1110 = vpop.f32.mrf.mxu0
        %v1111 = vadd.f32 0.0, %v1110
        %1112 = vmatmul.bf16.gmra.mxu0 %v1016
        %v1113 = vpop.f32.mrf.mxu0
        %v1114 = vadd.f32 0.0, %v1113
        %v1115 = vpop.f32.mrf.mxu0
        %v1116 = vadd.f32 0.0, %v1115
        %1117 = vmatmul.bf16.gmra.mxu0 %v1017
        %v1118 = vpop.f32.mrf.mxu0
        %v1119 = vadd.f32 0.0, %v1118
        %v1120 = vpop.f32.mrf.mxu0
        %v1121 = vadd.f32 0.0, %v1120
        %1122 = vmatmul.bf16.gmra.mxu0 %v1018
        %v1123 = vpop.f32.mrf.mxu0
        %v1124 = vadd.f32 0.0, %v1123
        %v1125 = vpop.f32.mrf.mxu0
        %v1126 = vadd.f32 0.0, %v1125
        %1127 = vmatmul.bf16.gmra.mxu0 %v1019
        %v1128 = vpop.f32.mrf.mxu0
        %v1129 = vadd.f32 0.0, %v1128
        %v1130 = vpop.f32.mrf.mxu0
        %v1131 = vadd.f32 0.0, %v1130
        %1132 = vdwg.mxu0
        %v1133 = vpack.c.bf16 %v1096, %v1094
        %v1134 = vpack.c.bf16 %v1101, %v1099
        %v1135 = vpack.c.bf16 %v1106, %v1104
        %v1136 = vpack.c.bf16 %v1111, %v1109
        %v1137 = vpack.c.bf16 %v1116, %v1114
        %v1138 = vpack.c.bf16 %v1121, %v1119
        %v1139 = vpack.c.bf16 %v1126, %v1124
        %v1140 = vpack.c.bf16 %v1131, %v1129
        %v1141 = vld [vmem:[#allocation11] sm:$0x1]
        %v1143 = vperm.slane %v1141, 0
        %v1145 = vmul.f32 %v1094, %v1143
        %v1146 = vmul.f32 %v1096, %v1143
        %v1147 = vmul.f32 %v1099, %v1143
        %v1148 = vmul.f32 %v1101, %v1143
        %v1149 = vmul.f32 %v1104, %v1143
        %v1150 = vmul.f32 %v1106, %v1143
        %v1151 = vmul.f32 %v1109, %v1143
        %v1152 = vmul.f32 %v1111, %v1143
        %v1153 = vmul.f32 %v1114, %v1143
        %v1154 = vmul.f32 %v1116, %v1143
        %v1155 = vmul.f32 %v1119, %v1143
        %v1156 = vmul.f32 %v1121, %v1143
        %v1157 = vmul.f32 %v1124, %v1143
        %v1158 = vmul.f32 %v1126, %v1143
        %v1159 = vmul.f32 %v1129, %v1143
        %v1160 = vmul.f32 %v1131, %v1143
        %1161 = vadd.xlane.f32.xlu0 %v1145
        %v1162 = vpop.xlane.xlu0 %1161
        %1163 = vadd.xlane.f32.xlu0 %v1146
        %v1164 = vpop.xlane.xlu0 %1163
        %1165 = vadd.xlane.f32.xlu0 %v1147
        %v1166 = vpop.xlane.xlu0 %1165
        %1167 = vadd.xlane.f32.xlu0 %v1148
        %v1168 = vpop.xlane.xlu0 %1167
        %1169 = vadd.xlane.f32.xlu0 %v1149
        %v1170 = vpop.xlane.xlu0 %1169
        %1171 = vadd.xlane.f32.xlu0 %v1150
        %v1172 = vpop.xlane.xlu0 %1171
        %1173 = vadd.xlane.f32.xlu0 %v1151
        %v1174 = vpop.xlane.xlu0 %1173
        %1175 = vadd.xlane.f32.xlu0 %v1152
        %v1176 = vpop.xlane.xlu0 %1175
        %1177 = vadd.xlane.f32.xlu0 %v1153
        %v1178 = vpop.xlane.xlu0 %1177
        %1179 = vadd.xlane.f32.xlu0 %v1154
        %v1180 = vpop.xlane.xlu0 %1179
        %1181 = vadd.xlane.f32.xlu0 %v1155
        %v1182 = vpop.xlane.xlu0 %1181
        %1183 = vadd.xlane.f32.xlu0 %v1156
        %v1184 = vpop.xlane.xlu0 %1183
        %1185 = vadd.xlane.f32.xlu0 %v1157
        %v1186 = vpop.xlane.xlu0 %1185
        %1187 = vadd.xlane.f32.xlu0 %v1158
        %v1188 = vpop.xlane.xlu0 %1187
        %1189 = vadd.xlane.f32.xlu0 %v1159
        %v1190 = vpop.xlane.xlu0 %1189
        %1191 = vadd.xlane.f32.xlu0 %v1160
        %v1192 = vpop.xlane.xlu0 %1191
        %v1193 = vld [vmem:[%s6] sm:$0x1]
        %1194 = vmatpush.bf16.xpose.msra.mxu0 %v1140
        %1195 = vmatpush.bf16.xpose.msra.mxu0 %v1139
        %1196 = vmatpush.bf16.xpose.msra.mxu0 %v1138
        %1197 = vmatpush.bf16.xpose.msra.mxu0 %v1137
        %1198 = vmatpush.bf16.xpose.msra.mxu0 %v1136
        %1199 = vmatpush.bf16.xpose.msra.mxu0 %v1135
        %1200 = vmatpush.bf16.xpose.msra.mxu0 %v1134
        %1201 = vmatpush.bf16.xpose.msra.mxu0 %v1133
        %1202 = vmatmul.bf16.gmra.mxu0 %v1193
        %v1203 = vpop.f32.mrf.mxu0
        %v1204 = vadd.f32 0.0, %v1203
        %v1205 = vpop.f32.mrf.mxu0
        %1206 = vdwg.mxu0
        %v1207 = vperm.slane %v1204, 0
        %v1208 = vadd.f32 %v1162, %v1207
        %v1209 = vadd.f32 %v1164, %v1207
        %v1210 = vadd.f32 %v1166, %v1207
        %v1211 = vadd.f32 %v1168, %v1207
        %v1212 = vadd.f32 %v1170, %v1207
        %v1213 = vadd.f32 %v1172, %v1207
        %v1214 = vadd.f32 %v1174, %v1207
        %v1215 = vadd.f32 %v1176, %v1207
        %v1216 = vadd.f32 %v1178, %v1207
        %v1217 = vadd.f32 %v1180, %v1207
        %v1218 = vadd.f32 %v1182, %v1207
        %v1219 = vadd.f32 %v1184, %v1207
        %v1220 = vadd.f32 %v1186, %v1207
        %v1221 = vadd.f32 %v1188, %v1207
        %v1222 = vadd.f32 %v1190, %v1207
        %v1223 = vadd.f32 %v1192, %v1207
        %v1224 = vmul.f32 %v1208, 0.2
        %v1225 = vmul.f32 %v1209, 0.2
        %v1226 = vmul.f32 %v1210, 0.2
        %v1227 = vmul.f32 %v1211, 0.2
        %v1228 = vmul.f32 %v1212, 0.2
        %v1229 = vmul.f32 %v1213, 0.2
        %v1230 = vmul.f32 %v1214, 0.2
        %v1231 = vmul.f32 %v1215, 0.2
        %v1232 = vmul.f32 %v1216, 0.2
        %v1233 = vmul.f32 %v1217, 0.2
        %v1234 = vmul.f32 %v1218, 0.2
        %v1235 = vmul.f32 %v1219, 0.2
        %v1236 = vmul.f32 %v1220, 0.2
        %v1237 = vmul.f32 %v1221, 0.2
        %v1238 = vmul.f32 %v1222, 0.2
        %v1239 = vmul.f32 %v1223, 0.2
        %v1240 = vmax.f32 %v1208, %v1224
        %v1241 = vmax.f32 %v1209, %v1225
        %v1242 = vmax.f32 %v1210, %v1226
        %v1243 = vmax.f32 %v1211, %v1227
        %v1244 = vmax.f32 %v1212, %v1228
        %v1245 = vmax.f32 %v1213, %v1229
        %v1246 = vmax.f32 %v1214, %v1230
        %v1247 = vmax.f32 %v1215, %v1231
        %v1248 = vmax.f32 %v1216, %v1232
        %v1249 = vmax.f32 %v1217, %v1233
        %v1250 = vmax.f32 %v1218, %v1234
        %v1251 = vmax.f32 %v1219, %v1235
        %v1252 = vmax.f32 %v1220, %v1236
        %v1253 = vmax.f32 %v1221, %v1237
        %v1254 = vmax.f32 %v1222, %v1238
        %v1255 = vmax.f32 %v1223, %v1239
        %v1256 = vadd.f32 %v1240, %v996
        %v1257 = vadd.f32 %v1241, %v997
        %v1258 = vadd.f32 %v1242, %v998
        %v1259 = vadd.f32 %v1243, %v999
        %v1260 = vadd.f32 %v1244, %v1000
        %v1261 = vadd.f32 %v1245, %v1001
        %v1262 = vadd.f32 %v1246, %v1002
        %v1263 = vadd.f32 %v1247, %v1003
        %v1264 = vadd.f32 %v1248, %v1004
        %v1265 = vadd.f32 %v1249, %v1005
        %v1266 = vadd.f32 %v1250, %v1006
        %v1267 = vadd.f32 %v1251, %v1007
        %v1268 = vadd.f32 %v1252, %v1008
        %v1269 = vadd.f32 %v1253, %v1009
        %v1270 = vadd.f32 %v1254, %v1010
        %v1271 = vadd.f32 %v1255, %v1011
        %1272 = vmax.xlane.f32.xlu0 %v1256
        %v1273 = vpop.xlane.xlu0 %1272
        %1274 = vmax.xlane.f32.xlu0 %v1257
        %v1275 = vpop.xlane.xlu0 %1274
        %1276 = vmax.xlane.f32.xlu0 %v1258
        %v1277 = vpop.xlane.xlu0 %1276
        %1278 = vmax.xlane.f32.xlu0 %v1259
        %v1279 = vpop.xlane.xlu0 %1278
        %1280 = vmax.xlane.f32.xlu0 %v1260
        %v1281 = vpop.xlane.xlu0 %1280
        %1282 = vmax.xlane.f32.xlu0 %v1261
        %v1283 = vpop.xlane.xlu0 %1282
        %1284 = vmax.xlane.f32.xlu0 %v1262
        %v1285 = vpop.xlane.xlu0 %1284
        %1286 = vmax.xlane.f32.xlu0 %v1263
        %v1287 = vpop.xlane.xlu0 %1286
        %1288 = vmax.xlane.f32.xlu0 %v1264
        %v1289 = vpop.xlane.xlu0 %1288
        %1290 = vmax.xlane.f32.xlu0 %v1265
        %v1291 = vpop.xlane.xlu0 %1290
        %1292 = vmax.xlane.f32.xlu0 %v1266
        %v1293 = vpop.xlane.xlu0 %1292
        %1294 = vmax.xlane.f32.xlu0 %v1267
        %v1295 = vpop.xlane.xlu0 %1294
        %1296 = vmax.xlane.f32.xlu0 %v1268
        %v1297 = vpop.xlane.xlu0 %1296
        %1298 = vmax.xlane.f32.xlu0 %v1269
        %v1299 = vpop.xlane.xlu0 %1298
        %1300 = vmax.xlane.f32.xlu0 %v1270
        %v1301 = vpop.xlane.xlu0 %1300
        %1302 = vmax.xlane.f32.xlu0 %v1271
        %v1303 = vpop.xlane.xlu0 %1302
        %v1304 = vsub.f32 %v1256, %v1273
        %v1305 = vsub.f32 %v1257, %v1275
        %v1306 = vsub.f32 %v1258, %v1277
        %v1307 = vsub.f32 %v1259, %v1279
        %v1308 = vsub.f32 %v1260, %v1281
        %v1309 = vsub.f32 %v1261, %v1283
        %v1310 = vsub.f32 %v1262, %v1285
        %v1311 = vsub.f32 %v1263, %v1287
        %v1312 = vsub.f32 %v1264, %v1289
        %v1313 = vsub.f32 %v1265, %v1291
        %v1314 = vsub.f32 %v1266, %v1293
        %v1315 = vsub.f32 %v1267, %v1295
        %v1316 = vsub.f32 %v1268, %v1297
        %v1317 = vsub.f32 %v1269, %v1299
        %v1318 = vsub.f32 %v1270, %v1301
        %v1319 = vsub.f32 %v1271, %v1303
        %v1320 = vmul.f32 %v1304, 1.442695
        %v1321 = vpow.pop %v1320
        %v1322 = vmul.f32 %v1305, 1.442695
        %v1323 = vpow.pop %v1322
        %v1324 = vmul.f32 %v1306, 1.442695
        %v1325 = vpow.pop %v1324
        %v1326 = vmul.f32 %v1307, 1.442695
        %v1327 = vpow.pop %v1326
        %v1328 = vmul.f32 %v1308, 1.442695
        %v1329 = vpow.pop %v1328
        %v1330 = vmul.f32 %v1309, 1.442695
        %v1331 = vpow.pop %v1330
        %v1332 = vmul.f32 %v1310, 1.442695
        %v1333 = vpow.pop %v1332
        %v1334 = vmul.f32 %v1311, 1.442695
        %v1335 = vpow.pop %v1334
        %v1336 = vmul.f32 %v1312, 1.442695
        %v1337 = vpow.pop %v1336
        %v1338 = vmul.f32 %v1313, 1.442695
        %v1339 = vpow.pop %v1338
        %v1340 = vmul.f32 %v1314, 1.442695
        %v1341 = vpow.pop %v1340
        %v1342 = vmul.f32 %v1315, 1.442695
        %v1343 = vpow.pop %v1342
        %v1344 = vmul.f32 %v1316, 1.442695
        %v1345 = vpow.pop %v1344
        %v1346 = vmul.f32 %v1317, 1.442695
        %v1347 = vpow.pop %v1346
        %v1348 = vmul.f32 %v1318, 1.442695
        %v1349 = vpow.pop %v1348
        %v1350 = vmul.f32 %v1319, 1.442695
        %v1351 = vpow.pop %v1350
        %1352 = vadd.xlane.f32.xlu0 %v1321
        %v1353 = vpop.xlane.xlu0 %1352
        %1354 = vadd.xlane.f32.xlu0 %v1323
        %v1355 = vpop.xlane.xlu0 %1354
        %1356 = vadd.xlane.f32.xlu0 %v1325
        %v1357 = vpop.xlane.xlu0 %1356
        %1358 = vadd.xlane.f32.xlu0 %v1327
        %v1359 = vpop.xlane.xlu0 %1358
        %1360 = vadd.xlane.f32.xlu0 %v1329
        %v1361 = vpop.xlane.xlu0 %1360
        %1362 = vadd.xlane.f32.xlu0 %v1331
        %v1363 = vpop.xlane.xlu0 %1362
        %1364 = vadd.xlane.f32.xlu0 %v1333
        %v1365 = vpop.xlane.xlu0 %1364
        %1366 = vadd.xlane.f32.xlu0 %v1335
        %v1367 = vpop.xlane.xlu0 %1366
        %1368 = vadd.xlane.f32.xlu0 %v1337
        %v1369 = vpop.xlane.xlu0 %1368
        %1370 = vadd.xlane.f32.xlu0 %v1339
        %v1371 = vpop.xlane.xlu0 %1370
        %1372 = vadd.xlane.f32.xlu0 %v1341
        %v1373 = vpop.xlane.xlu0 %1372
        %1374 = vadd.xlane.f32.xlu0 %v1343
        %v1375 = vpop.xlane.xlu0 %1374
        %1376 = vadd.xlane.f32.xlu0 %v1345
        %v1377 = vpop.xlane.xlu0 %1376
        %1378 = vadd.xlane.f32.xlu0 %v1347
        %v1379 = vpop.xlane.xlu0 %1378
        %1380 = vadd.xlane.f32.xlu0 %v1349
        %v1381 = vpop.xlane.xlu0 %1380
        %1382 = vadd.xlane.f32.xlu0 %v1351
        %v1383 = vpop.xlane.xlu0 %1382
        %v1384 = vrcp.pop %v1353
        %v1385 = vrcp.pop %v1355
        %v1386 = vrcp.pop %v1357
        %v1387 = vrcp.pop %v1359
        %v1388 = vrcp.pop %v1361
        %v1389 = vrcp.pop %v1363
        %v1390 = vrcp.pop %v1365
        %v1391 = vrcp.pop %v1367
        %v1392 = vrcp.pop %v1369
        %v1393 = vrcp.pop %v1371
        %v1394 = vrcp.pop %v1373
        %v1395 = vrcp.pop %v1375
        %v1396 = vrcp.pop %v1377
        %v1397 = vrcp.pop %v1379
        %v1398 = vrcp.pop %v1381
        %v1399 = vrcp.pop %v1383
        %v1400 = vmul.f32 %v1321, %v1384
        %v1401 = vmul.f32 %v1323, %v1385
        %v1402 = vmul.f32 %v1325, %v1386
        %v1403 = vmul.f32 %v1327, %v1387
        %v1404 = vmul.f32 %v1329, %v1388
        %v1405 = vmul.f32 %v1331, %v1389
        %v1406 = vmul.f32 %v1333, %v1390
        %v1407 = vmul.f32 %v1335, %v1391
        %v1408 = vmul.f32 %v1337, %v1392
        %v1409 = vmul.f32 %v1339, %v1393
        %v1410 = vmul.f32 %v1341, %v1394
        %v1411 = vmul.f32 %v1343, %v1395
        %v1412 = vmul.f32 %v1345, %v1396
        %v1413 = vmul.f32 %v1347, %v1397
        %v1414 = vmul.f32 %v1349, %v1398
        %v1415 = vmul.f32 %v1351, %v1399
        %v1416 = vpack.c.bf16 %v1401, %v1400
        %v1417 = vpack.c.bf16 %v1403, %v1402
        %v1418 = vpack.c.bf16 %v1405, %v1404
        %v1419 = vpack.c.bf16 %v1407, %v1406
        %v1420 = vpack.c.bf16 %v1409, %v1408
        %v1421 = vpack.c.bf16 %v1411, %v1410
        %v1422 = vpack.c.bf16 %v1413, %v1412
        %v1423 = vpack.c.bf16 %v1415, %v1414
        %v1424 = vld [vmem:[%s8] sm:$0x1]
        %v1426 = vperm.slane %v1424, 0
        %1428 = vmatpush.bf16.msra.mxu0 %v1140
        %1429 = vmatpush.bf16.msra.mxu0 %v1139
        %1430 = vmatpush.bf16.msra.mxu0 %v1138
        %1431 = vmatpush.bf16.msra.mxu0 %v1137
        %1432 = vmatpush.bf16.msra.mxu0 %v1136
        %1433 = vmatpush.bf16.msra.mxu0 %v1135
        %1434 = vmatpush.bf16.msra.mxu0 %v1134
        %1435 = vmatpush.bf16.msra.mxu0 %v1133
        %1436 = vmatmul.bf16.gmra.mxu0 %v1416
        %v1437 = vpop.f32.mrf.mxu0
        %v1438 = vadd.f32 %v1426, %v1437
        %v1439 = vpop.f32.mrf.mxu0
        %v1440 = vadd.f32 %v1426, %v1439
        %1441 = vmatmul.bf16.gmra.mxu0 %v1417
        %v1442 = vpop.f32.mrf.mxu0
        %v1443 = vadd.f32 %v1426, %v1442
        %v1444 = vpop.f32.mrf.mxu0
        %v1445 = vadd.f32 %v1426, %v1444
        %1446 = vmatmul.bf16.gmra.mxu0 %v1418
        %v1447 = vpop.f32.mrf.mxu0
        %v1448 = vadd.f32 %v1426, %v1447
        %v1449 = vpop.f32.mrf.mxu0
        %v1450 = vadd.f32 %v1426, %v1449
        %1451 = vmatmul.bf16.gmra.mxu0 %v1419
        %v1452 = vpop.f32.mrf.mxu0
        %v1453 = vadd.f32 %v1426, %v1452
        %v1454 = vpop.f32.mrf.mxu0
        %v1455 = vadd.f32 %v1426, %v1454
        %1456 = vmatmul.bf16.gmra.mxu0 %v1420
        %v1457 = vpop.f32.mrf.mxu0
        %v1458 = vadd.f32 %v1426, %v1457
        %v1459 = vpop.f32.mrf.mxu0
        %v1460 = vadd.f32 %v1426, %v1459
        %1461 = vmatmul.bf16.gmra.mxu0 %v1421
        %v1462 = vpop.f32.mrf.mxu0
        %v1463 = vadd.f32 %v1426, %v1462
        %v1464 = vpop.f32.mrf.mxu0
        %v1465 = vadd.f32 %v1426, %v1464
        %1466 = vmatmul.bf16.gmra.mxu0 %v1422
        %v1467 = vpop.f32.mrf.mxu0
        %v1468 = vadd.f32 %v1426, %v1467
        %v1469 = vpop.f32.mrf.mxu0
        %v1470 = vadd.f32 %v1426, %v1469
        %1471 = vmatmul.bf16.gmra.mxu0 %v1423
        %v1472 = vpop.f32.mrf.mxu0
        %v1473 = vadd.f32 %v1426, %v1472
        %v1474 = vpop.f32.mrf.mxu0
        %v1475 = vadd.f32 %v1426, %v1474
        %1476 = vdwg.mxu0
        %v1477 = vmax.f32 %v1438, 0.0
        %v1478 = vmax.f32 %v1440, 0.0
        %v1479 = vmax.f32 %v1443, 0.0
        %v1480 = vmax.f32 %v1445, 0.0
        %v1481 = vmax.f32 %v1448, 0.0
        %v1482 = vmax.f32 %v1450, 0.0
        %v1483 = vmax.f32 %v1453, 0.0
        %v1484 = vmax.f32 %v1455, 0.0
        %v1485 = vmax.f32 %v1458, 0.0
        %v1486 = vmax.f32 %v1460, 0.0
        %v1487 = vmax.f32 %v1463, 0.0
        %v1488 = vmax.f32 %v1465, 0.0
        %v1489 = vmax.f32 %v1468, 0.0
        %v1490 = vmax.f32 %v1470, 0.0
        %v1491 = vmax.f32 %v1473, 0.0
        %v1492 = vmax.f32 %v1475, 0.0
        %v1493 = vpack.c.bf16 %v1478, %v1477
        %v1494 = vpack.c.bf16 %v1480, %v1479
        %v1495 = vpack.c.bf16 %v1482, %v1481
        %v1496 = vpack.c.bf16 %v1484, %v1483
        %v1497 = vpack.c.bf16 %v1486, %v1485
        %v1498 = vpack.c.bf16 %v1488, %v1487
        %v1499 = vpack.c.bf16 %v1490, %v1489
        %v1500 = vpack.c.bf16 %v1492, %v1491
        %s1501 = scalar_lea.vmem [#allocation10], 64
        %v1502 = vld [vmem:[%s1501] sm:$0xf]
        %v1503 = vld [vmem:[%s1501 + $0x4] sm:$0xf]
        %v1504 = vld [vmem:[%s1501 + $0x8] sm:$0xf]
        %v1505 = vld [vmem:[%s1501 + $0xc] sm:$0xf]
        %v1506 = vld [vmem:[%s1501 + $0x10] sm:$0xf]
        %v1507 = vld [vmem:[%s1501 + $0x14] sm:$0xf]
        %v1508 = vld [vmem:[%s1501 + $0x18] sm:$0xf]
        %v1509 = vld [vmem:[%s1501 + $0x1c] sm:$0xf]
        %v1510 = vld [vmem:[%s1501 + $0x20] sm:$0xf]
        %v1511 = vld [vmem:[%s1501 + $0x24] sm:$0xf]
        %v1512 = vld [vmem:[%s1501 + $0x28] sm:$0xf]
        %v1513 = vld [vmem:[%s1501 + $0x2c] sm:$0xf]
        %v1514 = vld [vmem:[%s1501 + $0x30] sm:$0xf]
        %v1515 = vld [vmem:[%s1501 + $0x34] sm:$0xf]
        %v1516 = vld [vmem:[%s1501 + $0x38] sm:$0xf]
        %v1517 = vld [vmem:[%s1501 + $0x3c] sm:$0xf]
        %v1534 = vunpack.c.l.b16 %v1502
        %v1535 = vunpack.c.l.b16 %v1503
        %v1536 = vunpack.c.l.b16 %v1504
        %v1537 = vunpack.c.l.b16 %v1505
        %v1538 = vunpack.c.l.b16 %v1506
        %v1539 = vunpack.c.l.b16 %v1507
        %v1540 = vunpack.c.l.b16 %v1508
        %v1541 = vunpack.c.l.b16 %v1509
        %v1542 = vunpack.c.l.b16 %v1510
        %v1543 = vunpack.c.l.b16 %v1511
        %v1544 = vunpack.c.l.b16 %v1512
        %v1545 = vunpack.c.l.b16 %v1513
        %v1546 = vunpack.c.l.b16 %v1514
        %v1547 = vunpack.c.l.b16 %v1515
        %v1548 = vunpack.c.l.b16 %v1516
        %v1549 = vunpack.c.l.b16 %v1517
        %v1550 = vpack.c.b16 %v1535, %v1534
        %v1551 = vpack.c.b16 %v1537, %v1536
        %v1552 = vpack.c.b16 %v1539, %v1538
        %v1553 = vpack.c.b16 %v1541, %v1540
        %v1554 = vpack.c.b16 %v1543, %v1542
        %v1555 = vpack.c.b16 %v1545, %v1544
        %v1556 = vpack.c.b16 %v1547, %v1546
        %v1557 = vpack.c.b16 %v1549, %v1548
        %1566 = vmatpush.bf16.msra.mxu0 %v1557
        %1567 = vmatpush.bf16.msra.mxu0 %v1556
        %1568 = vmatpush.bf16.msra.mxu0 %v1555
        %1569 = vmatpush.bf16.msra.mxu0 %v1554
        %1570 = vmatpush.bf16.msra.mxu0 %v1553
        %1571 = vmatpush.bf16.msra.mxu0 %v1552
        %1572 = vmatpush.bf16.msra.mxu0 %v1551
        %1573 = vmatpush.bf16.msra.mxu0 %v1550
        %1574 = vmatmul.bf16.gmra.mxu0 %v1493
        %v1575 = vpop.f32.mrf.mxu0
        %v1576 = vadd.f32 0.0, %v1575
        %v1577 = vpop.f32.mrf.mxu0
        %v1578 = vadd.f32 0.0, %v1577
        %1579 = vmatmul.bf16.gmra.mxu0 %v1494
        %v1580 = vpop.f32.mrf.mxu0
        %v1581 = vadd.f32 0.0, %v1580
        %v1582 = vpop.f32.mrf.mxu0
        %v1583 = vadd.f32 0.0, %v1582
        %1584 = vmatmul.bf16.gmra.mxu0 %v1495
        %v1585 = vpop.f32.mrf.mxu0
        %v1586 = vadd.f32 0.0, %v1585
        %v1587 = vpop.f32.mrf.mxu0
        %v1588 = vadd.f32 0.0, %v1587
        %1589 = vmatmul.bf16.gmra.mxu0 %v1496
        %v1590 = vpop.f32.mrf.mxu0
        %v1591 = vadd.f32 0.0, %v1590
        %v1592 = vpop.f32.mrf.mxu0
        %v1593 = vadd.f32 0.0, %v1592
        %1594 = vmatmul.bf16.gmra.mxu0 %v1497
        %v1595 = vpop.f32.mrf.mxu0
        %v1596 = vadd.f32 0.0, %v1595
        %v1597 = vpop.f32.mrf.mxu0
        %v1598 = vadd.f32 0.0, %v1597
        %1599 = vmatmul.bf16.gmra.mxu0 %v1498
        %v1600 = vpop.f32.mrf.mxu0
        %v1601 = vadd.f32 0.0, %v1600
        %v1602 = vpop.f32.mrf.mxu0
        %v1603 = vadd.f32 0.0, %v1602
        %1604 = vmatmul.bf16.gmra.mxu0 %v1499
        %v1605 = vpop.f32.mrf.mxu0
        %v1606 = vadd.f32 0.0, %v1605
        %v1607 = vpop.f32.mrf.mxu0
        %v1608 = vadd.f32 0.0, %v1607
        %1609 = vmatmul.bf16.gmra.mxu0 %v1500
        %v1610 = vpop.f32.mrf.mxu0
        %v1611 = vadd.f32 0.0, %v1610
        %v1612 = vpop.f32.mrf.mxu0
        %v1613 = vadd.f32 0.0, %v1612
        %1614 = vdwg.mxu0
        %v1615 = vpack.c.bf16 %v1578, %v1576
        %v1616 = vpack.c.bf16 %v1583, %v1581
        %v1617 = vpack.c.bf16 %v1588, %v1586
        %v1618 = vpack.c.bf16 %v1593, %v1591
        %v1619 = vpack.c.bf16 %v1598, %v1596
        %v1620 = vpack.c.bf16 %v1603, %v1601
        %v1621 = vpack.c.bf16 %v1608, %v1606
        %v1622 = vpack.c.bf16 %v1613, %v1611
        %s1623 = scalar_lea.vmem [#allocation11], 1
        %v1624 = vld [vmem:[%s1623] sm:$0x1]
        %v1626 = vperm.slane %v1624, 0
        %v1628 = vmul.f32 %v1576, %v1626
        %v1629 = vmul.f32 %v1578, %v1626
        %v1630 = vmul.f32 %v1581, %v1626
        %v1631 = vmul.f32 %v1583, %v1626
        %v1632 = vmul.f32 %v1586, %v1626
        %v1633 = vmul.f32 %v1588, %v1626
        %v1634 = vmul.f32 %v1591, %v1626
        %v1635 = vmul.f32 %v1593, %v1626
        %v1636 = vmul.f32 %v1596, %v1626
        %v1637 = vmul.f32 %v1598, %v1626
        %v1638 = vmul.f32 %v1601, %v1626
        %v1639 = vmul.f32 %v1603, %v1626
        %v1640 = vmul.f32 %v1606, %v1626
        %v1641 = vmul.f32 %v1608, %v1626
        %v1642 = vmul.f32 %v1611, %v1626
        %v1643 = vmul.f32 %v1613, %v1626
        %1644 = vadd.xlane.f32.xlu0 %v1628
        %v1645 = vpop.xlane.xlu0 %1644
        %1646 = vadd.xlane.f32.xlu0 %v1629
        %v1647 = vpop.xlane.xlu0 %1646
        %1648 = vadd.xlane.f32.xlu0 %v1630
        %v1649 = vpop.xlane.xlu0 %1648
        %1650 = vadd.xlane.f32.xlu0 %v1631
        %v1651 = vpop.xlane.xlu0 %1650
        %1652 = vadd.xlane.f32.xlu0 %v1632
        %v1653 = vpop.xlane.xlu0 %1652
        %1654 = vadd.xlane.f32.xlu0 %v1633
        %v1655 = vpop.xlane.xlu0 %1654
        %1656 = vadd.xlane.f32.xlu0 %v1634
        %v1657 = vpop.xlane.xlu0 %1656
        %1658 = vadd.xlane.f32.xlu0 %v1635
        %v1659 = vpop.xlane.xlu0 %1658
        %1660 = vadd.xlane.f32.xlu0 %v1636
        %v1661 = vpop.xlane.xlu0 %1660
        %1662 = vadd.xlane.f32.xlu0 %v1637
        %v1663 = vpop.xlane.xlu0 %1662
        %1664 = vadd.xlane.f32.xlu0 %v1638
        %v1665 = vpop.xlane.xlu0 %1664
        %1666 = vadd.xlane.f32.xlu0 %v1639
        %v1667 = vpop.xlane.xlu0 %1666
        %1668 = vadd.xlane.f32.xlu0 %v1640
        %v1669 = vpop.xlane.xlu0 %1668
        %1670 = vadd.xlane.f32.xlu0 %v1641
        %v1671 = vpop.xlane.xlu0 %1670
        %1672 = vadd.xlane.f32.xlu0 %v1642
        %v1673 = vpop.xlane.xlu0 %1672
        %1674 = vadd.xlane.f32.xlu0 %v1643
        %v1675 = vpop.xlane.xlu0 %1674
        %s1676 = scalar_lea.vmem %s6, 1
        %v1677 = vld [vmem:[%s1676] sm:$0x1]
        %1678 = vmatpush.bf16.xpose.msra.mxu0 %v1622
        %1679 = vmatpush.bf16.xpose.msra.mxu0 %v1621
        %1680 = vmatpush.bf16.xpose.msra.mxu0 %v1620
        %1681 = vmatpush.bf16.xpose.msra.mxu0 %v1619
        %1682 = vmatpush.bf16.xpose.msra.mxu0 %v1618
        %1683 = vmatpush.bf16.xpose.msra.mxu0 %v1617
        %1684 = vmatpush.bf16.xpose.msra.mxu0 %v1616
        %1685 = vmatpush.bf16.xpose.msra.mxu0 %v1615
        %1686 = vmatmul.bf16.gmra.mxu0 %v1677
        %v1687 = vpop.f32.mrf.mxu0
        %v1688 = vadd.f32 0.0, %v1687
        %v1689 = vpop.f32.mrf.mxu0
        %1690 = vdwg.mxu0
        %v1691 = vperm.slane %v1688, 0
        %v1692 = vadd.f32 %v1645, %v1691
        %v1693 = vadd.f32 %v1647, %v1691
        %v1694 = vadd.f32 %v1649, %v1691
        %v1695 = vadd.f32 %v1651, %v1691
        %v1696 = vadd.f32 %v1653, %v1691
        %v1697 = vadd.f32 %v1655, %v1691
        %v1698 = vadd.f32 %v1657, %v1691
        %v1699 = vadd.f32 %v1659, %v1691
        %v1700 = vadd.f32 %v1661, %v1691
        %v1701 = vadd.f32 %v1663, %v1691
        %v1702 = vadd.f32 %v1665, %v1691
        %v1703 = vadd.f32 %v1667, %v1691
        %v1704 = vadd.f32 %v1669, %v1691
        %v1705 = vadd.f32 %v1671, %v1691
        %v1706 = vadd.f32 %v1673, %v1691
        %v1707 = vadd.f32 %v1675, %v1691
        %v1708 = vmul.f32 %v1692, 0.2
        %v1709 = vmul.f32 %v1693, 0.2
        %v1710 = vmul.f32 %v1694, 0.2
        %v1711 = vmul.f32 %v1695, 0.2
        %v1712 = vmul.f32 %v1696, 0.2
        %v1713 = vmul.f32 %v1697, 0.2
        %v1714 = vmul.f32 %v1698, 0.2
        %v1715 = vmul.f32 %v1699, 0.2
        %v1716 = vmul.f32 %v1700, 0.2
        %v1717 = vmul.f32 %v1701, 0.2
        %v1718 = vmul.f32 %v1702, 0.2
        %v1719 = vmul.f32 %v1703, 0.2
        %v1720 = vmul.f32 %v1704, 0.2
        %v1721 = vmul.f32 %v1705, 0.2
        %v1722 = vmul.f32 %v1706, 0.2
        %v1723 = vmul.f32 %v1707, 0.2
        %v1724 = vmax.f32 %v1692, %v1708
        %v1725 = vmax.f32 %v1693, %v1709
        %v1726 = vmax.f32 %v1694, %v1710
        %v1727 = vmax.f32 %v1695, %v1711
        %v1728 = vmax.f32 %v1696, %v1712
        %v1729 = vmax.f32 %v1697, %v1713
        %v1730 = vmax.f32 %v1698, %v1714
        %v1731 = vmax.f32 %v1699, %v1715
        %v1732 = vmax.f32 %v1700, %v1716
        %v1733 = vmax.f32 %v1701, %v1717
        %v1734 = vmax.f32 %v1702, %v1718
        %v1735 = vmax.f32 %v1703, %v1719
        %v1736 = vmax.f32 %v1704, %v1720
        %v1737 = vmax.f32 %v1705, %v1721
        %v1738 = vmax.f32 %v1706, %v1722
        %v1739 = vmax.f32 %v1707, %v1723
        %v1740 = vadd.f32 %v1724, %v996
        %v1741 = vadd.f32 %v1725, %v997
        %v1742 = vadd.f32 %v1726, %v998
        %v1743 = vadd.f32 %v1727, %v999
        %v1744 = vadd.f32 %v1728, %v1000
        %v1745 = vadd.f32 %v1729, %v1001
        %v1746 = vadd.f32 %v1730, %v1002
        %v1747 = vadd.f32 %v1731, %v1003
        %v1748 = vadd.f32 %v1732, %v1004
        %v1749 = vadd.f32 %v1733, %v1005
        %v1750 = vadd.f32 %v1734, %v1006
        %v1751 = vadd.f32 %v1735, %v1007
        %v1752 = vadd.f32 %v1736, %v1008
        %v1753 = vadd.f32 %v1737, %v1009
        %v1754 = vadd.f32 %v1738, %v1010
        %v1755 = vadd.f32 %v1739, %v1011
        %1756 = vmax.xlane.f32.xlu0 %v1740
        %v1757 = vpop.xlane.xlu0 %1756
        %1758 = vmax.xlane.f32.xlu0 %v1741
        %v1759 = vpop.xlane.xlu0 %1758
        %1760 = vmax.xlane.f32.xlu0 %v1742
        %v1761 = vpop.xlane.xlu0 %1760
        %1762 = vmax.xlane.f32.xlu0 %v1743
        %v1763 = vpop.xlane.xlu0 %1762
        %1764 = vmax.xlane.f32.xlu0 %v1744
        %v1765 = vpop.xlane.xlu0 %1764
        %1766 = vmax.xlane.f32.xlu0 %v1745
        %v1767 = vpop.xlane.xlu0 %1766
        %1768 = vmax.xlane.f32.xlu0 %v1746
        %v1769 = vpop.xlane.xlu0 %1768
        %1770 = vmax.xlane.f32.xlu0 %v1747
        %v1771 = vpop.xlane.xlu0 %1770
        %1772 = vmax.xlane.f32.xlu0 %v1748
        %v1773 = vpop.xlane.xlu0 %1772
        %1774 = vmax.xlane.f32.xlu0 %v1749
        %v1775 = vpop.xlane.xlu0 %1774
        %1776 = vmax.xlane.f32.xlu0 %v1750
        %v1777 = vpop.xlane.xlu0 %1776
        %1778 = vmax.xlane.f32.xlu0 %v1751
        %v1779 = vpop.xlane.xlu0 %1778
        %1780 = vmax.xlane.f32.xlu0 %v1752
        %v1781 = vpop.xlane.xlu0 %1780
        %1782 = vmax.xlane.f32.xlu0 %v1753
        %v1783 = vpop.xlane.xlu0 %1782
        %1784 = vmax.xlane.f32.xlu0 %v1754
        %v1785 = vpop.xlane.xlu0 %1784
        %1786 = vmax.xlane.f32.xlu0 %v1755
        %v1787 = vpop.xlane.xlu0 %1786
        %v1788 = vsub.f32 %v1740, %v1757
        %v1789 = vsub.f32 %v1741, %v1759
        %v1790 = vsub.f32 %v1742, %v1761
        %v1791 = vsub.f32 %v1743, %v1763
        %v1792 = vsub.f32 %v1744, %v1765
        %v1793 = vsub.f32 %v1745, %v1767
        %v1794 = vsub.f32 %v1746, %v1769
        %v1795 = vsub.f32 %v1747, %v1771
        %v1796 = vsub.f32 %v1748, %v1773
        %v1797 = vsub.f32 %v1749, %v1775
        %v1798 = vsub.f32 %v1750, %v1777
        %v1799 = vsub.f32 %v1751, %v1779
        %v1800 = vsub.f32 %v1752, %v1781
        %v1801 = vsub.f32 %v1753, %v1783
        %v1802 = vsub.f32 %v1754, %v1785
        %v1803 = vsub.f32 %v1755, %v1787
        %v1804 = vmul.f32 %v1788, 1.442695
        %v1805 = vpow.pop %v1804
        %v1806 = vmul.f32 %v1789, 1.442695
        %v1807 = vpow.pop %v1806
        %v1808 = vmul.f32 %v1790, 1.442695
        %v1809 = vpow.pop %v1808
        %v1810 = vmul.f32 %v1791, 1.442695
        %v1811 = vpow.pop %v1810
        %v1812 = vmul.f32 %v1792, 1.442695
        %v1813 = vpow.pop %v1812
        %v1814 = vmul.f32 %v1793, 1.442695
        %v1815 = vpow.pop %v1814
        %v1816 = vmul.f32 %v1794, 1.442695
        %v1817 = vpow.pop %v1816
        %v1818 = vmul.f32 %v1795, 1.442695
        %v1819 = vpow.pop %v1818
        %v1820 = vmul.f32 %v1796, 1.442695
        %v1821 = vpow.pop %v1820
        %v1822 = vmul.f32 %v1797, 1.442695
        %v1823 = vpow.pop %v1822
        %v1824 = vmul.f32 %v1798, 1.442695
        %v1825 = vpow.pop %v1824
        %v1826 = vmul.f32 %v1799, 1.442695
        %v1827 = vpow.pop %v1826
        %v1828 = vmul.f32 %v1800, 1.442695
        %v1829 = vpow.pop %v1828
        %v1830 = vmul.f32 %v1801, 1.442695
        %v1831 = vpow.pop %v1830
        %v1832 = vmul.f32 %v1802, 1.442695
        %v1833 = vpow.pop %v1832
        %v1834 = vmul.f32 %v1803, 1.442695
        %v1835 = vpow.pop %v1834
        %1836 = vadd.xlane.f32.xlu0 %v1805
        %v1837 = vpop.xlane.xlu0 %1836
        %1838 = vadd.xlane.f32.xlu0 %v1807
        %v1839 = vpop.xlane.xlu0 %1838
        %1840 = vadd.xlane.f32.xlu0 %v1809
        %v1841 = vpop.xlane.xlu0 %1840
        %1842 = vadd.xlane.f32.xlu0 %v1811
        %v1843 = vpop.xlane.xlu0 %1842
        %1844 = vadd.xlane.f32.xlu0 %v1813
        %v1845 = vpop.xlane.xlu0 %1844
        %1846 = vadd.xlane.f32.xlu0 %v1815
        %v1847 = vpop.xlane.xlu0 %1846
        %1848 = vadd.xlane.f32.xlu0 %v1817
        %v1849 = vpop.xlane.xlu0 %1848
        %1850 = vadd.xlane.f32.xlu0 %v1819
        %v1851 = vpop.xlane.xlu0 %1850
        %1852 = vadd.xlane.f32.xlu0 %v1821
        %v1853 = vpop.xlane.xlu0 %1852
        %1854 = vadd.xlane.f32.xlu0 %v1823
        %v1855 = vpop.xlane.xlu0 %1854
        %1856 = vadd.xlane.f32.xlu0 %v1825
        %v1857 = vpop.xlane.xlu0 %1856
        %1858 = vadd.xlane.f32.xlu0 %v1827
        %v1859 = vpop.xlane.xlu0 %1858
        %1860 = vadd.xlane.f32.xlu0 %v1829
        %v1861 = vpop.xlane.xlu0 %1860
        %1862 = vadd.xlane.f32.xlu0 %v1831
        %v1863 = vpop.xlane.xlu0 %1862
        %1864 = vadd.xlane.f32.xlu0 %v1833
        %v1865 = vpop.xlane.xlu0 %1864
        %1866 = vadd.xlane.f32.xlu0 %v1835
        %v1867 = vpop.xlane.xlu0 %1866
        %v1868 = vrcp.pop %v1837
        %v1869 = vrcp.pop %v1839
        %v1870 = vrcp.pop %v1841
        %v1871 = vrcp.pop %v1843
        %v1872 = vrcp.pop %v1845
        %v1873 = vrcp.pop %v1847
        %v1874 = vrcp.pop %v1849
        %v1875 = vrcp.pop %v1851
        %v1876 = vrcp.pop %v1853
        %v1877 = vrcp.pop %v1855
        %v1878 = vrcp.pop %v1857
        %v1879 = vrcp.pop %v1859
        %v1880 = vrcp.pop %v1861
        %v1881 = vrcp.pop %v1863
        %v1882 = vrcp.pop %v1865
        %v1883 = vrcp.pop %v1867
        %v1884 = vmul.f32 %v1805, %v1868
        %v1885 = vmul.f32 %v1807, %v1869
        %v1886 = vmul.f32 %v1809, %v1870
        %v1887 = vmul.f32 %v1811, %v1871
        %v1888 = vmul.f32 %v1813, %v1872
        %v1889 = vmul.f32 %v1815, %v1873
        %v1890 = vmul.f32 %v1817, %v1874
        %v1891 = vmul.f32 %v1819, %v1875
        %v1892 = vmul.f32 %v1821, %v1876
        %v1893 = vmul.f32 %v1823, %v1877
        %v1894 = vmul.f32 %v1825, %v1878
        %v1895 = vmul.f32 %v1827, %v1879
        %v1896 = vmul.f32 %v1829, %v1880
        %v1897 = vmul.f32 %v1831, %v1881
        %v1898 = vmul.f32 %v1833, %v1882
        %v1899 = vmul.f32 %v1835, %v1883
        %v1900 = vpack.c.bf16 %v1885, %v1884
        %v1901 = vpack.c.bf16 %v1887, %v1886
        %v1902 = vpack.c.bf16 %v1889, %v1888
        %v1903 = vpack.c.bf16 %v1891, %v1890
        %v1904 = vpack.c.bf16 %v1893, %v1892
        %v1905 = vpack.c.bf16 %v1895, %v1894
        %v1906 = vpack.c.bf16 %v1897, %v1896
        %v1907 = vpack.c.bf16 %v1899, %v1898
        %s1908 = scalar_lea.vmem %s8, 1
        %v1909 = vld [vmem:[%s1908] sm:$0x1]
        %v1911 = vperm.slane %v1909, 0
        %1913 = vmatpush.bf16.msra.mxu0 %v1622
        %1914 = vmatpush.bf16.msra.mxu0 %v1621
        %1915 = vmatpush.bf16.msra.mxu0 %v1620
        %1916 = vmatpush.bf16.msra.mxu0 %v1619
        %1917 = vmatpush.bf16.msra.mxu0 %v1618
        %1918 = vmatpush.bf16.msra.mxu0 %v1617
        %1919 = vmatpush.bf16.msra.mxu0 %v1616
        %1920 = vmatpush.bf16.msra.mxu0 %v1615
        %1921 = vmatmul.bf16.gmra.mxu0 %v1900
        %v1922 = vpop.f32.mrf.mxu0
        %v1923 = vadd.f32 %v1911, %v1922
        %v1924 = vpop.f32.mrf.mxu0
        %v1925 = vadd.f32 %v1911, %v1924
        %1926 = vmatmul.bf16.gmra.mxu0 %v1901
        %v1927 = vpop.f32.mrf.mxu0
        %v1928 = vadd.f32 %v1911, %v1927
        %v1929 = vpop.f32.mrf.mxu0
        %v1930 = vadd.f32 %v1911, %v1929
        %1931 = vmatmul.bf16.gmra.mxu0 %v1902
        %v1932 = vpop.f32.mrf.mxu0
        %v1933 = vadd.f32 %v1911, %v1932
        %v1934 = vpop.f32.mrf.mxu0
        %v1935 = vadd.f32 %v1911, %v1934
        %1936 = vmatmul.bf16.gmra.mxu0 %v1903
        %v1937 = vpop.f32.mrf.mxu0
        %v1938 = vadd.f32 %v1911, %v1937
        %v1939 = vpop.f32.mrf.mxu0
        %v1940 = vadd.f32 %v1911, %v1939
        %1941 = vmatmul.bf16.gmra.mxu0 %v1904
        %v1942 = vpop.f32.mrf.mxu0
        %v1943 = vadd.f32 %v1911, %v1942
        %v1944 = vpop.f32.mrf.mxu0
        %v1945 = vadd.f32 %v1911, %v1944
        %1946 = vmatmul.bf16.gmra.mxu0 %v1905
        %v1947 = vpop.f32.mrf.mxu0
        %v1948 = vadd.f32 %v1911, %v1947
        %v1949 = vpop.f32.mrf.mxu0
        %v1950 = vadd.f32 %v1911, %v1949
        %1951 = vmatmul.bf16.gmra.mxu0 %v1906
        %v1952 = vpop.f32.mrf.mxu0
        %v1953 = vadd.f32 %v1911, %v1952
        %v1954 = vpop.f32.mrf.mxu0
        %v1955 = vadd.f32 %v1911, %v1954
        %1956 = vmatmul.bf16.gmra.mxu0 %v1907
        %v1957 = vpop.f32.mrf.mxu0
        %v1958 = vadd.f32 %v1911, %v1957
        %v1959 = vpop.f32.mrf.mxu0
        %v1960 = vadd.f32 %v1911, %v1959
        %1961 = vdwg.mxu0
        %v1962 = vmax.f32 %v1923, 0.0
        %v1963 = vmax.f32 %v1925, 0.0
        %v1964 = vmax.f32 %v1928, 0.0
        %v1965 = vmax.f32 %v1930, 0.0
        %v1966 = vmax.f32 %v1933, 0.0
        %v1967 = vmax.f32 %v1935, 0.0
        %v1968 = vmax.f32 %v1938, 0.0
        %v1969 = vmax.f32 %v1940, 0.0
        %v1970 = vmax.f32 %v1943, 0.0
        %v1971 = vmax.f32 %v1945, 0.0
        %v1972 = vmax.f32 %v1948, 0.0
        %v1973 = vmax.f32 %v1950, 0.0
        %v1974 = vmax.f32 %v1953, 0.0
        %v1975 = vmax.f32 %v1955, 0.0
        %v1976 = vmax.f32 %v1958, 0.0
        %v1977 = vmax.f32 %v1960, 0.0
        %v1978 = vpack.c.bf16 %v1963, %v1962
        %v1979 = vpack.c.bf16 %v1965, %v1964
        %v1980 = vpack.c.bf16 %v1967, %v1966
        %v1981 = vpack.c.bf16 %v1969, %v1968
        %v1982 = vpack.c.bf16 %v1971, %v1970
        %v1983 = vpack.c.bf16 %v1973, %v1972
        %v1984 = vpack.c.bf16 %v1975, %v1974
        %v1985 = vpack.c.bf16 %v1977, %v1976
        %s1986 = scalar_lea.vmem [#allocation10], 128
        %v1987 = vld [vmem:[%s1986] sm:$0xf]
        %v1988 = vld [vmem:[%s1986 + $0x4] sm:$0xf]
        %v1989 = vld [vmem:[%s1986 + $0x8] sm:$0xf]
        %v1990 = vld [vmem:[%s1986 + $0xc] sm:$0xf]
        %v1991 = vld [vmem:[%s1986 + $0x10] sm:$0xf]
        %v1992 = vld [vmem:[%s1986 + $0x14] sm:$0xf]
        %v1993 = vld [vmem:[%s1986 + $0x18] sm:$0xf]
        %v1994 = vld [vmem:[%s1986 + $0x1c] sm:$0xf]
        %v1995 = vld [vmem:[%s1986 + $0x20] sm:$0xf]
        %v1996 = vld [vmem:[%s1986 + $0x24] sm:$0xf]
        %v1997 = vld [vmem:[%s1986 + $0x28] sm:$0xf]
        %v1998 = vld [vmem:[%s1986 + $0x2c] sm:$0xf]
        %v1999 = vld [vmem:[%s1986 + $0x30] sm:$0xf]
        %v2000 = vld [vmem:[%s1986 + $0x34] sm:$0xf]
        %v2001 = vld [vmem:[%s1986 + $0x38] sm:$0xf]
        %v2002 = vld [vmem:[%s1986 + $0x3c] sm:$0xf]
        %v2019 = vunpack.c.l.b16 %v1987
        %v2020 = vunpack.c.l.b16 %v1988
        %v2021 = vunpack.c.l.b16 %v1989
        %v2022 = vunpack.c.l.b16 %v1990
        %v2023 = vunpack.c.l.b16 %v1991
        %v2024 = vunpack.c.l.b16 %v1992
        %v2025 = vunpack.c.l.b16 %v1993
        %v2026 = vunpack.c.l.b16 %v1994
        %v2027 = vunpack.c.l.b16 %v1995
        %v2028 = vunpack.c.l.b16 %v1996
        %v2029 = vunpack.c.l.b16 %v1997
        %v2030 = vunpack.c.l.b16 %v1998
        %v2031 = vunpack.c.l.b16 %v1999
        %v2032 = vunpack.c.l.b16 %v2000
        %v2033 = vunpack.c.l.b16 %v2001
        %v2034 = vunpack.c.l.b16 %v2002
        %v2035 = vpack.c.b16 %v2020, %v2019
        %v2036 = vpack.c.b16 %v2022, %v2021
        %v2037 = vpack.c.b16 %v2024, %v2023
        %v2038 = vpack.c.b16 %v2026, %v2025
        %v2039 = vpack.c.b16 %v2028, %v2027
        %v2040 = vpack.c.b16 %v2030, %v2029
        %v2041 = vpack.c.b16 %v2032, %v2031
        %v2042 = vpack.c.b16 %v2034, %v2033
        %2051 = vmatpush.bf16.msra.mxu0 %v2042
        %2052 = vmatpush.bf16.msra.mxu0 %v2041
        %2053 = vmatpush.bf16.msra.mxu0 %v2040
        %2054 = vmatpush.bf16.msra.mxu0 %v2039
        %2055 = vmatpush.bf16.msra.mxu0 %v2038
        %2056 = vmatpush.bf16.msra.mxu0 %v2037
        %2057 = vmatpush.bf16.msra.mxu0 %v2036
        %2058 = vmatpush.bf16.msra.mxu0 %v2035
        %2059 = vmatmul.bf16.gmra.mxu0 %v1978
        %v2060 = vpop.f32.mrf.mxu0
        %v2061 = vadd.f32 0.0, %v2060
        %v2062 = vpop.f32.mrf.mxu0
        %v2063 = vadd.f32 0.0, %v2062
        %2064 = vmatmul.bf16.gmra.mxu0 %v1979
        %v2065 = vpop.f32.mrf.mxu0
        %v2066 = vadd.f32 0.0, %v2065
        %v2067 = vpop.f32.mrf.mxu0
        %v2068 = vadd.f32 0.0, %v2067
        %2069 = vmatmul.bf16.gmra.mxu0 %v1980
        %v2070 = vpop.f32.mrf.mxu0
        %v2071 = vadd.f32 0.0, %v2070
        %v2072 = vpop.f32.mrf.mxu0
        %v2073 = vadd.f32 0.0, %v2072
        %2074 = vmatmul.bf16.gmra.mxu0 %v1981
        %v2075 = vpop.f32.mrf.mxu0
        %v2076 = vadd.f32 0.0, %v2075
        %v2077 = vpop.f32.mrf.mxu0
        %v2078 = vadd.f32 0.0, %v2077
        %2079 = vmatmul.bf16.gmra.mxu0 %v1982
        %v2080 = vpop.f32.mrf.mxu0
        %v2081 = vadd.f32 0.0, %v2080
        %v2082 = vpop.f32.mrf.mxu0
        %v2083 = vadd.f32 0.0, %v2082
        %2084 = vmatmul.bf16.gmra.mxu0 %v1983
        %v2085 = vpop.f32.mrf.mxu0
        %v2086 = vadd.f32 0.0, %v2085
        %v2087 = vpop.f32.mrf.mxu0
        %v2088 = vadd.f32 0.0, %v2087
        %2089 = vmatmul.bf16.gmra.mxu0 %v1984
        %v2090 = vpop.f32.mrf.mxu0
        %v2091 = vadd.f32 0.0, %v2090
        %v2092 = vpop.f32.mrf.mxu0
        %v2093 = vadd.f32 0.0, %v2092
        %2094 = vmatmul.bf16.gmra.mxu0 %v1985
        %v2095 = vpop.f32.mrf.mxu0
        %v2096 = vadd.f32 0.0, %v2095
        %v2097 = vpop.f32.mrf.mxu0
        %v2098 = vadd.f32 0.0, %v2097
        %2099 = vdwg.mxu0
        %v2100 = vpack.c.bf16 %v2063, %v2061
        %v2101 = vpack.c.bf16 %v2068, %v2066
        %v2102 = vpack.c.bf16 %v2073, %v2071
        %v2103 = vpack.c.bf16 %v2078, %v2076
        %v2104 = vpack.c.bf16 %v2083, %v2081
        %v2105 = vpack.c.bf16 %v2088, %v2086
        %v2106 = vpack.c.bf16 %v2093, %v2091
        %v2107 = vpack.c.bf16 %v2098, %v2096
        %s2108 = scalar_lea.vmem [#allocation11], 2
        %v2109 = vld [vmem:[%s2108] sm:$0x1]
        %v2111 = vperm.slane %v2109, 0
        %v2113 = vmul.f32 %v2061, %v2111
        %v2114 = vmul.f32 %v2063, %v2111
        %v2115 = vmul.f32 %v2066, %v2111
        %v2116 = vmul.f32 %v2068, %v2111
        %v2117 = vmul.f32 %v2071, %v2111
        %v2118 = vmul.f32 %v2073, %v2111
        %v2119 = vmul.f32 %v2076, %v2111
        %v2120 = vmul.f32 %v2078, %v2111
        %v2121 = vmul.f32 %v2081, %v2111
        %v2122 = vmul.f32 %v2083, %v2111
        %v2123 = vmul.f32 %v2086, %v2111
        %v2124 = vmul.f32 %v2088, %v2111
        %v2125 = vmul.f32 %v2091, %v2111
        %v2126 = vmul.f32 %v2093, %v2111
        %v2127 = vmul.f32 %v2096, %v2111
        %v2128 = vmul.f32 %v2098, %v2111
        %2129 = vadd.xlane.f32.xlu0 %v2113
        %v2130 = vpop.xlane.xlu0 %2129
        %2131 = vadd.xlane.f32.xlu0 %v2114
        %v2132 = vpop.xlane.xlu0 %2131
        %2133 = vadd.xlane.f32.xlu0 %v2115
        %v2134 = vpop.xlane.xlu0 %2133
        %2135 = vadd.xlane.f32.xlu0 %v2116
        %v2136 = vpop.xlane.xlu0 %2135
        %2137 = vadd.xlane.f32.xlu0 %v2117
        %v2138 = vpop.xlane.xlu0 %2137
        %2139 = vadd.xlane.f32.xlu0 %v2118
        %v2140 = vpop.xlane.xlu0 %2139
        %2141 = vadd.xlane.f32.xlu0 %v2119
        %v2142 = vpop.xlane.xlu0 %2141
        %2143 = vadd.xlane.f32.xlu0 %v2120
        %v2144 = vpop.xlane.xlu0 %2143
        %2145 = vadd.xlane.f32.xlu0 %v2121
        %v2146 = vpop.xlane.xlu0 %2145
        %2147 = vadd.xlane.f32.xlu0 %v2122
        %v2148 = vpop.xlane.xlu0 %2147
        %2149 = vadd.xlane.f32.xlu0 %v2123
        %v2150 = vpop.xlane.xlu0 %2149
        %2151 = vadd.xlane.f32.xlu0 %v2124
        %v2152 = vpop.xlane.xlu0 %2151
        %2153 = vadd.xlane.f32.xlu0 %v2125
        %v2154 = vpop.xlane.xlu0 %2153
        %2155 = vadd.xlane.f32.xlu0 %v2126
        %v2156 = vpop.xlane.xlu0 %2155
        %2157 = vadd.xlane.f32.xlu0 %v2127
        %v2158 = vpop.xlane.xlu0 %2157
        %2159 = vadd.xlane.f32.xlu0 %v2128
        %v2160 = vpop.xlane.xlu0 %2159
        %s2161 = scalar_lea.vmem %s6, 2
        %v2162 = vld [vmem:[%s2161] sm:$0x1]
        %2163 = vmatpush.bf16.xpose.msra.mxu0 %v2107
        %2164 = vmatpush.bf16.xpose.msra.mxu0 %v2106
        %2165 = vmatpush.bf16.xpose.msra.mxu0 %v2105
        %2166 = vmatpush.bf16.xpose.msra.mxu0 %v2104
        %2167 = vmatpush.bf16.xpose.msra.mxu0 %v2103
        %2168 = vmatpush.bf16.xpose.msra.mxu0 %v2102
        %2169 = vmatpush.bf16.xpose.msra.mxu0 %v2101
        %2170 = vmatpush.bf16.xpose.msra.mxu0 %v2100
        %2171 = vmatmul.bf16.gmra.mxu0 %v2162
        %v2172 = vpop.f32.mrf.mxu0
        %v2173 = vadd.f32 0.0, %v2172
        %v2174 = vpop.f32.mrf.mxu0
        %2175 = vdwg.mxu0
        %v2176 = vperm.slane %v2173, 0
        %v2177 = vadd.f32 %v2130, %v2176
        %v2178 = vadd.f32 %v2132, %v2176
        %v2179 = vadd.f32 %v2134, %v2176
        %v2180 = vadd.f32 %v2136, %v2176
        %v2181 = vadd.f32 %v2138, %v2176
        %v2182 = vadd.f32 %v2140, %v2176
        %v2183 = vadd.f32 %v2142, %v2176
        %v2184 = vadd.f32 %v2144, %v2176
        %v2185 = vadd.f32 %v2146, %v2176
        %v2186 = vadd.f32 %v2148, %v2176
        %v2187 = vadd.f32 %v2150, %v2176
        %v2188 = vadd.f32 %v2152, %v2176
        %v2189 = vadd.f32 %v2154, %v2176
        %v2190 = vadd.f32 %v2156, %v2176
        %v2191 = vadd.f32 %v2158, %v2176
        %v2192 = vadd.f32 %v2160, %v2176
        %v2193 = vmul.f32 %v2177, 0.2
        %v2194 = vmul.f32 %v2178, 0.2
        %v2195 = vmul.f32 %v2179, 0.2
        %v2196 = vmul.f32 %v2180, 0.2
        %v2197 = vmul.f32 %v2181, 0.2
        %v2198 = vmul.f32 %v2182, 0.2
        %v2199 = vmul.f32 %v2183, 0.2
        %v2200 = vmul.f32 %v2184, 0.2
        %v2201 = vmul.f32 %v2185, 0.2
        %v2202 = vmul.f32 %v2186, 0.2
        %v2203 = vmul.f32 %v2187, 0.2
        %v2204 = vmul.f32 %v2188, 0.2
        %v2205 = vmul.f32 %v2189, 0.2
        %v2206 = vmul.f32 %v2190, 0.2
        %v2207 = vmul.f32 %v2191, 0.2
        %v2208 = vmul.f32 %v2192, 0.2
        %v2209 = vmax.f32 %v2177, %v2193
        %v2210 = vmax.f32 %v2178, %v2194
        %v2211 = vmax.f32 %v2179, %v2195
        %v2212 = vmax.f32 %v2180, %v2196
        %v2213 = vmax.f32 %v2181, %v2197
        %v2214 = vmax.f32 %v2182, %v2198
        %v2215 = vmax.f32 %v2183, %v2199
        %v2216 = vmax.f32 %v2184, %v2200
        %v2217 = vmax.f32 %v2185, %v2201
        %v2218 = vmax.f32 %v2186, %v2202
        %v2219 = vmax.f32 %v2187, %v2203
        %v2220 = vmax.f32 %v2188, %v2204
        %v2221 = vmax.f32 %v2189, %v2205
        %v2222 = vmax.f32 %v2190, %v2206
        %v2223 = vmax.f32 %v2191, %v2207
        %v2224 = vmax.f32 %v2192, %v2208
        %v2225 = vadd.f32 %v2209, %v996
        %v2226 = vadd.f32 %v2210, %v997
        %v2227 = vadd.f32 %v2211, %v998
        %v2228 = vadd.f32 %v2212, %v999
        %v2229 = vadd.f32 %v2213, %v1000
        %v2230 = vadd.f32 %v2214, %v1001
        %v2231 = vadd.f32 %v2215, %v1002
        %v2232 = vadd.f32 %v2216, %v1003
        %v2233 = vadd.f32 %v2217, %v1004
        %v2234 = vadd.f32 %v2218, %v1005
        %v2235 = vadd.f32 %v2219, %v1006
        %v2236 = vadd.f32 %v2220, %v1007
        %v2237 = vadd.f32 %v2221, %v1008
        %v2238 = vadd.f32 %v2222, %v1009
        %v2239 = vadd.f32 %v2223, %v1010
        %v2240 = vadd.f32 %v2224, %v1011
        %2241 = vmax.xlane.f32.xlu0 %v2225
        %v2242 = vpop.xlane.xlu0 %2241
        %2243 = vmax.xlane.f32.xlu0 %v2226
        %v2244 = vpop.xlane.xlu0 %2243
        %2245 = vmax.xlane.f32.xlu0 %v2227
        %v2246 = vpop.xlane.xlu0 %2245
        %2247 = vmax.xlane.f32.xlu0 %v2228
        %v2248 = vpop.xlane.xlu0 %2247
        %2249 = vmax.xlane.f32.xlu0 %v2229
        %v2250 = vpop.xlane.xlu0 %2249
        %2251 = vmax.xlane.f32.xlu0 %v2230
        %v2252 = vpop.xlane.xlu0 %2251
        %2253 = vmax.xlane.f32.xlu0 %v2231
        %v2254 = vpop.xlane.xlu0 %2253
        %2255 = vmax.xlane.f32.xlu0 %v2232
        %v2256 = vpop.xlane.xlu0 %2255
        %2257 = vmax.xlane.f32.xlu0 %v2233
        %v2258 = vpop.xlane.xlu0 %2257
        %2259 = vmax.xlane.f32.xlu0 %v2234
        %v2260 = vpop.xlane.xlu0 %2259
        %2261 = vmax.xlane.f32.xlu0 %v2235
        %v2262 = vpop.xlane.xlu0 %2261
        %2263 = vmax.xlane.f32.xlu0 %v2236
        %v2264 = vpop.xlane.xlu0 %2263
        %2265 = vmax.xlane.f32.xlu0 %v2237
        %v2266 = vpop.xlane.xlu0 %2265
        %2267 = vmax.xlane.f32.xlu0 %v2238
        %v2268 = vpop.xlane.xlu0 %2267
        %2269 = vmax.xlane.f32.xlu0 %v2239
        %v2270 = vpop.xlane.xlu0 %2269
        %2271 = vmax.xlane.f32.xlu0 %v2240
        %v2272 = vpop.xlane.xlu0 %2271
        %v2273 = vsub.f32 %v2225, %v2242
        %v2274 = vsub.f32 %v2226, %v2244
        %v2275 = vsub.f32 %v2227, %v2246
        %v2276 = vsub.f32 %v2228, %v2248
        %v2277 = vsub.f32 %v2229, %v2250
        %v2278 = vsub.f32 %v2230, %v2252
        %v2279 = vsub.f32 %v2231, %v2254
        %v2280 = vsub.f32 %v2232, %v2256
        %v2281 = vsub.f32 %v2233, %v2258
        %v2282 = vsub.f32 %v2234, %v2260
        %v2283 = vsub.f32 %v2235, %v2262
        %v2284 = vsub.f32 %v2236, %v2264
        %v2285 = vsub.f32 %v2237, %v2266
        %v2286 = vsub.f32 %v2238, %v2268
        %v2287 = vsub.f32 %v2239, %v2270
        %v2288 = vsub.f32 %v2240, %v2272
        %v2289 = vmul.f32 %v2273, 1.442695
        %v2290 = vpow.pop %v2289
        %v2291 = vmul.f32 %v2274, 1.442695
        %v2292 = vpow.pop %v2291
        %v2293 = vmul.f32 %v2275, 1.442695
        %v2294 = vpow.pop %v2293
        %v2295 = vmul.f32 %v2276, 1.442695
        %v2296 = vpow.pop %v2295
        %v2297 = vmul.f32 %v2277, 1.442695
        %v2298 = vpow.pop %v2297
        %v2299 = vmul.f32 %v2278, 1.442695
        %v2300 = vpow.pop %v2299
        %v2301 = vmul.f32 %v2279, 1.442695
        %v2302 = vpow.pop %v2301
        %v2303 = vmul.f32 %v2280, 1.442695
        %v2304 = vpow.pop %v2303
        %v2305 = vmul.f32 %v2281, 1.442695
        %v2306 = vpow.pop %v2305
        %v2307 = vmul.f32 %v2282, 1.442695
        %v2308 = vpow.pop %v2307
        %v2309 = vmul.f32 %v2283, 1.442695
        %v2310 = vpow.pop %v2309
        %v2311 = vmul.f32 %v2284, 1.442695
        %v2312 = vpow.pop %v2311
        %v2313 = vmul.f32 %v2285, 1.442695
        %v2314 = vpow.pop %v2313
        %v2315 = vmul.f32 %v2286, 1.442695
        %v2316 = vpow.pop %v2315
        %v2317 = vmul.f32 %v2287, 1.442695
        %v2318 = vpow.pop %v2317
        %v2319 = vmul.f32 %v2288, 1.442695
        %v2320 = vpow.pop %v2319
        %2321 = vadd.xlane.f32.xlu0 %v2290
        %v2322 = vpop.xlane.xlu0 %2321
        %2323 = vadd.xlane.f32.xlu0 %v2292
        %v2324 = vpop.xlane.xlu0 %2323
        %2325 = vadd.xlane.f32.xlu0 %v2294
        %v2326 = vpop.xlane.xlu0 %2325
        %2327 = vadd.xlane.f32.xlu0 %v2296
        %v2328 = vpop.xlane.xlu0 %2327
        %2329 = vadd.xlane.f32.xlu0 %v2298
        %v2330 = vpop.xlane.xlu0 %2329
        %2331 = vadd.xlane.f32.xlu0 %v2300
        %v2332 = vpop.xlane.xlu0 %2331
        %2333 = vadd.xlane.f32.xlu0 %v2302
        %v2334 = vpop.xlane.xlu0 %2333
        %2335 = vadd.xlane.f32.xlu0 %v2304
        %v2336 = vpop.xlane.xlu0 %2335
        %2337 = vadd.xlane.f32.xlu0 %v2306
        %v2338 = vpop.xlane.xlu0 %2337
        %2339 = vadd.xlane.f32.xlu0 %v2308
        %v2340 = vpop.xlane.xlu0 %2339
        %2341 = vadd.xlane.f32.xlu0 %v2310
        %v2342 = vpop.xlane.xlu0 %2341
        %2343 = vadd.xlane.f32.xlu0 %v2312
        %v2344 = vpop.xlane.xlu0 %2343
        %2345 = vadd.xlane.f32.xlu0 %v2314
        %v2346 = vpop.xlane.xlu0 %2345
        %2347 = vadd.xlane.f32.xlu0 %v2316
        %v2348 = vpop.xlane.xlu0 %2347
        %2349 = vadd.xlane.f32.xlu0 %v2318
        %v2350 = vpop.xlane.xlu0 %2349
        %2351 = vadd.xlane.f32.xlu0 %v2320
        %v2352 = vpop.xlane.xlu0 %2351
        %v2353 = vrcp.pop %v2322
        %v2354 = vrcp.pop %v2324
        %v2355 = vrcp.pop %v2326
        %v2356 = vrcp.pop %v2328
        %v2357 = vrcp.pop %v2330
        %v2358 = vrcp.pop %v2332
        %v2359 = vrcp.pop %v2334
        %v2360 = vrcp.pop %v2336
        %v2361 = vrcp.pop %v2338
        %v2362 = vrcp.pop %v2340
        %v2363 = vrcp.pop %v2342
        %v2364 = vrcp.pop %v2344
        %v2365 = vrcp.pop %v2346
        %v2366 = vrcp.pop %v2348
        %v2367 = vrcp.pop %v2350
        %v2368 = vrcp.pop %v2352
        %v2369 = vmul.f32 %v2290, %v2353
        %v2370 = vmul.f32 %v2292, %v2354
        %v2371 = vmul.f32 %v2294, %v2355
        %v2372 = vmul.f32 %v2296, %v2356
        %v2373 = vmul.f32 %v2298, %v2357
        %v2374 = vmul.f32 %v2300, %v2358
        %v2375 = vmul.f32 %v2302, %v2359
        %v2376 = vmul.f32 %v2304, %v2360
        %v2377 = vmul.f32 %v2306, %v2361
        %v2378 = vmul.f32 %v2308, %v2362
        %v2379 = vmul.f32 %v2310, %v2363
        %v2380 = vmul.f32 %v2312, %v2364
        %v2381 = vmul.f32 %v2314, %v2365
        %v2382 = vmul.f32 %v2316, %v2366
        %v2383 = vmul.f32 %v2318, %v2367
        %v2384 = vmul.f32 %v2320, %v2368
        %v2385 = vpack.c.bf16 %v2370, %v2369
        %v2386 = vpack.c.bf16 %v2372, %v2371
        %v2387 = vpack.c.bf16 %v2374, %v2373
        %v2388 = vpack.c.bf16 %v2376, %v2375
        %v2389 = vpack.c.bf16 %v2378, %v2377
        %v2390 = vpack.c.bf16 %v2380, %v2379
        %v2391 = vpack.c.bf16 %v2382, %v2381
        %v2392 = vpack.c.bf16 %v2384, %v2383
        %s2393 = scalar_lea.vmem %s8, 2
        %v2394 = vld [vmem:[%s2393] sm:$0x1]
        %v2396 = vperm.slane %v2394, 0
        %2398 = vmatpush.bf16.msra.mxu0 %v2107
        %2399 = vmatpush.bf16.msra.mxu0 %v2106
        %2400 = vmatpush.bf16.msra.mxu0 %v2105
        %2401 = vmatpush.bf16.msra.mxu0 %v2104
        %2402 = vmatpush.bf16.msra.mxu0 %v2103
        %2403 = vmatpush.bf16.msra.mxu0 %v2102
        %2404 = vmatpush.bf16.msra.mxu0 %v2101
        %2405 = vmatpush.bf16.msra.mxu0 %v2100
        %2406 = vmatmul.bf16.gmra.mxu0 %v2385
        %v2407 = vpop.f32.mrf.mxu0
        %v2408 = vadd.f32 %v2396, %v2407
        %v2409 = vpop.f32.mrf.mxu0
        %v2410 = vadd.f32 %v2396, %v2409
        %2411 = vmatmul.bf16.gmra.mxu0 %v2386
        %v2412 = vpop.f32.mrf.mxu0
        %v2413 = vadd.f32 %v2396, %v2412
        %v2414 = vpop.f32.mrf.mxu0
        %v2415 = vadd.f32 %v2396, %v2414
        %2416 = vmatmul.bf16.gmra.mxu0 %v2387
        %v2417 = vpop.f32.mrf.mxu0
        %v2418 = vadd.f32 %v2396, %v2417
        %v2419 = vpop.f32.mrf.mxu0
        %v2420 = vadd.f32 %v2396, %v2419
        %2421 = vmatmul.bf16.gmra.mxu0 %v2388
        %v2422 = vpop.f32.mrf.mxu0
        %v2423 = vadd.f32 %v2396, %v2422
        %v2424 = vpop.f32.mrf.mxu0
        %v2425 = vadd.f32 %v2396, %v2424
        %2426 = vmatmul.bf16.gmra.mxu0 %v2389
        %v2427 = vpop.f32.mrf.mxu0
        %v2428 = vadd.f32 %v2396, %v2427
        %v2429 = vpop.f32.mrf.mxu0
        %v2430 = vadd.f32 %v2396, %v2429
        %2431 = vmatmul.bf16.gmra.mxu0 %v2390
        %v2432 = vpop.f32.mrf.mxu0
        %v2433 = vadd.f32 %v2396, %v2432
        %v2434 = vpop.f32.mrf.mxu0
        %v2435 = vadd.f32 %v2396, %v2434
        %2436 = vmatmul.bf16.gmra.mxu0 %v2391
        %v2437 = vpop.f32.mrf.mxu0
        %v2438 = vadd.f32 %v2396, %v2437
        %v2439 = vpop.f32.mrf.mxu0
        %v2440 = vadd.f32 %v2396, %v2439
        %2441 = vmatmul.bf16.gmra.mxu0 %v2392
        %v2442 = vpop.f32.mrf.mxu0
        %v2443 = vadd.f32 %v2396, %v2442
        %v2444 = vpop.f32.mrf.mxu0
        %v2445 = vadd.f32 %v2396, %v2444
        %2446 = vdwg.mxu0
        %v2447 = vmax.f32 %v2408, 0.0
        %v2448 = vmax.f32 %v2410, 0.0
        %v2449 = vmax.f32 %v2413, 0.0
        %v2450 = vmax.f32 %v2415, 0.0
        %v2451 = vmax.f32 %v2418, 0.0
        %v2452 = vmax.f32 %v2420, 0.0
        %v2453 = vmax.f32 %v2423, 0.0
        %v2454 = vmax.f32 %v2425, 0.0
        %v2455 = vmax.f32 %v2428, 0.0
        %v2456 = vmax.f32 %v2430, 0.0
        %v2457 = vmax.f32 %v2433, 0.0
        %v2458 = vmax.f32 %v2435, 0.0
        %v2459 = vmax.f32 %v2438, 0.0
        %v2460 = vmax.f32 %v2440, 0.0
        %v2461 = vmax.f32 %v2443, 0.0
        %v2462 = vmax.f32 %v2445, 0.0
        %v2463 = vpack.c.bf16 %v2448, %v2447
        %v2464 = vpack.c.bf16 %v2450, %v2449
        %v2465 = vpack.c.bf16 %v2452, %v2451
        %v2466 = vpack.c.bf16 %v2454, %v2453
        %v2467 = vpack.c.bf16 %v2456, %v2455
        %v2468 = vpack.c.bf16 %v2458, %v2457
        %v2469 = vpack.c.bf16 %v2460, %v2459
        %v2470 = vpack.c.bf16 %v2462, %v2461
        %v2471 = vld [vmem:[%s691] sm:$0xff]
        %vm2472 = vcmp.gt.f32.partialorder %v2471, 0.0
        %v2473 = vsel %vm2472, 0.0, -1e+30
        %v2474 = vld [vmem:[#allocation13] sm:$0xff]
        %v2475 = vld [vmem:[#allocation13 + $0x8] sm:$0xff]
        %v2476 = vld [vmem:[#allocation13 + $0x10] sm:$0xff]
        %v2477 = vld [vmem:[#allocation13 + $0x18] sm:$0xff]
        %v2478 = vld [vmem:[#allocation13 + $0x20] sm:$0xff]
        %v2479 = vld [vmem:[#allocation13 + $0x28] sm:$0xff]
        %v2480 = vld [vmem:[#allocation13 + $0x30] sm:$0xff]
        %v2481 = vld [vmem:[#allocation13 + $0x38] sm:$0xff]
        %v2482 = vld [vmem:[#allocation13 + $0x40] sm:$0xff]
        %v2483 = vld [vmem:[#allocation13 + $0x48] sm:$0xff]
        %v2484 = vld [vmem:[#allocation13 + $0x50] sm:$0xff]
        %v2485 = vld [vmem:[#allocation13 + $0x58] sm:$0xff]
        %v2486 = vld [vmem:[#allocation13 + $0x60] sm:$0xff]
        %v2487 = vld [vmem:[#allocation13 + $0x68] sm:$0xff]
        %v2488 = vld [vmem:[#allocation13 + $0x70] sm:$0xff]
        %v2489 = vld [vmem:[#allocation13 + $0x78] sm:$0xff]
        %v2490 = vld [vmem:[#allocation13 + $0x80] sm:$0xff]
        %v2491 = vld [vmem:[#allocation13 + $0x88] sm:$0xff]
        %v2492 = vld [vmem:[#allocation13 + $0x90] sm:$0xff]
        %v2493 = vld [vmem:[#allocation13 + $0x98] sm:$0xff]
        %v2494 = vld [vmem:[#allocation13 + $0xa0] sm:$0xff]
        %v2495 = vld [vmem:[#allocation13 + $0xa8] sm:$0xff]
        %v2496 = vld [vmem:[#allocation13 + $0xb0] sm:$0xff]
        %v2497 = vld [vmem:[#allocation13 + $0xb8] sm:$0xff]
        %v2498 = vld [vmem:[#allocation13 + $0xc0] sm:$0xff]
        %v2499 = vld [vmem:[#allocation13 + $0xc8] sm:$0xff]
        %v2500 = vld [vmem:[#allocation13 + $0xd0] sm:$0xff]
        %v2501 = vld [vmem:[#allocation13 + $0xd8] sm:$0xff]
        %v2502 = vld [vmem:[#allocation13 + $0xe0] sm:$0xff]
        %v2503 = vld [vmem:[#allocation13 + $0xe8] sm:$0xff]
        %v2504 = vld [vmem:[#allocation13 + $0xf0] sm:$0xff]
        %v2505 = vld [vmem:[#allocation13 + $0xf8] sm:$0xff]
        %v2506 = vld [vmem:[#allocation13 + $0x100] sm:$0xff]
        %v2507 = vld [vmem:[#allocation13 + $0x108] sm:$0xff]
        %v2508 = vld [vmem:[#allocation13 + $0x110] sm:$0xff]
        %v2509 = vld [vmem:[#allocation13 + $0x118] sm:$0xff]
        %v2510 = vld [vmem:[#allocation13 + $0x120] sm:$0xff]
        %v2511 = vld [vmem:[#allocation13 + $0x128] sm:$0xff]
        %v2512 = vld [vmem:[#allocation13 + $0x130] sm:$0xff]
        %v2513 = vld [vmem:[#allocation13 + $0x138] sm:$0xff]
        %v2514 = vld [vmem:[#allocation13 + $0x140] sm:$0xff]
        %v2515 = vld [vmem:[#allocation13 + $0x148] sm:$0xff]
        %v2516 = vld [vmem:[#allocation13 + $0x150] sm:$0xff]
        %v2517 = vld [vmem:[#allocation13 + $0x158] sm:$0xff]
        %v2518 = vld [vmem:[#allocation13 + $0x160] sm:$0xff]
        %v2519 = vld [vmem:[#allocation13 + $0x168] sm:$0xff]
        %v2520 = vld [vmem:[#allocation13 + $0x170] sm:$0xff]
        %v2521 = vld [vmem:[#allocation13 + $0x178] sm:$0xff]
        %v2522 = vld [vmem:[#allocation13 + $0x180] sm:$0xff]
        %v2523 = vld [vmem:[#allocation13 + $0x188] sm:$0xff]
        %v2524 = vld [vmem:[#allocation13 + $0x190] sm:$0xff]
        %v2525 = vld [vmem:[#allocation13 + $0x198] sm:$0xff]
        %v2526 = vld [vmem:[#allocation13 + $0x1a0] sm:$0xff]
        %v2527 = vld [vmem:[#allocation13 + $0x1a8] sm:$0xff]
        %v2528 = vld [vmem:[#allocation13 + $0x1b0] sm:$0xff]
        %v2529 = vld [vmem:[#allocation13 + $0x1b8] sm:$0xff]
        %v2530 = vld [vmem:[#allocation13 + $0x1c0] sm:$0xff]
        %v2531 = vld [vmem:[#allocation13 + $0x1c8] sm:$0xff]
        %v2532 = vld [vmem:[#allocation13 + $0x1d0] sm:$0xff]
        %v2533 = vld [vmem:[#allocation13 + $0x1d8] sm:$0xff]
        %v2534 = vld [vmem:[#allocation13 + $0x1e0] sm:$0xff]
        %v2535 = vld [vmem:[#allocation13 + $0x1e8] sm:$0xff]
        %v2536 = vld [vmem:[#allocation13 + $0x1f0] sm:$0xff]
        %v2537 = vld [vmem:[#allocation13 + $0x1f8] sm:$0xff]
        %v2538 = vld [vmem:[#allocation13 + $0x200] sm:$0xff]
        %v2539 = vld [vmem:[#allocation13 + $0x208] sm:$0xff]
        %v2540 = vld [vmem:[#allocation13 + $0x210] sm:$0xff]
        %v2541 = vld [vmem:[#allocation13 + $0x218] sm:$0xff]
        %v2542 = vld [vmem:[#allocation13 + $0x220] sm:$0xff]
        %v2543 = vld [vmem:[#allocation13 + $0x228] sm:$0xff]
        %v2544 = vld [vmem:[#allocation13 + $0x230] sm:$0xff]
        %v2545 = vld [vmem:[#allocation13 + $0x238] sm:$0xff]
        %v2546 = vld [vmem:[#allocation13 + $0x240] sm:$0xff]
        %v2547 = vld [vmem:[#allocation13 + $0x248] sm:$0xff]
        %v2548 = vld [vmem:[#allocation13 + $0x250] sm:$0xff]
        %v2549 = vld [vmem:[#allocation13 + $0x258] sm:$0xff]
        %v2550 = vld [vmem:[#allocation13 + $0x260] sm:$0xff]
        %v2551 = vld [vmem:[#allocation13 + $0x268] sm:$0xff]
        %v2552 = vld [vmem:[#allocation13 + $0x270] sm:$0xff]
        %v2553 = vld [vmem:[#allocation13 + $0x278] sm:$0xff]
        %v2554 = vld [vmem:[#allocation13 + $0x280] sm:$0xff]
        %v2555 = vld [vmem:[#allocation13 + $0x288] sm:$0xff]
        %v2556 = vld [vmem:[#allocation13 + $0x290] sm:$0xff]
        %v2557 = vld [vmem:[#allocation13 + $0x298] sm:$0xff]
        %v2558 = vld [vmem:[#allocation13 + $0x2a0] sm:$0xff]
        %v2559 = vld [vmem:[#allocation13 + $0x2a8] sm:$0xff]
        %v2560 = vld [vmem:[#allocation13 + $0x2b0] sm:$0xff]
        %v2561 = vld [vmem:[#allocation13 + $0x2b8] sm:$0xff]
        %v2562 = vld [vmem:[#allocation13 + $0x2c0] sm:$0xff]
        %v2563 = vld [vmem:[#allocation13 + $0x2c8] sm:$0xff]
        %v2564 = vld [vmem:[#allocation13 + $0x2d0] sm:$0xff]
        %v2565 = vld [vmem:[#allocation13 + $0x2d8] sm:$0xff]
        %v2566 = vld [vmem:[#allocation13 + $0x2e0] sm:$0xff]
        %v2567 = vld [vmem:[#allocation13 + $0x2e8] sm:$0xff]
        %v2568 = vld [vmem:[#allocation13 + $0x2f0] sm:$0xff]
        %v2569 = vld [vmem:[#allocation13 + $0x2f8] sm:$0xff]
        %v2570 = vld [vmem:[%s10] sm:$0xf]
        %2571 = vst [vmem:[#allocation2] sm:$0xff] 0
        %2572 = vst [vmem:[#allocation2 + $0x8] sm:$0xf] 0
        %v2573 = vld [vmem:[#allocation2] sm:$0xff]
        %v2574 = vld [vmem:[#allocation2 + $0x8] sm:$0xf]
        %v2576 = vperm.slane %v2570, 0
        %v2577 = vperm.slane %v2570, 1
        %v2578 = vperm.slane %v2570, 2
        %v2579 = vperm.slane %v2570, 3
        %v2586 = vunpack.c.l.b16 %v2573
        %v2587 = vunpack.c.h.b16 %v2573
        %v2588 = vunpack.c.l.b16 %v2574
        %v2589 = vpack.c.b16 %v2586, %v2586
        %v2590 = vpack.c.b16 %v2587, %v2587
        %v2591 = vpack.c.b16 %v2588, %v2588
        %v2691 = vunpack.c.l.b16 %v2474
        %v2692 = vunpack.c.h.b16 %v2474
        %v2693 = vunpack.c.l.b16 %v2475
        %v2694 = vunpack.c.h.b16 %v2475
        %v2695 = vunpack.c.l.b16 %v2476
        %v2696 = vunpack.c.h.b16 %v2476
        %v2697 = vunpack.c.l.b16 %v2477
        %v2698 = vunpack.c.h.b16 %v2477
        %v2699 = vunpack.c.l.b16 %v2478
        %v2700 = vunpack.c.h.b16 %v2478
        %v2701 = vunpack.c.l.b16 %v2479
        %v2702 = vunpack.c.h.b16 %v2479
        %v2703 = vunpack.c.l.b16 %v2480
        %v2704 = vunpack.c.h.b16 %v2480
        %v2705 = vunpack.c.l.b16 %v2481
        %v2706 = vunpack.c.h.b16 %v2481
        %v2707 = vunpack.c.l.b16 %v2482
        %v2708 = vunpack.c.h.b16 %v2482
        %v2709 = vunpack.c.l.b16 %v2483
        %v2710 = vunpack.c.h.b16 %v2483
        %v2711 = vunpack.c.l.b16 %v2484
        %v2712 = vunpack.c.h.b16 %v2484
        %v2713 = vunpack.c.l.b16 %v2485
        %v2714 = vunpack.c.h.b16 %v2485
        %v2715 = vunpack.c.l.b16 %v2486
        %v2716 = vunpack.c.h.b16 %v2486
        %v2717 = vunpack.c.l.b16 %v2487
        %v2718 = vunpack.c.h.b16 %v2487
        %v2719 = vunpack.c.l.b16 %v2488
        %v2720 = vunpack.c.h.b16 %v2488
        %v2721 = vunpack.c.l.b16 %v2489
        %v2722 = vunpack.c.h.b16 %v2489
        %v2723 = vunpack.c.l.b16 %v2490
        %v2724 = vunpack.c.h.b16 %v2490
        %v2725 = vunpack.c.l.b16 %v2491
        %v2726 = vunpack.c.h.b16 %v2491
        %v2727 = vunpack.c.l.b16 %v2492
        %v2728 = vunpack.c.h.b16 %v2492
        %v2729 = vunpack.c.l.b16 %v2493
        %v2730 = vunpack.c.h.b16 %v2493
        %v2731 = vunpack.c.l.b16 %v2494
        %v2732 = vunpack.c.h.b16 %v2494
        %v2733 = vunpack.c.l.b16 %v2495
        %v2734 = vunpack.c.h.b16 %v2495
        %v2735 = vunpack.c.l.b16 %v2496
        %v2736 = vunpack.c.h.b16 %v2496
        %v2737 = vunpack.c.l.b16 %v2497
        %v2738 = vunpack.c.h.b16 %v2497
        %v2739 = vunpack.c.l.b16 %v2498
        %v2740 = vunpack.c.h.b16 %v2498
        %v2741 = vunpack.c.l.b16 %v2499
        %v2742 = vunpack.c.h.b16 %v2499
        %v2743 = vunpack.c.l.b16 %v2500
        %v2744 = vunpack.c.h.b16 %v2500
        %v2745 = vunpack.c.l.b16 %v2501
        %v2746 = vunpack.c.h.b16 %v2501
        %v2747 = vunpack.c.l.b16 %v2502
        %v2748 = vunpack.c.h.b16 %v2502
        %v2749 = vunpack.c.l.b16 %v2503
        %v2750 = vunpack.c.h.b16 %v2503
        %v2751 = vunpack.c.l.b16 %v2504
        %v2752 = vunpack.c.h.b16 %v2504
        %v2753 = vunpack.c.l.b16 %v2505
        %v2754 = vunpack.c.h.b16 %v2505
        %v2755 = vunpack.c.l.b16 %v2506
        %v2756 = vunpack.c.h.b16 %v2506
        %v2757 = vunpack.c.l.b16 %v2507
        %v2758 = vunpack.c.h.b16 %v2507
        %v2759 = vunpack.c.l.b16 %v2508
        %v2760 = vunpack.c.h.b16 %v2508
        %v2761 = vunpack.c.l.b16 %v2509
        %v2762 = vunpack.c.h.b16 %v2509
        %v2763 = vunpack.c.l.b16 %v2510
        %v2764 = vunpack.c.h.b16 %v2510
        %v2765 = vunpack.c.l.b16 %v2511
        %v2766 = vunpack.c.h.b16 %v2511
        %v2767 = vunpack.c.l.b16 %v2512
        %v2768 = vunpack.c.h.b16 %v2512
        %v2769 = vunpack.c.l.b16 %v2513
        %v2770 = vunpack.c.h.b16 %v2513
        %v2771 = vunpack.c.l.b16 %v2514
        %v2772 = vunpack.c.h.b16 %v2514
        %v2773 = vunpack.c.l.b16 %v2515
        %v2774 = vunpack.c.h.b16 %v2515
        %v2775 = vunpack.c.l.b16 %v2516
        %v2776 = vunpack.c.h.b16 %v2516
        %v2777 = vunpack.c.l.b16 %v2517
        %v2778 = vunpack.c.h.b16 %v2517
        %v2779 = vunpack.c.l.b16 %v2518
        %v2780 = vunpack.c.h.b16 %v2518
        %v2781 = vunpack.c.l.b16 %v2519
        %v2782 = vunpack.c.h.b16 %v2519
        %v2783 = vunpack.c.l.b16 %v2520
        %v2784 = vunpack.c.h.b16 %v2520
        %v2785 = vunpack.c.l.b16 %v2521
        %v2786 = vunpack.c.h.b16 %v2521
        %v2787 = vunpack.c.l.b16 %v2522
        %v2788 = vunpack.c.h.b16 %v2522
        %v2789 = vunpack.c.l.b16 %v2523
        %v2790 = vunpack.c.h.b16 %v2523
        %v2791 = vunpack.c.l.b16 %v2524
        %v2792 = vunpack.c.h.b16 %v2524
        %v2793 = vunpack.c.l.b16 %v2525
        %v2794 = vunpack.c.h.b16 %v2525
        %v2795 = vunpack.c.l.b16 %v2526
        %v2796 = vunpack.c.h.b16 %v2526
        %v2797 = vunpack.c.l.b16 %v2527
        %v2798 = vunpack.c.h.b16 %v2527
        %v2799 = vunpack.c.l.b16 %v2528
        %v2800 = vunpack.c.h.b16 %v2528
        %v2801 = vunpack.c.l.b16 %v2529
        %v2802 = vunpack.c.h.b16 %v2529
        %v2803 = vunpack.c.l.b16 %v2530
        %v2804 = vunpack.c.h.b16 %v2530
        %v2805 = vunpack.c.l.b16 %v2531
        %v2806 = vunpack.c.h.b16 %v2531
        %v2807 = vunpack.c.l.b16 %v2532
        %v2808 = vunpack.c.h.b16 %v2532
        %v2809 = vunpack.c.l.b16 %v2533
        %v2810 = vunpack.c.h.b16 %v2533
        %v2811 = vunpack.c.l.b16 %v2534
        %v2812 = vunpack.c.h.b16 %v2534
        %v2813 = vunpack.c.l.b16 %v2535
        %v2814 = vunpack.c.h.b16 %v2535
        %v2815 = vunpack.c.l.b16 %v2536
        %v2816 = vunpack.c.h.b16 %v2536
        %v2817 = vunpack.c.l.b16 %v2537
        %v2818 = vunpack.c.h.b16 %v2537
        %v2819 = vunpack.c.l.b16 %v2538
        %v2820 = vunpack.c.h.b16 %v2538
        %v2821 = vunpack.c.l.b16 %v2539
        %v2822 = vunpack.c.h.b16 %v2539
        %v2823 = vunpack.c.l.b16 %v2540
        %v2824 = vunpack.c.h.b16 %v2540
        %v2825 = vunpack.c.l.b16 %v2541
        %v2826 = vunpack.c.h.b16 %v2541
        %v2827 = vunpack.c.l.b16 %v2542
        %v2828 = vunpack.c.h.b16 %v2542
        %v2829 = vunpack.c.l.b16 %v2543
        %v2830 = vunpack.c.h.b16 %v2543
        %v2831 = vunpack.c.l.b16 %v2544
        %v2832 = vunpack.c.h.b16 %v2544
        %v2833 = vunpack.c.l.b16 %v2545
        %v2834 = vunpack.c.h.b16 %v2545
        %v2835 = vunpack.c.l.b16 %v2546
        %v2836 = vunpack.c.h.b16 %v2546
        %v2837 = vunpack.c.l.b16 %v2547
        %v2838 = vunpack.c.h.b16 %v2547
        %v2839 = vunpack.c.l.b16 %v2548
        %v2840 = vunpack.c.h.b16 %v2548
        %v2841 = vunpack.c.l.b16 %v2549
        %v2842 = vunpack.c.h.b16 %v2549
        %v2843 = vunpack.c.l.b16 %v2550
        %v2844 = vunpack.c.h.b16 %v2550
        %v2845 = vunpack.c.l.b16 %v2551
        %v2846 = vunpack.c.h.b16 %v2551
        %v2847 = vunpack.c.l.b16 %v2552
        %v2848 = vunpack.c.h.b16 %v2552
        %v2849 = vunpack.c.l.b16 %v2553
        %v2850 = vunpack.c.h.b16 %v2553
        %v2851 = vunpack.c.l.b16 %v2554
        %v2852 = vunpack.c.h.b16 %v2554
        %v2853 = vunpack.c.l.b16 %v2555
        %v2854 = vunpack.c.h.b16 %v2555
        %v2855 = vunpack.c.l.b16 %v2556
        %v2856 = vunpack.c.h.b16 %v2556
        %v2857 = vunpack.c.l.b16 %v2557
        %v2858 = vunpack.c.h.b16 %v2557
        %v2859 = vunpack.c.l.b16 %v2558
        %v2860 = vunpack.c.h.b16 %v2558
        %v2861 = vunpack.c.l.b16 %v2559
        %v2862 = vunpack.c.h.b16 %v2559
        %v2863 = vunpack.c.l.b16 %v2560
        %v2864 = vunpack.c.h.b16 %v2560
        %v2865 = vunpack.c.l.b16 %v2561
        %v2866 = vunpack.c.h.b16 %v2561
        %v2867 = vunpack.c.l.b16 %v2562
        %v2868 = vunpack.c.h.b16 %v2562
        %v2869 = vunpack.c.l.b16 %v2563
        %v2870 = vunpack.c.h.b16 %v2563
        %v2871 = vunpack.c.l.b16 %v2564
        %v2872 = vunpack.c.h.b16 %v2564
        %v2873 = vunpack.c.l.b16 %v2565
        %v2874 = vunpack.c.h.b16 %v2565
        %v2875 = vunpack.c.l.b16 %v2566
        %v2876 = vunpack.c.h.b16 %v2566
        %v2877 = vunpack.c.l.b16 %v2567
        %v2878 = vunpack.c.h.b16 %v2567
        %v2879 = vunpack.c.l.b16 %v2568
        %v2880 = vunpack.c.h.b16 %v2568
        %v2881 = vunpack.c.l.b16 %v2569
        %v2882 = vunpack.c.h.b16 %v2569
        %v2883 = vpack.c.b16 %v2695, %v2691
        %v2884 = vpack.c.b16 %v2696, %v2692
        %v2885 = vpack.c.b16 %v2697, %v2693
        %v2886 = vpack.c.b16 %v2698, %v2694
        %v2887 = vpack.c.b16 %v2703, %v2699
        %v2888 = vpack.c.b16 %v2704, %v2700
        %v2889 = vpack.c.b16 %v2705, %v2701
        %v2890 = vpack.c.b16 %v2706, %v2702
        %v2891 = vpack.c.b16 %v2711, %v2707
        %v2892 = vpack.c.b16 %v2712, %v2708
        %v2893 = vpack.c.b16 %v2713, %v2709
        %v2894 = vpack.c.b16 %v2714, %v2710
        %v2895 = vpack.c.b16 %v2719, %v2715
        %v2896 = vpack.c.b16 %v2720, %v2716
        %v2897 = vpack.c.b16 %v2721, %v2717
        %v2898 = vpack.c.b16 %v2722, %v2718
        %v2899 = vpack.c.b16 %v2727, %v2723
        %v2900 = vpack.c.b16 %v2728, %v2724
        %v2901 = vpack.c.b16 %v2729, %v2725
        %v2902 = vpack.c.b16 %v2730, %v2726
        %v2903 = vpack.c.b16 %v2735, %v2731
        %v2904 = vpack.c.b16 %v2736, %v2732
        %v2905 = vpack.c.b16 %v2737, %v2733
        %v2906 = vpack.c.b16 %v2738, %v2734
        %v2907 = vpack.c.b16 %v2743, %v2739
        %v2908 = vpack.c.b16 %v2744, %v2740
        %v2909 = vpack.c.b16 %v2745, %v2741
        %v2910 = vpack.c.b16 %v2746, %v2742
        %v2911 = vpack.c.b16 %v2751, %v2747
        %v2912 = vpack.c.b16 %v2752, %v2748
        %v2913 = vpack.c.b16 %v2753, %v2749
        %v2914 = vpack.c.b16 %v2754, %v2750
        %v2915 = vpack.c.b16 %v2759, %v2755
        %v2916 = vpack.c.b16 %v2760, %v2756
        %v2917 = vpack.c.b16 %v2761, %v2757
        %v2918 = vpack.c.b16 %v2762, %v2758
        %v2919 = vpack.c.b16 %v2767, %v2763
        %v2920 = vpack.c.b16 %v2768, %v2764
        %v2921 = vpack.c.b16 %v2769, %v2765
        %v2922 = vpack.c.b16 %v2770, %v2766
        %v2923 = vpack.c.b16 %v2775, %v2771
        %v2924 = vpack.c.b16 %v2776, %v2772
        %v2925 = vpack.c.b16 %v2777, %v2773
        %v2926 = vpack.c.b16 %v2778, %v2774
        %v2927 = vpack.c.b16 %v2783, %v2779
        %v2928 = vpack.c.b16 %v2784, %v2780
        %v2929 = vpack.c.b16 %v2785, %v2781
        %v2930 = vpack.c.b16 %v2786, %v2782
        %v2931 = vpack.c.b16 %v2791, %v2787
        %v2932 = vpack.c.b16 %v2792, %v2788
        %v2933 = vpack.c.b16 %v2793, %v2789
        %v2934 = vpack.c.b16 %v2794, %v2790
        %v2935 = vpack.c.b16 %v2799, %v2795
        %v2936 = vpack.c.b16 %v2800, %v2796
        %v2937 = vpack.c.b16 %v2801, %v2797
        %v2938 = vpack.c.b16 %v2802, %v2798
        %v2939 = vpack.c.b16 %v2807, %v2803
        %v2940 = vpack.c.b16 %v2808, %v2804
        %v2941 = vpack.c.b16 %v2809, %v2805
        %v2942 = vpack.c.b16 %v2810, %v2806
        %v2943 = vpack.c.b16 %v2815, %v2811
        %v2944 = vpack.c.b16 %v2816, %v2812
        %v2945 = vpack.c.b16 %v2817, %v2813
        %v2946 = vpack.c.b16 %v2818, %v2814
        %v2947 = vpack.c.b16 %v2823, %v2819
        %v2948 = vpack.c.b16 %v2824, %v2820
        %v2949 = vpack.c.b16 %v2825, %v2821
        %v2950 = vpack.c.b16 %v2826, %v2822
        %v2951 = vpack.c.b16 %v2831, %v2827
        %v2952 = vpack.c.b16 %v2832, %v2828
        %v2953 = vpack.c.b16 %v2833, %v2829
        %v2954 = vpack.c.b16 %v2834, %v2830
        %v2955 = vpack.c.b16 %v2839, %v2835
        %v2956 = vpack.c.b16 %v2840, %v2836
        %v2957 = vpack.c.b16 %v2841, %v2837
        %v2958 = vpack.c.b16 %v2842, %v2838
        %v2959 = vpack.c.b16 %v2847, %v2843
        %v2960 = vpack.c.b16 %v2848, %v2844
        %v2961 = vpack.c.b16 %v2849, %v2845
        %v2962 = vpack.c.b16 %v2850, %v2846
        %v2963 = vpack.c.b16 %v2855, %v2851
        %v2964 = vpack.c.b16 %v2856, %v2852
        %v2965 = vpack.c.b16 %v2857, %v2853
        %v2966 = vpack.c.b16 %v2858, %v2854
        %v2967 = vpack.c.b16 %v2863, %v2859
        %v2968 = vpack.c.b16 %v2864, %v2860
        %v2969 = vpack.c.b16 %v2865, %v2861
        %v2970 = vpack.c.b16 %v2866, %v2862
        %v2971 = vpack.c.b16 %v2871, %v2867
        %v2972 = vpack.c.b16 %v2872, %v2868
        %v2973 = vpack.c.b16 %v2873, %v2869
        %v2974 = vpack.c.b16 %v2874, %v2870
        %v2975 = vpack.c.b16 %v2879, %v2875
        %v2976 = vpack.c.b16 %v2880, %v2876
        %v2977 = vpack.c.b16 %v2881, %v2877
        %v2978 = vpack.c.b16 %v2882, %v2878
        %3075 = vmatpush.bf16.msra.mxu0 %v2911
        %3076 = vmatpush.bf16.msra.mxu0 %v2907
        %3077 = vmatpush.bf16.msra.mxu0 %v2903
        %3078 = vmatpush.bf16.msra.mxu0 %v2899
        %3079 = vmatpush.bf16.msra.mxu0 %v2895
        %3080 = vmatpush.bf16.msra.mxu0 %v2891
        %3081 = vmatpush.bf16.msra.mxu0 %v2887
        %3082 = vmatpush.bf16.msra.mxu0 %v2883
        %3083 = vmatmul.bf16.gmra.mxu0 %v2589
        %v3084 = vpop.f32.mrf.mxu0
        %v3085 = vadd.f32 %v2576, %v3084
        %v3086 = vpop.f32.mrf.mxu0
        %3087 = vdwg.mxu0
        %3088 = vmatpush.bf16.msra.mxu0 %v2943
        %3089 = vmatpush.bf16.msra.mxu0 %v2939
        %3090 = vmatpush.bf16.msra.mxu0 %v2935
        %3091 = vmatpush.bf16.msra.mxu0 %v2931
        %3092 = vmatpush.bf16.msra.mxu0 %v2927
        %3093 = vmatpush.bf16.msra.mxu0 %v2923
        %3094 = vmatpush.bf16.msra.mxu0 %v2919
        %3095 = vmatpush.bf16.msra.mxu0 %v2915
        %3096 = vmatmul.bf16.gmra.mxu0 %v2590
        %v3097 = vpop.f32.mrf.mxu0
        %v3098 = vadd.f32 %v3085, %v3097
        %v3099 = vpop.f32.mrf.mxu0
        %3100 = vdwg.mxu0
        %3101 = vmatpush.bf16.msra.mxu0 %v2975
        %3102 = vmatpush.bf16.msra.mxu0 %v2971
        %3103 = vmatpush.bf16.msra.mxu0 %v2967
        %3104 = vmatpush.bf16.msra.mxu0 %v2963
        %3105 = vmatpush.bf16.msra.mxu0 %v2959
        %3106 = vmatpush.bf16.msra.mxu0 %v2955
        %3107 = vmatpush.bf16.msra.mxu0 %v2951
        %3108 = vmatpush.bf16.msra.mxu0 %v2947
        %3109 = vmatmul.bf16.gmra.mxu0 %v2591
        %v3110 = vpop.f32.mrf.mxu0
        %v3111 = vadd.f32 %v3098, %v3110
        %v3112 = vpop.f32.mrf.mxu0
        %3113 = vdwg.mxu0
        %3114 = vmatpush.bf16.msra.mxu0 %v2912
        %3115 = vmatpush.bf16.msra.mxu0 %v2908
        %3116 = vmatpush.bf16.msra.mxu0 %v2904
        %3117 = vmatpush.bf16.msra.mxu0 %v2900
        %3118 = vmatpush.bf16.msra.mxu0 %v2896
        %3119 = vmatpush.bf16.msra.mxu0 %v2892
        %3120 = vmatpush.bf16.msra.mxu0 %v2888
        %3121 = vmatpush.bf16.msra.mxu0 %v2884
        %3122 = vmatmul.bf16.gmra.mxu0 %v2589
        %v3123 = vpop.f32.mrf.mxu0
        %v3124 = vadd.f32 %v2577, %v3123
        %v3125 = vpop.f32.mrf.mxu0
        %3126 = vdwg.mxu0
        %3127 = vmatpush.bf16.msra.mxu0 %v2944
        %3128 = vmatpush.bf16.msra.mxu0 %v2940
        %3129 = vmatpush.bf16.msra.mxu0 %v2936
        %3130 = vmatpush.bf16.msra.mxu0 %v2932
        %3131 = vmatpush.bf16.msra.mxu0 %v2928
        %3132 = vmatpush.bf16.msra.mxu0 %v2924
        %3133 = vmatpush.bf16.msra.mxu0 %v2920
        %3134 = vmatpush.bf16.msra.mxu0 %v2916
        %3135 = vmatmul.bf16.gmra.mxu0 %v2590
        %v3136 = vpop.f32.mrf.mxu0
        %v3137 = vadd.f32 %v3124, %v3136
        %v3138 = vpop.f32.mrf.mxu0
        %3139 = vdwg.mxu0
        %3140 = vmatpush.bf16.msra.mxu0 %v2976
        %3141 = vmatpush.bf16.msra.mxu0 %v2972
        %3142 = vmatpush.bf16.msra.mxu0 %v2968
        %3143 = vmatpush.bf16.msra.mxu0 %v2964
        %3144 = vmatpush.bf16.msra.mxu0 %v2960
        %3145 = vmatpush.bf16.msra.mxu0 %v2956
        %3146 = vmatpush.bf16.msra.mxu0 %v2952
        %3147 = vmatpush.bf16.msra.mxu0 %v2948
        %3148 = vmatmul.bf16.gmra.mxu0 %v2591
        %v3149 = vpop.f32.mrf.mxu0
        %v3150 = vadd.f32 %v3137, %v3149
        %v3151 = vpop.f32.mrf.mxu0
        %3152 = vdwg.mxu0
        %3153 = vmatpush.bf16.msra.mxu0 %v2913
        %3154 = vmatpush.bf16.msra.mxu0 %v2909
        %3155 = vmatpush.bf16.msra.mxu0 %v2905
        %3156 = vmatpush.bf16.msra.mxu0 %v2901
        %3157 = vmatpush.bf16.msra.mxu0 %v2897
        %3158 = vmatpush.bf16.msra.mxu0 %v2893
        %3159 = vmatpush.bf16.msra.mxu0 %v2889
        %3160 = vmatpush.bf16.msra.mxu0 %v2885
        %3161 = vmatmul.bf16.gmra.mxu0 %v2589
        %v3162 = vpop.f32.mrf.mxu0
        %v3163 = vadd.f32 %v2578, %v3162
        %v3164 = vpop.f32.mrf.mxu0
        %3165 = vdwg.mxu0
        %3166 = vmatpush.bf16.msra.mxu0 %v2945
        %3167 = vmatpush.bf16.msra.mxu0 %v2941
        %3168 = vmatpush.bf16.msra.mxu0 %v2937
        %3169 = vmatpush.bf16.msra.mxu0 %v2933
        %3170 = vmatpush.bf16.msra.mxu0 %v2929
        %3171 = vmatpush.bf16.msra.mxu0 %v2925
        %3172 = vmatpush.bf16.msra.mxu0 %v2921
        %3173 = vmatpush.bf16.msra.mxu0 %v2917
        %3174 = vmatmul.bf16.gmra.mxu0 %v2590
        %v3175 = vpop.f32.mrf.mxu0
        %v3176 = vadd.f32 %v3163, %v3175
        %v3177 = vpop.f32.mrf.mxu0
        %3178 = vdwg.mxu0
        %3179 = vmatpush.bf16.msra.mxu0 %v2977
        %3180 = vmatpush.bf16.msra.mxu0 %v2973
        %3181 = vmatpush.bf16.msra.mxu0 %v2969
        %3182 = vmatpush.bf16.msra.mxu0 %v2965
        %3183 = vmatpush.bf16.msra.mxu0 %v2961
        %3184 = vmatpush.bf16.msra.mxu0 %v2957
        %3185 = vmatpush.bf16.msra.mxu0 %v2953
        %3186 = vmatpush.bf16.msra.mxu0 %v2949
        %3187 = vmatmul.bf16.gmra.mxu0 %v2591
        %v3188 = vpop.f32.mrf.mxu0
        %v3189 = vadd.f32 %v3176, %v3188
        %v3190 = vpop.f32.mrf.mxu0
        %3191 = vdwg.mxu0
        %3192 = vmatpush.bf16.msra.mxu0 %v2914
        %3193 = vmatpush.bf16.msra.mxu0 %v2910
        %3194 = vmatpush.bf16.msra.mxu0 %v2906
        %3195 = vmatpush.bf16.msra.mxu0 %v2902
        %3196 = vmatpush.bf16.msra.mxu0 %v2898
        %3197 = vmatpush.bf16.msra.mxu0 %v2894
        %3198 = vmatpush.bf16.msra.mxu0 %v2890
        %3199 = vmatpush.bf16.msra.mxu0 %v2886
        %3200 = vmatmul.bf16.gmra.mxu0 %v2589
        %v3201 = vpop.f32.mrf.mxu0
        %v3202 = vadd.f32 %v2579, %v3201
        %v3203 = vpop.f32.mrf.mxu0
        %3204 = vdwg.mxu0
        %3205 = vmatpush.bf16.msra.mxu0 %v2946
        %3206 = vmatpush.bf16.msra.mxu0 %v2942
        %3207 = vmatpush.bf16.msra.mxu0 %v2938
        %3208 = vmatpush.bf16.msra.mxu0 %v2934
        %3209 = vmatpush.bf16.msra.mxu0 %v2930
        %3210 = vmatpush.bf16.msra.mxu0 %v2926
        %3211 = vmatpush.bf16.msra.mxu0 %v2922
        %3212 = vmatpush.bf16.msra.mxu0 %v2918
        %3213 = vmatmul.bf16.gmra.mxu0 %v2590
        %v3214 = vpop.f32.mrf.mxu0
        %v3215 = vadd.f32 %v3202, %v3214
        %v3216 = vpop.f32.mrf.mxu0
        %3217 = vdwg.mxu0
        %3218 = vmatpush.bf16.msra.mxu0 %v2978
        %3219 = vmatpush.bf16.msra.mxu0 %v2974
        %3220 = vmatpush.bf16.msra.mxu0 %v2970
        %3221 = vmatpush.bf16.msra.mxu0 %v2966
        %3222 = vmatpush.bf16.msra.mxu0 %v2962
        %3223 = vmatpush.bf16.msra.mxu0 %v2958
        %3224 = vmatpush.bf16.msra.mxu0 %v2954
        %3225 = vmatpush.bf16.msra.mxu0 %v2950
        %3226 = vmatmul.bf16.gmra.mxu0 %v2591
        %v3227 = vpop.f32.mrf.mxu0
        %v3228 = vadd.f32 %v3215, %v3227
        %v3229 = vpop.f32.mrf.mxu0
        %3230 = vdwg.mxu0
        %v3231 = vxor.u32 %v3111, 2147483648
        %v3232 = vmul.f32 %v3231, 1.442695
        %v3233 = vpow.pop %v3232
        %v3234 = vadd.f32 %v3233, 1.0
        %v3235 = vrcp.pop %v3234
        %v3236 = vmul.f32 %v3234, %v3235
        %v3237 = vsub.f32 1.0, %v3236
        %v3238 = vmul.f32 %v3235, %v3237
        %v3239 = vadd.f32 %v3235, %v3238
        %vm3240 = vweird.f32 %v3234
        %vm3241 = vweird.f32 %v3235
        %vm3242 = vmor %vm3240, %vm3241
        %v3243 = vsel %vm3242, %v3235, %v3239
        %v3244 = vand.u32 2147483647, %v3234
        %vm3245 = vcmp.eq.f32.partialorder %v3244, 8.507059e+37
        %v3246 = vand.u32 %v3234, 2147483648
        %v3247 = vor.u32 1.1754944e-38, %v3246
        %v3248 = vsel %vm3245, %v3247, %v3243
        %v3249 = vmul.f32 1.0, %v3248
        %v3250 = vxor.u32 %v3150, 2147483648
        %v3251 = vmul.f32 %v3250, 1.442695
        %v3252 = vpow.pop %v3251
        %v3253 = vadd.f32 %v3252, 1.0
        %v3254 = vrcp.pop %v3253
        %v3255 = vmul.f32 %v3253, %v3254
        %v3256 = vsub.f32 1.0, %v3255
        %v3257 = vmul.f32 %v3254, %v3256
        %v3258 = vadd.f32 %v3254, %v3257
        %vm3259 = vweird.f32 %v3253
        %vm3260 = vweird.f32 %v3254
        %vm3261 = vmor %vm3259, %vm3260
        %v3262 = vsel %vm3261, %v3254, %v3258
        %v3263 = vand.u32 2147483647, %v3253
        %vm3264 = vcmp.eq.f32.partialorder %v3263, 8.507059e+37
        %v3265 = vand.u32 %v3253, 2147483648
        %v3266 = vor.u32 1.1754944e-38, %v3265
        %v3267 = vsel %vm3264, %v3266, %v3262
        %v3268 = vmul.f32 1.0, %v3267
        %v3269 = vtanh.pop %v3189
        %v3270 = vxor.u32 %v3228, 2147483648
        %v3271 = vmul.f32 %v3270, 1.442695
        %v3272 = vpow.pop %v3271
        %v3273 = vadd.f32 %v3272, 1.0
        %v3274 = vrcp.pop %v3273
        %v3275 = vmul.f32 %v3273, %v3274
        %v3276 = vsub.f32 1.0, %v3275
        %v3277 = vmul.f32 %v3274, %v3276
        %v3278 = vadd.f32 %v3274, %v3277
        %vm3279 = vweird.f32 %v3273
        %vm3280 = vweird.f32 %v3274
        %vm3281 = vmor %vm3279, %vm3280
        %v3282 = vsel %vm3281, %v3274, %v3278
        %v3283 = vand.u32 2147483647, %v3273
        %vm3284 = vcmp.eq.f32.partialorder %v3283, 8.507059e+37
        %v3285 = vand.u32 %v3273, 2147483648
        %v3286 = vor.u32 1.1754944e-38, %v3285
        %v3287 = vsel %vm3284, %v3286, %v3282
        %v3288 = vmul.f32 1.0, %v3287
        %v3289 = vmul.f32 %v3268, 0.0
        %v3290 = vmul.f32 %v3249, %v3269
        %v3291 = vadd.f32 %v3289, %v3290
        %v3292 = vtanh.pop %v3291
        %v3293 = vmul.f32 %v3288, %v3292
        %v3294 = vpack.c.bf16 %v3293, %v3293
        %3295 = vmatpush.bf16.xpose.msra.mxu0 %v2470
        %3296 = vmatpush.bf16.xpose.msra.mxu0 %v2469
        %3297 = vmatpush.bf16.xpose.msra.mxu0 %v2468
        %3298 = vmatpush.bf16.xpose.msra.mxu0 %v2467
        %3299 = vmatpush.bf16.xpose.msra.mxu0 %v2466
        %3300 = vmatpush.bf16.xpose.msra.mxu0 %v2465
        %3301 = vmatpush.bf16.xpose.msra.mxu0 %v2464
        %3302 = vmatpush.bf16.xpose.msra.mxu0 %v2463
        %3303 = vmatmul.bf16.gmra.mxu0 %v3294
        %v3304 = vpop.f32.mrf.mxu0
        %v3305 = vadd.f32 %v2473, %v3304
        %v3306 = vpop.f32.mrf.mxu0
        %3307 = vdwg.mxu0
        %3308 = vmax.xlane.f32.xlu0 %v3305
        %v3309 = vpop.xlane.xlu0 %3308
        %v3310 = vsub.f32 %v3305, %v3309
        %v3311 = vmul.f32 %v3310, 1.442695
        %v3312 = vpow.pop %v3311
        %v3313 = vmul.f32 %v3312, %v2471
        %3314 = vadd.xlane.f32.xlu0 %v3313
        %v3315 = vpop.xlane.xlu0 %3314
        %v3316 = vmax.f32 %v3315, 1e-20
        %v3317 = vrcp.pop %v3316
        %v3318 = vmul.f32 %v3313, %v3317
        %v3319 = vpack.c.bf16 %v3318, %v3318
        %3320 = vmatpush.bf16.msra.mxu0 %v2470
        %3321 = vmatpush.bf16.msra.mxu0 %v2469
        %3322 = vmatpush.bf16.msra.mxu0 %v2468
        %3323 = vmatpush.bf16.msra.mxu0 %v2467
        %3324 = vmatpush.bf16.msra.mxu0 %v2466
        %3325 = vmatpush.bf16.msra.mxu0 %v2465
        %3326 = vmatpush.bf16.msra.mxu0 %v2464
        %3327 = vmatpush.bf16.msra.mxu0 %v2463
        %3328 = vmatmul.bf16.gmra.mxu0 %v3319
        %v3329 = vpop.f32.mrf.mxu0
        %v3330 = vadd.f32 0.0, %v3329
        %v3331 = vpop.f32.mrf.mxu0
        %3332 = vdwg.mxu0
        %3333 = vst [vmem:[#allocation2] sm:$0xf] %v3294
        %v3334 = vpack.c.bf16 %v3330, %v3330
        %3335 = vst [vmem:[#allocation2 + $0x4] sm:$0xf] %v3334
        %3336 = vst [vmem:[#allocation2 + $0x8] sm:$0xf] %v3294
        %v3337 = vld [vmem:[#allocation2] sm:$0xff]
        %v3338 = vld [vmem:[#allocation2 + $0x8] sm:$0xf]
        %v3341 = vunpack.c.l.b16 %v3337
        %v3342 = vunpack.c.h.b16 %v3337
        %v3343 = vunpack.c.l.b16 %v3338
        %v3344 = vpack.c.b16 %v3341, %v3341
        %v3345 = vpack.c.b16 %v3342, %v3342
        %v3346 = vpack.c.b16 %v3343, %v3343
        %3350 = vmatpush.bf16.msra.mxu0 %v2911
        %3351 = vmatpush.bf16.msra.mxu0 %v2907
        %3352 = vmatpush.bf16.msra.mxu0 %v2903
        %3353 = vmatpush.bf16.msra.mxu0 %v2899
        %3354 = vmatpush.bf16.msra.mxu0 %v2895
        %3355 = vmatpush.bf16.msra.mxu0 %v2891
        %3356 = vmatpush.bf16.msra.mxu0 %v2887
        %3357 = vmatpush.bf16.msra.mxu0 %v2883
        %3358 = vmatmul.bf16.gmra.mxu0 %v3344
        %v3359 = vpop.f32.mrf.mxu0
        %v3360 = vadd.f32 %v2576, %v3359
        %v3361 = vpop.f32.mrf.mxu0
        %3362 = vdwg.mxu0
        %3363 = vmatpush.bf16.msra.mxu0 %v2943
        %3364 = vmatpush.bf16.msra.mxu0 %v2939
        %3365 = vmatpush.bf16.msra.mxu0 %v2935
        %3366 = vmatpush.bf16.msra.mxu0 %v2931
        %3367 = vmatpush.bf16.msra.mxu0 %v2927
        %3368 = vmatpush.bf16.msra.mxu0 %v2923
        %3369 = vmatpush.bf16.msra.mxu0 %v2919
        %3370 = vmatpush.bf16.msra.mxu0 %v2915
        %3371 = vmatmul.bf16.gmra.mxu0 %v3345
        %v3372 = vpop.f32.mrf.mxu0
        %v3373 = vadd.f32 %v3360, %v3372
        %v3374 = vpop.f32.mrf.mxu0
        %3375 = vdwg.mxu0
        %3376 = vmatpush.bf16.msra.mxu0 %v2975
        %3377 = vmatpush.bf16.msra.mxu0 %v2971
        %3378 = vmatpush.bf16.msra.mxu0 %v2967
        %3379 = vmatpush.bf16.msra.mxu0 %v2963
        %3380 = vmatpush.bf16.msra.mxu0 %v2959
        %3381 = vmatpush.bf16.msra.mxu0 %v2955
        %3382 = vmatpush.bf16.msra.mxu0 %v2951
        %3383 = vmatpush.bf16.msra.mxu0 %v2947
        %3384 = vmatmul.bf16.gmra.mxu0 %v3346
        %v3385 = vpop.f32.mrf.mxu0
        %v3386 = vadd.f32 %v3373, %v3385
        %v3387 = vpop.f32.mrf.mxu0
        %3388 = vdwg.mxu0
        %3389 = vmatpush.bf16.msra.mxu0 %v2912
        %3390 = vmatpush.bf16.msra.mxu0 %v2908
        %3391 = vmatpush.bf16.msra.mxu0 %v2904
        %3392 = vmatpush.bf16.msra.mxu0 %v2900
        %3393 = vmatpush.bf16.msra.mxu0 %v2896
        %3394 = vmatpush.bf16.msra.mxu0 %v2892
        %3395 = vmatpush.bf16.msra.mxu0 %v2888
        %3396 = vmatpush.bf16.msra.mxu0 %v2884
        %3397 = vmatmul.bf16.gmra.mxu0 %v3344
        %v3398 = vpop.f32.mrf.mxu0
        %v3399 = vadd.f32 %v2577, %v3398
        %v3400 = vpop.f32.mrf.mxu0
        %3401 = vdwg.mxu0
        %3402 = vmatpush.bf16.msra.mxu0 %v2944
        %3403 = vmatpush.bf16.msra.mxu0 %v2940
        %3404 = vmatpush.bf16.msra.mxu0 %v2936
        %3405 = vmatpush.bf16.msra.mxu0 %v2932
        %3406 = vmatpush.bf16.msra.mxu0 %v2928
        %3407 = vmatpush.bf16.msra.mxu0 %v2924
        %3408 = vmatpush.bf16.msra.mxu0 %v2920
        %3409 = vmatpush.bf16.msra.mxu0 %v2916
        %3410 = vmatmul.bf16.gmra.mxu0 %v3345
        %v3411 = vpop.f32.mrf.mxu0
        %v3412 = vadd.f32 %v3399, %v3411
        %v3413 = vpop.f32.mrf.mxu0
        %3414 = vdwg.mxu0
        %3415 = vmatpush.bf16.msra.mxu0 %v2976
        %3416 = vmatpush.bf16.msra.mxu0 %v2972
        %3417 = vmatpush.bf16.msra.mxu0 %v2968
        %3418 = vmatpush.bf16.msra.mxu0 %v2964
        %3419 = vmatpush.bf16.msra.mxu0 %v2960
        %3420 = vmatpush.bf16.msra.mxu0 %v2956
        %3421 = vmatpush.bf16.msra.mxu0 %v2952
        %3422 = vmatpush.bf16.msra.mxu0 %v2948
        %3423 = vmatmul.bf16.gmra.mxu0 %v3346
        %v3424 = vpop.f32.mrf.mxu0
        %v3425 = vadd.f32 %v3412, %v3424
        %v3426 = vpop.f32.mrf.mxu0
        %3427 = vdwg.mxu0
        %3428 = vmatpush.bf16.msra.mxu0 %v2913
        %3429 = vmatpush.bf16.msra.mxu0 %v2909
        %3430 = vmatpush.bf16.msra.mxu0 %v2905
        %3431 = vmatpush.bf16.msra.mxu0 %v2901
        %3432 = vmatpush.bf16.msra.mxu0 %v2897
        %3433 = vmatpush.bf16.msra.mxu0 %v2893
        %3434 = vmatpush.bf16.msra.mxu0 %v2889
        %3435 = vmatpush.bf16.msra.mxu0 %v2885
        %3436 = vmatmul.bf16.gmra.mxu0 %v3344
        %v3437 = vpop.f32.mrf.mxu0
        %v3438 = vadd.f32 %v2578, %v3437
        %v3439 = vpop.f32.mrf.mxu0
        %3440 = vdwg.mxu0
        %3441 = vmatpush.bf16.msra.mxu0 %v2945
        %3442 = vmatpush.bf16.msra.mxu0 %v2941
        %3443 = vmatpush.bf16.msra.mxu0 %v2937
        %3444 = vmatpush.bf16.msra.mxu0 %v2933
        %3445 = vmatpush.bf16.msra.mxu0 %v2929
        %3446 = vmatpush.bf16.msra.mxu0 %v2925
        %3447 = vmatpush.bf16.msra.mxu0 %v2921
        %3448 = vmatpush.bf16.msra.mxu0 %v2917
        %3449 = vmatmul.bf16.gmra.mxu0 %v3345
        %v3450 = vpop.f32.mrf.mxu0
        %v3451 = vadd.f32 %v3438, %v3450
        %v3452 = vpop.f32.mrf.mxu0
        %3453 = vdwg.mxu0
        %3454 = vmatpush.bf16.msra.mxu0 %v2977
        %3455 = vmatpush.bf16.msra.mxu0 %v2973
        %3456 = vmatpush.bf16.msra.mxu0 %v2969
        %3457 = vmatpush.bf16.msra.mxu0 %v2965
        %3458 = vmatpush.bf16.msra.mxu0 %v2961
        %3459 = vmatpush.bf16.msra.mxu0 %v2957
        %3460 = vmatpush.bf16.msra.mxu0 %v2953
        %3461 = vmatpush.bf16.msra.mxu0 %v2949
        %3462 = vmatmul.bf16.gmra.mxu0 %v3346
        %v3463 = vpop.f32.mrf.mxu0
        %v3464 = vadd.f32 %v3451, %v3463
        %v3465 = vpop.f32.mrf.mxu0
        %3466 = vdwg.mxu0
        %3467 = vmatpush.bf16.msra.mxu0 %v2914
        %3468 = vmatpush.bf16.msra.mxu0 %v2910
        %3469 = vmatpush.bf16.msra.mxu0 %v2906
        %3470 = vmatpush.bf16.msra.mxu0 %v2902
        %3471 = vmatpush.bf16.msra.mxu0 %v2898
        %3472 = vmatpush.bf16.msra.mxu0 %v2894
        %3473 = vmatpush.bf16.msra.mxu0 %v2890
        %3474 = vmatpush.bf16.msra.mxu0 %v2886
        %3475 = vmatmul.bf16.gmra.mxu0 %v3344
        %v3476 = vpop.f32.mrf.mxu0
        %v3477 = vadd.f32 %v2579, %v3476
        %v3478 = vpop.f32.mrf.mxu0
        %3479 = vdwg.mxu0
        %3480 = vmatpush.bf16.msra.mxu0 %v2946
        %3481 = vmatpush.bf16.msra.mxu0 %v2942
        %3482 = vmatpush.bf16.msra.mxu0 %v2938
        %3483 = vmatpush.bf16.msra.mxu0 %v2934
        %3484 = vmatpush.bf16.msra.mxu0 %v2930
        %3485 = vmatpush.bf16.msra.mxu0 %v2926
        %3486 = vmatpush.bf16.msra.mxu0 %v2922
        %3487 = vmatpush.bf16.msra.mxu0 %v2918
        %3488 = vmatmul.bf16.gmra.mxu0 %v3345
        %v3489 = vpop.f32.mrf.mxu0
        %v3490 = vadd.f32 %v3477, %v3489
        %v3491 = vpop.f32.mrf.mxu0
        %3492 = vdwg.mxu0
        %3493 = vmatpush.bf16.msra.mxu0 %v2978
        %3494 = vmatpush.bf16.msra.mxu0 %v2974
        %3495 = vmatpush.bf16.msra.mxu0 %v2970
        %3496 = vmatpush.bf16.msra.mxu0 %v2966
        %3497 = vmatpush.bf16.msra.mxu0 %v2962
        %3498 = vmatpush.bf16.msra.mxu0 %v2958
        %3499 = vmatpush.bf16.msra.mxu0 %v2954
        %3500 = vmatpush.bf16.msra.mxu0 %v2950
        %3501 = vmatmul.bf16.gmra.mxu0 %v3346
        %v3502 = vpop.f32.mrf.mxu0
        %v3503 = vadd.f32 %v3490, %v3502
        %v3504 = vpop.f32.mrf.mxu0
        %3505 = vdwg.mxu0
        %v3506 = vxor.u32 %v3386, 2147483648
        %v3507 = vmul.f32 %v3506, 1.442695
        %v3508 = vpow.pop %v3507
        %v3509 = vadd.f32 %v3508, 1.0
        %v3510 = vrcp.pop %v3509
        %v3511 = vmul.f32 %v3509, %v3510
        %v3512 = vsub.f32 1.0, %v3511
        %v3513 = vmul.f32 %v3510, %v3512
        %v3514 = vadd.f32 %v3510, %v3513
        %vm3515 = vweird.f32 %v3509
        %vm3516 = vweird.f32 %v3510
        %vm3517 = vmor %vm3515, %vm3516
        %v3518 = vsel %vm3517, %v3510, %v3514
        %v3519 = vand.u32 2147483647, %v3509
        %vm3520 = vcmp.eq.f32.partialorder %v3519, 8.507059e+37
        %v3521 = vand.u32 %v3509, 2147483648
        %v3522 = vor.u32 1.1754944e-38, %v3521
        %v3523 = vsel %vm3520, %v3522, %v3518
        %v3524 = vmul.f32 1.0, %v3523
        %v3525 = vxor.u32 %v3425, 2147483648
        %v3526 = vmul.f32 %v3525, 1.442695
        %v3527 = vpow.pop %v3526
        %v3528 = vadd.f32 %v3527, 1.0
        %v3529 = vrcp.pop %v3528
        %v3530 = vmul.f32 %v3528, %v3529
        %v3531 = vsub.f32 1.0, %v3530
        %v3532 = vmul.f32 %v3529, %v3531
        %v3533 = vadd.f32 %v3529, %v3532
        %vm3534 = vweird.f32 %v3528
        %vm3535 = vweird.f32 %v3529
        %vm3536 = vmor %vm3534, %vm3535
        %v3537 = vsel %vm3536, %v3529, %v3533
        %v3538 = vand.u32 2147483647, %v3528
        %vm3539 = vcmp.eq.f32.partialorder %v3538, 8.507059e+37
        %v3540 = vand.u32 %v3528, 2147483648
        %v3541 = vor.u32 1.1754944e-38, %v3540
        %v3542 = vsel %vm3539, %v3541, %v3537
        %v3543 = vmul.f32 1.0, %v3542
        %v3544 = vtanh.pop %v3464
        %v3545 = vxor.u32 %v3503, 2147483648
        %v3546 = vmul.f32 %v3545, 1.442695
        %v3547 = vpow.pop %v3546
        %v3548 = vadd.f32 %v3547, 1.0
        %v3549 = vrcp.pop %v3548
        %v3550 = vmul.f32 %v3548, %v3549
        %v3551 = vsub.f32 1.0, %v3550
        %v3552 = vmul.f32 %v3549, %v3551
        %v3553 = vadd.f32 %v3549, %v3552
        %vm3554 = vweird.f32 %v3548
        %vm3555 = vweird.f32 %v3549
        %vm3556 = vmor %vm3554, %vm3555
        %v3557 = vsel %vm3556, %v3549, %v3553
        %v3558 = vand.u32 2147483647, %v3548
        %vm3559 = vcmp.eq.f32.partialorder %v3558, 8.507059e+37
        %v3560 = vand.u32 %v3548, 2147483648
        %v3561 = vor.u32 1.1754944e-38, %v3560
        %v3562 = vsel %vm3559, %v3561, %v3557
        %v3563 = vmul.f32 1.0, %v3562
        %v3564 = vmul.f32 %v3543, %v3291
        %v3565 = vmul.f32 %v3524, %v3544
        %v3566 = vadd.f32 %v3564, %v3565
        %v3567 = vtanh.pop %v3566
        %v3568 = vmul.f32 %v3563, %v3567
        %v3569 = vpack.c.bf16 %v3568, %v3568
        %3570 = vmatpush.bf16.xpose.msra.mxu0 %v2470
        %3571 = vmatpush.bf16.xpose.msra.mxu0 %v2469
        %3572 = vmatpush.bf16.xpose.msra.mxu0 %v2468
        %3573 = vmatpush.bf16.xpose.msra.mxu0 %v2467
        %3574 = vmatpush.bf16.xpose.msra.mxu0 %v2466
        %3575 = vmatpush.bf16.xpose.msra.mxu0 %v2465
        %3576 = vmatpush.bf16.xpose.msra.mxu0 %v2464
        %3577 = vmatpush.bf16.xpose.msra.mxu0 %v2463
        %3578 = vmatmul.bf16.gmra.mxu0 %v3569
        %v3579 = vpop.f32.mrf.mxu0
        %v3580 = vadd.f32 %v2473, %v3579
        %v3581 = vpop.f32.mrf.mxu0
        %3582 = vdwg.mxu0
        %3583 = vmax.xlane.f32.xlu0 %v3580
        %v3584 = vpop.xlane.xlu0 %3583
        %v3585 = vsub.f32 %v3580, %v3584
        %v3586 = vmul.f32 %v3585, 1.442695
        %v3587 = vpow.pop %v3586
        %v3588 = vmul.f32 %v3587, %v2471
        %3589 = vadd.xlane.f32.xlu0 %v3588
        %v3590 = vpop.xlane.xlu0 %3589
        %v3591 = vmax.f32 %v3590, 1e-20
        %v3592 = vrcp.pop %v3591
        %v3593 = vmul.f32 %v3588, %v3592
        %v3594 = vpack.c.bf16 %v3593, %v3593
        %3595 = vmatpush.bf16.msra.mxu0 %v2470
        %3596 = vmatpush.bf16.msra.mxu0 %v2469
        %3597 = vmatpush.bf16.msra.mxu0 %v2468
        %3598 = vmatpush.bf16.msra.mxu0 %v2467
        %3599 = vmatpush.bf16.msra.mxu0 %v2466
        %3600 = vmatpush.bf16.msra.mxu0 %v2465
        %3601 = vmatpush.bf16.msra.mxu0 %v2464
        %3602 = vmatpush.bf16.msra.mxu0 %v2463
        %3603 = vmatmul.bf16.gmra.mxu0 %v3594
        %v3604 = vpop.f32.mrf.mxu0
        %v3605 = vadd.f32 0.0, %v3604
        %v3606 = vpop.f32.mrf.mxu0
        %3607 = vdwg.mxu0
        %3608 = vst [vmem:[#allocation2] sm:$0xf] %v3569
        %v3609 = vpack.c.bf16 %v3605, %v3605
        %3610 = vst [vmem:[#allocation2 + $0x4] sm:$0xf] %v3609
        %3611 = vst [vmem:[#allocation2 + $0x8] sm:$0xf] %v3569
        %v3612 = vld [vmem:[#allocation2] sm:$0xff]
        %v3613 = vld [vmem:[#allocation2 + $0x8] sm:$0xf]
        %v3616 = vunpack.c.l.b16 %v3612
        %v3617 = vunpack.c.h.b16 %v3612
        %v3618 = vunpack.c.l.b16 %v3613
        %v3619 = vpack.c.b16 %v3616, %v3616
        %v3620 = vpack.c.b16 %v3617, %v3617
        %v3621 = vpack.c.b16 %v3618, %v3618
        %3625 = vmatpush.bf16.msra.mxu0 %v2911
        %3626 = vmatpush.bf16.msra.mxu0 %v2907
        %3627 = vmatpush.bf16.msra.mxu0 %v2903
        %3628 = vmatpush.bf16.msra.mxu0 %v2899
        %3629 = vmatpush.bf16.msra.mxu0 %v2895
        %3630 = vmatpush.bf16.msra.mxu0 %v2891
        %3631 = vmatpush.bf16.msra.mxu0 %v2887
        %3632 = vmatpush.bf16.msra.mxu0 %v2883
        %3633 = vmatmul.bf16.gmra.mxu0 %v3619
        %v3634 = vpop.f32.mrf.mxu0
        %v3635 = vadd.f32 %v2576, %v3634
        %v3636 = vpop.f32.mrf.mxu0
        %3637 = vdwg.mxu0
        %3638 = vmatpush.bf16.msra.mxu0 %v2943
        %3639 = vmatpush.bf16.msra.mxu0 %v2939
        %3640 = vmatpush.bf16.msra.mxu0 %v2935
        %3641 = vmatpush.bf16.msra.mxu0 %v2931
        %3642 = vmatpush.bf16.msra.mxu0 %v2927
        %3643 = vmatpush.bf16.msra.mxu0 %v2923
        %3644 = vmatpush.bf16.msra.mxu0 %v2919
        %3645 = vmatpush.bf16.msra.mxu0 %v2915
        %3646 = vmatmul.bf16.gmra.mxu0 %v3620
        %v3647 = vpop.f32.mrf.mxu0
        %v3648 = vadd.f32 %v3635, %v3647
        %v3649 = vpop.f32.mrf.mxu0
        %3650 = vdwg.mxu0
        %3651 = vmatpush.bf16.msra.mxu0 %v2975
        %3652 = vmatpush.bf16.msra.mxu0 %v2971
        %3653 = vmatpush.bf16.msra.mxu0 %v2967
        %3654 = vmatpush.bf16.msra.mxu0 %v2963
        %3655 = vmatpush.bf16.msra.mxu0 %v2959
        %3656 = vmatpush.bf16.msra.mxu0 %v2955
        %3657 = vmatpush.bf16.msra.mxu0 %v2951
        %3658 = vmatpush.bf16.msra.mxu0 %v2947
        %3659 = vmatmul.bf16.gmra.mxu0 %v3621
        %v3660 = vpop.f32.mrf.mxu0
        %v3661 = vadd.f32 %v3648, %v3660
        %v3662 = vpop.f32.mrf.mxu0
        %3663 = vdwg.mxu0
        %3664 = vmatpush.bf16.msra.mxu0 %v2912
        %3665 = vmatpush.bf16.msra.mxu0 %v2908
        %3666 = vmatpush.bf16.msra.mxu0 %v2904
        %3667 = vmatpush.bf16.msra.mxu0 %v2900
        %3668 = vmatpush.bf16.msra.mxu0 %v2896
        %3669 = vmatpush.bf16.msra.mxu0 %v2892
        %3670 = vmatpush.bf16.msra.mxu0 %v2888
        %3671 = vmatpush.bf16.msra.mxu0 %v2884
        %3672 = vmatmul.bf16.gmra.mxu0 %v3619
        %v3673 = vpop.f32.mrf.mxu0
        %v3674 = vadd.f32 %v2577, %v3673
        %v3675 = vpop.f32.mrf.mxu0
        %3676 = vdwg.mxu0
        %3677 = vmatpush.bf16.msra.mxu0 %v2944
        %3678 = vmatpush.bf16.msra.mxu0 %v2940
        %3679 = vmatpush.bf16.msra.mxu0 %v2936
        %3680 = vmatpush.bf16.msra.mxu0 %v2932
        %3681 = vmatpush.bf16.msra.mxu0 %v2928
        %3682 = vmatpush.bf16.msra.mxu0 %v2924
        %3683 = vmatpush.bf16.msra.mxu0 %v2920
        %3684 = vmatpush.bf16.msra.mxu0 %v2916
        %3685 = vmatmul.bf16.gmra.mxu0 %v3620
        %v3686 = vpop.f32.mrf.mxu0
        %v3687 = vadd.f32 %v3674, %v3686
        %v3688 = vpop.f32.mrf.mxu0
        %3689 = vdwg.mxu0
        %3690 = vmatpush.bf16.msra.mxu0 %v2976
        %3691 = vmatpush.bf16.msra.mxu0 %v2972
        %3692 = vmatpush.bf16.msra.mxu0 %v2968
        %3693 = vmatpush.bf16.msra.mxu0 %v2964
        %3694 = vmatpush.bf16.msra.mxu0 %v2960
        %3695 = vmatpush.bf16.msra.mxu0 %v2956
        %3696 = vmatpush.bf16.msra.mxu0 %v2952
        %3697 = vmatpush.bf16.msra.mxu0 %v2948
        %3698 = vmatmul.bf16.gmra.mxu0 %v3621
        %v3699 = vpop.f32.mrf.mxu0
        %v3700 = vadd.f32 %v3687, %v3699
        %v3701 = vpop.f32.mrf.mxu0
        %3702 = vdwg.mxu0
        %3703 = vmatpush.bf16.msra.mxu0 %v2913
        %3704 = vmatpush.bf16.msra.mxu0 %v2909
        %3705 = vmatpush.bf16.msra.mxu0 %v2905
        %3706 = vmatpush.bf16.msra.mxu0 %v2901
        %3707 = vmatpush.bf16.msra.mxu0 %v2897
        %3708 = vmatpush.bf16.msra.mxu0 %v2893
        %3709 = vmatpush.bf16.msra.mxu0 %v2889
        %3710 = vmatpush.bf16.msra.mxu0 %v2885
        %3711 = vmatmul.bf16.gmra.mxu0 %v3619
        %v3712 = vpop.f32.mrf.mxu0
        %v3713 = vadd.f32 %v2578, %v3712
        %v3714 = vpop.f32.mrf.mxu0
        %3715 = vdwg.mxu0
        %3716 = vmatpush.bf16.msra.mxu0 %v2945
        %3717 = vmatpush.bf16.msra.mxu0 %v2941
        %3718 = vmatpush.bf16.msra.mxu0 %v2937
        %3719 = vmatpush.bf16.msra.mxu0 %v2933
        %3720 = vmatpush.bf16.msra.mxu0 %v2929
        %3721 = vmatpush.bf16.msra.mxu0 %v2925
        %3722 = vmatpush.bf16.msra.mxu0 %v2921
        %3723 = vmatpush.bf16.msra.mxu0 %v2917
        %3724 = vmatmul.bf16.gmra.mxu0 %v3620
        %v3725 = vpop.f32.mrf.mxu0
        %v3726 = vadd.f32 %v3713, %v3725
        %v3727 = vpop.f32.mrf.mxu0
        %3728 = vdwg.mxu0
        %3729 = vmatpush.bf16.msra.mxu0 %v2977
        %3730 = vmatpush.bf16.msra.mxu0 %v2973
        %3731 = vmatpush.bf16.msra.mxu0 %v2969
        %3732 = vmatpush.bf16.msra.mxu0 %v2965
        %3733 = vmatpush.bf16.msra.mxu0 %v2961
        %3734 = vmatpush.bf16.msra.mxu0 %v2957
        %3735 = vmatpush.bf16.msra.mxu0 %v2953
        %3736 = vmatpush.bf16.msra.mxu0 %v2949
        %3737 = vmatmul.bf16.gmra.mxu0 %v3621
        %v3738 = vpop.f32.mrf.mxu0
        %v3739 = vadd.f32 %v3726, %v3738
        %v3740 = vpop.f32.mrf.mxu0
        %3741 = vdwg.mxu0
        %3742 = vmatpush.bf16.msra.mxu0 %v2914
        %3743 = vmatpush.bf16.msra.mxu0 %v2910
        %3744 = vmatpush.bf16.msra.mxu0 %v2906
        %3745 = vmatpush.bf16.msra.mxu0 %v2902
        %3746 = vmatpush.bf16.msra.mxu0 %v2898
        %3747 = vmatpush.bf16.msra.mxu0 %v2894
        %3748 = vmatpush.bf16.msra.mxu0 %v2890
        %3749 = vmatpush.bf16.msra.mxu0 %v2886
        %3750 = vmatmul.bf16.gmra.mxu0 %v3619
        %v3751 = vpop.f32.mrf.mxu0
        %v3752 = vadd.f32 %v2579, %v3751
        %v3753 = vpop.f32.mrf.mxu0
        %3754 = vdwg.mxu0
        %3755 = vmatpush.bf16.msra.mxu0 %v2946
        %3756 = vmatpush.bf16.msra.mxu0 %v2942
        %3757 = vmatpush.bf16.msra.mxu0 %v2938
        %3758 = vmatpush.bf16.msra.mxu0 %v2934
        %3759 = vmatpush.bf16.msra.mxu0 %v2930
        %3760 = vmatpush.bf16.msra.mxu0 %v2926
        %3761 = vmatpush.bf16.msra.mxu0 %v2922
        %3762 = vmatpush.bf16.msra.mxu0 %v2918
        %3763 = vmatmul.bf16.gmra.mxu0 %v3620
        %v3764 = vpop.f32.mrf.mxu0
        %v3765 = vadd.f32 %v3752, %v3764
        %v3766 = vpop.f32.mrf.mxu0
        %3767 = vdwg.mxu0
        %3768 = vmatpush.bf16.msra.mxu0 %v2978
        %3769 = vmatpush.bf16.msra.mxu0 %v2974
        %3770 = vmatpush.bf16.msra.mxu0 %v2970
        %3771 = vmatpush.bf16.msra.mxu0 %v2966
        %3772 = vmatpush.bf16.msra.mxu0 %v2962
        %3773 = vmatpush.bf16.msra.mxu0 %v2958
        %3774 = vmatpush.bf16.msra.mxu0 %v2954
        %3775 = vmatpush.bf16.msra.mxu0 %v2950
        %3776 = vmatmul.bf16.gmra.mxu0 %v3621
        %v3777 = vpop.f32.mrf.mxu0
        %v3778 = vadd.f32 %v3765, %v3777
        %v3779 = vpop.f32.mrf.mxu0
        %3780 = vdwg.mxu0
        %v3781 = vxor.u32 %v3661, 2147483648
        %v3782 = vmul.f32 %v3781, 1.442695
        %v3783 = vpow.pop %v3782
        %v3784 = vadd.f32 %v3783, 1.0
        %v3785 = vrcp.pop %v3784
        %v3786 = vmul.f32 %v3784, %v3785
        %v3787 = vsub.f32 1.0, %v3786
        %v3788 = vmul.f32 %v3785, %v3787
        %v3789 = vadd.f32 %v3785, %v3788
        %vm3790 = vweird.f32 %v3784
        %vm3791 = vweird.f32 %v3785
        %vm3792 = vmor %vm3790, %vm3791
        %v3793 = vsel %vm3792, %v3785, %v3789
        %v3794 = vand.u32 2147483647, %v3784
        %vm3795 = vcmp.eq.f32.partialorder %v3794, 8.507059e+37
        %v3796 = vand.u32 %v3784, 2147483648
        %v3797 = vor.u32 1.1754944e-38, %v3796
        %v3798 = vsel %vm3795, %v3797, %v3793
        %v3799 = vmul.f32 1.0, %v3798
        %v3800 = vxor.u32 %v3700, 2147483648
        %v3801 = vmul.f32 %v3800, 1.442695
        %v3802 = vpow.pop %v3801
        %v3803 = vadd.f32 %v3802, 1.0
        %v3804 = vrcp.pop %v3803
        %v3805 = vmul.f32 %v3803, %v3804
        %v3806 = vsub.f32 1.0, %v3805
        %v3807 = vmul.f32 %v3804, %v3806
        %v3808 = vadd.f32 %v3804, %v3807
        %vm3809 = vweird.f32 %v3803
        %vm3810 = vweird.f32 %v3804
        %vm3811 = vmor %vm3809, %vm3810
        %v3812 = vsel %vm3811, %v3804, %v3808
        %v3813 = vand.u32 2147483647, %v3803
        %vm3814 = vcmp.eq.f32.partialorder %v3813, 8.507059e+37
        %v3815 = vand.u32 %v3803, 2147483648
        %v3816 = vor.u32 1.1754944e-38, %v3815
        %v3817 = vsel %vm3814, %v3816, %v3812
        %v3818 = vmul.f32 1.0, %v3817
        %v3819 = vtanh.pop %v3739
        %v3820 = vxor.u32 %v3778, 2147483648
        %v3821 = vmul.f32 %v3820, 1.442695
        %v3822 = vpow.pop %v3821
        %v3823 = vadd.f32 %v3822, 1.0
        %v3824 = vrcp.pop %v3823
        %v3825 = vmul.f32 %v3823, %v3824
        %v3826 = vsub.f32 1.0, %v3825
        %v3827 = vmul.f32 %v3824, %v3826
        %v3828 = vadd.f32 %v3824, %v3827
        %vm3829 = vweird.f32 %v3823
        %vm3830 = vweird.f32 %v3824
        %vm3831 = vmor %vm3829, %vm3830
        %v3832 = vsel %vm3831, %v3824, %v3828
        %v3833 = vand.u32 2147483647, %v3823
        %vm3834 = vcmp.eq.f32.partialorder %v3833, 8.507059e+37
        %v3835 = vand.u32 %v3823, 2147483648
        %v3836 = vor.u32 1.1754944e-38, %v3835
        %v3837 = vsel %vm3834, %v3836, %v3832
        %v3838 = vmul.f32 1.0, %v3837
        %v3839 = vmul.f32 %v3818, %v3566
        %v3840 = vmul.f32 %v3799, %v3819
        %v3841 = vadd.f32 %v3839, %v3840
        %v3842 = vtanh.pop %v3841
        %v3843 = vmul.f32 %v3838, %v3842
        %v3844 = vpack.c.bf16 %v3843, %v3843
        %3845 = vmatpush.bf16.xpose.msra.mxu0 %v2470
        %3846 = vmatpush.bf16.xpose.msra.mxu0 %v2469
        %3847 = vmatpush.bf16.xpose.msra.mxu0 %v2468
        %3848 = vmatpush.bf16.xpose.msra.mxu0 %v2467
        %3849 = vmatpush.bf16.xpose.msra.mxu0 %v2466
        %3850 = vmatpush.bf16.xpose.msra.mxu0 %v2465
        %3851 = vmatpush.bf16.xpose.msra.mxu0 %v2464
        %3852 = vmatpush.bf16.xpose.msra.mxu0 %v2463
        %3853 = vmatmul.bf16.gmra.mxu0 %v3844
        %v3854 = vpop.f32.mrf.mxu0
        %v3855 = vadd.f32 %v2473, %v3854
        %v3856 = vpop.f32.mrf.mxu0
        %3857 = vdwg.mxu0
        %3858 = vmax.xlane.f32.xlu0 %v3855
        %v3859 = vpop.xlane.xlu0 %3858
        %v3860 = vsub.f32 %v3855, %v3859
        %v3861 = vmul.f32 %v3860, 1.442695
        %v3862 = vpow.pop %v3861
        %v3863 = vmul.f32 %v3862, %v2471
        %3864 = vadd.xlane.f32.xlu0 %v3863
        %v3865 = vpop.xlane.xlu0 %3864
        %v3866 = vmax.f32 %v3865, 1e-20
        %v3867 = vrcp.pop %v3866
        %v3868 = vmul.f32 %v3863, %v3867
        %v3869 = vpack.c.bf16 %v3868, %v3868
        %3870 = vmatpush.bf16.msra.mxu0 %v2470
        %3871 = vmatpush.bf16.msra.mxu0 %v2469
        %3872 = vmatpush.bf16.msra.mxu0 %v2468
        %3873 = vmatpush.bf16.msra.mxu0 %v2467
        %3874 = vmatpush.bf16.msra.mxu0 %v2466
        %3875 = vmatpush.bf16.msra.mxu0 %v2465
        %3876 = vmatpush.bf16.msra.mxu0 %v2464
        %3877 = vmatpush.bf16.msra.mxu0 %v2463
        %3878 = vmatmul.bf16.gmra.mxu0 %v3869
        %v3879 = vpop.f32.mrf.mxu0
        %v3880 = vadd.f32 0.0, %v3879
        %v3881 = vpop.f32.mrf.mxu0
        %3882 = vdwg.mxu0
        %3883 = vst [vmem:[#allocation2] sm:$0xf] %v3844
        %v3884 = vpack.c.bf16 %v3880, %v3880
        %3885 = vst [vmem:[#allocation2 + $0x4] sm:$0xf] %v3884
        %3886 = vst [vmem:[#allocation2 + $0x8] sm:$0xf] %v3844
        %v3887 = vld [vmem:[#allocation2] sm:$0xff]
        %v3888 = vld [vmem:[#allocation2 + $0x8] sm:$0xf]
        %v3891 = vunpack.c.l.b16 %v3887
        %v3892 = vunpack.c.h.b16 %v3887
        %v3893 = vunpack.c.l.b16 %v3888
        %v3894 = vpack.c.b16 %v3891, %v3891
        %v3895 = vpack.c.b16 %v3892, %v3892
        %v3896 = vpack.c.b16 %v3893, %v3893
        %3900 = vmatpush.bf16.msra.mxu0 %v2911
        %3901 = vmatpush.bf16.msra.mxu0 %v2907
        %3902 = vmatpush.bf16.msra.mxu0 %v2903
        %3903 = vmatpush.bf16.msra.mxu0 %v2899
        %3904 = vmatpush.bf16.msra.mxu0 %v2895
        %3905 = vmatpush.bf16.msra.mxu0 %v2891
        %3906 = vmatpush.bf16.msra.mxu0 %v2887
        %3907 = vmatpush.bf16.msra.mxu0 %v2883
        %3908 = vmatmul.bf16.gmra.mxu0 %v3894
        %v3909 = vpop.f32.mrf.mxu0
        %v3910 = vadd.f32 %v2576, %v3909
        %v3911 = vpop.f32.mrf.mxu0
        %3912 = vdwg.mxu0
        %3913 = vmatpush.bf16.msra.mxu0 %v2943
        %3914 = vmatpush.bf16.msra.mxu0 %v2939
        %3915 = vmatpush.bf16.msra.mxu0 %v2935
        %3916 = vmatpush.bf16.msra.mxu0 %v2931
        %3917 = vmatpush.bf16.msra.mxu0 %v2927
        %3918 = vmatpush.bf16.msra.mxu0 %v2923
        %3919 = vmatpush.bf16.msra.mxu0 %v2919
        %3920 = vmatpush.bf16.msra.mxu0 %v2915
        %3921 = vmatmul.bf16.gmra.mxu0 %v3895
        %v3922 = vpop.f32.mrf.mxu0
        %v3923 = vadd.f32 %v3910, %v3922
        %v3924 = vpop.f32.mrf.mxu0
        %3925 = vdwg.mxu0
        %3926 = vmatpush.bf16.msra.mxu0 %v2975
        %3927 = vmatpush.bf16.msra.mxu0 %v2971
        %3928 = vmatpush.bf16.msra.mxu0 %v2967
        %3929 = vmatpush.bf16.msra.mxu0 %v2963
        %3930 = vmatpush.bf16.msra.mxu0 %v2959
        %3931 = vmatpush.bf16.msra.mxu0 %v2955
        %3932 = vmatpush.bf16.msra.mxu0 %v2951
        %3933 = vmatpush.bf16.msra.mxu0 %v2947
        %3934 = vmatmul.bf16.gmra.mxu0 %v3896
        %v3935 = vpop.f32.mrf.mxu0
        %v3936 = vadd.f32 %v3923, %v3935
        %v3937 = vpop.f32.mrf.mxu0
        %3938 = vdwg.mxu0
        %3939 = vmatpush.bf16.msra.mxu0 %v2912
        %3940 = vmatpush.bf16.msra.mxu0 %v2908
        %3941 = vmatpush.bf16.msra.mxu0 %v2904
        %3942 = vmatpush.bf16.msra.mxu0 %v2900
        %3943 = vmatpush.bf16.msra.mxu0 %v2896
        %3944 = vmatpush.bf16.msra.mxu0 %v2892
        %3945 = vmatpush.bf16.msra.mxu0 %v2888
        %3946 = vmatpush.bf16.msra.mxu0 %v2884
        %3947 = vmatmul.bf16.gmra.mxu0 %v3894
        %v3948 = vpop.f32.mrf.mxu0
        %v3949 = vadd.f32 %v2577, %v3948
        %v3950 = vpop.f32.mrf.mxu0
        %3951 = vdwg.mxu0
        %3952 = vmatpush.bf16.msra.mxu0 %v2944
        %3953 = vmatpush.bf16.msra.mxu0 %v2940
        %3954 = vmatpush.bf16.msra.mxu0 %v2936
        %3955 = vmatpush.bf16.msra.mxu0 %v2932
        %3956 = vmatpush.bf16.msra.mxu0 %v2928
        %3957 = vmatpush.bf16.msra.mxu0 %v2924
        %3958 = vmatpush.bf16.msra.mxu0 %v2920
        %3959 = vmatpush.bf16.msra.mxu0 %v2916
        %3960 = vmatmul.bf16.gmra.mxu0 %v3895
        %v3961 = vpop.f32.mrf.mxu0
        %v3962 = vadd.f32 %v3949, %v3961
        %v3963 = vpop.f32.mrf.mxu0
        %3964 = vdwg.mxu0
        %3965 = vmatpush.bf16.msra.mxu0 %v2976
        %3966 = vmatpush.bf16.msra.mxu0 %v2972
        %3967 = vmatpush.bf16.msra.mxu0 %v2968
        %3968 = vmatpush.bf16.msra.mxu0 %v2964
        %3969 = vmatpush.bf16.msra.mxu0 %v2960
        %3970 = vmatpush.bf16.msra.mxu0 %v2956
        %3971 = vmatpush.bf16.msra.mxu0 %v2952
        %3972 = vmatpush.bf16.msra.mxu0 %v2948
        %3973 = vmatmul.bf16.gmra.mxu0 %v3896
        %v3974 = vpop.f32.mrf.mxu0
        %v3975 = vadd.f32 %v3962, %v3974
        %v3976 = vpop.f32.mrf.mxu0
        %3977 = vdwg.mxu0
        %3978 = vmatpush.bf16.msra.mxu0 %v2913
        %3979 = vmatpush.bf16.msra.mxu0 %v2909
        %3980 = vmatpush.bf16.msra.mxu0 %v2905
        %3981 = vmatpush.bf16.msra.mxu0 %v2901
        %3982 = vmatpush.bf16.msra.mxu0 %v2897
        %3983 = vmatpush.bf16.msra.mxu0 %v2893
        %3984 = vmatpush.bf16.msra.mxu0 %v2889
        %3985 = vmatpush.bf16.msra.mxu0 %v2885
        %3986 = vmatmul.bf16.gmra.mxu0 %v3894
        %v3987 = vpop.f32.mrf.mxu0
        %v3988 = vadd.f32 %v2578, %v3987
        %v3989 = vpop.f32.mrf.mxu0
        %3990 = vdwg.mxu0
        %3991 = vmatpush.bf16.msra.mxu0 %v2945
        %3992 = vmatpush.bf16.msra.mxu0 %v2941
        %3993 = vmatpush.bf16.msra.mxu0 %v2937
        %3994 = vmatpush.bf16.msra.mxu0 %v2933
        %3995 = vmatpush.bf16.msra.mxu0 %v2929
        %3996 = vmatpush.bf16.msra.mxu0 %v2925
        %3997 = vmatpush.bf16.msra.mxu0 %v2921
        %3998 = vmatpush.bf16.msra.mxu0 %v2917
        %3999 = vmatmul.bf16.gmra.mxu0 %v3895
        %v4000 = vpop.f32.mrf.mxu0
        %v4001 = vadd.f32 %v3988, %v4000
        %v4002 = vpop.f32.mrf.mxu0
        %4003 = vdwg.mxu0
        %4004 = vmatpush.bf16.msra.mxu0 %v2977
        %4005 = vmatpush.bf16.msra.mxu0 %v2973
        %4006 = vmatpush.bf16.msra.mxu0 %v2969
        %4007 = vmatpush.bf16.msra.mxu0 %v2965
        %4008 = vmatpush.bf16.msra.mxu0 %v2961
        %4009 = vmatpush.bf16.msra.mxu0 %v2957
        %4010 = vmatpush.bf16.msra.mxu0 %v2953
        %4011 = vmatpush.bf16.msra.mxu0 %v2949
        %4012 = vmatmul.bf16.gmra.mxu0 %v3896
        %v4013 = vpop.f32.mrf.mxu0
        %v4014 = vadd.f32 %v4001, %v4013
        %v4015 = vpop.f32.mrf.mxu0
        %4016 = vdwg.mxu0
        %4017 = vmatpush.bf16.msra.mxu0 %v2914
        %4018 = vmatpush.bf16.msra.mxu0 %v2910
        %4019 = vmatpush.bf16.msra.mxu0 %v2906
        %4020 = vmatpush.bf16.msra.mxu0 %v2902
        %4021 = vmatpush.bf16.msra.mxu0 %v2898
        %4022 = vmatpush.bf16.msra.mxu0 %v2894
        %4023 = vmatpush.bf16.msra.mxu0 %v2890
        %4024 = vmatpush.bf16.msra.mxu0 %v2886
        %4025 = vmatmul.bf16.gmra.mxu0 %v3894
        %v4026 = vpop.f32.mrf.mxu0
        %v4027 = vadd.f32 %v2579, %v4026
        %v4028 = vpop.f32.mrf.mxu0
        %4029 = vdwg.mxu0
        %4030 = vmatpush.bf16.msra.mxu0 %v2946
        %4031 = vmatpush.bf16.msra.mxu0 %v2942
        %4032 = vmatpush.bf16.msra.mxu0 %v2938
        %4033 = vmatpush.bf16.msra.mxu0 %v2934
        %4034 = vmatpush.bf16.msra.mxu0 %v2930
        %4035 = vmatpush.bf16.msra.mxu0 %v2926
        %4036 = vmatpush.bf16.msra.mxu0 %v2922
        %4037 = vmatpush.bf16.msra.mxu0 %v2918
        %4038 = vmatmul.bf16.gmra.mxu0 %v3895
        %v4039 = vpop.f32.mrf.mxu0
        %v4040 = vadd.f32 %v4027, %v4039
        %v4041 = vpop.f32.mrf.mxu0
        %4042 = vdwg.mxu0
        %4043 = vmatpush.bf16.msra.mxu0 %v2978
        %4044 = vmatpush.bf16.msra.mxu0 %v2974
        %4045 = vmatpush.bf16.msra.mxu0 %v2970
        %4046 = vmatpush.bf16.msra.mxu0 %v2966
        %4047 = vmatpush.bf16.msra.mxu0 %v2962
        %4048 = vmatpush.bf16.msra.mxu0 %v2958
        %4049 = vmatpush.bf16.msra.mxu0 %v2954
        %4050 = vmatpush.bf16.msra.mxu0 %v2950
        %4051 = vmatmul.bf16.gmra.mxu0 %v3896
        %v4052 = vpop.f32.mrf.mxu0
        %v4053 = vadd.f32 %v4040, %v4052
        %v4054 = vpop.f32.mrf.mxu0
        %4055 = vdwg.mxu0
        %v4056 = vxor.u32 %v3936, 2147483648
        %v4057 = vmul.f32 %v4056, 1.442695
        %v4058 = vpow.pop %v4057
        %v4059 = vadd.f32 %v4058, 1.0
        %v4060 = vrcp.pop %v4059
        %v4061 = vmul.f32 %v4059, %v4060
        %v4062 = vsub.f32 1.0, %v4061
        %v4063 = vmul.f32 %v4060, %v4062
        %v4064 = vadd.f32 %v4060, %v4063
        %vm4065 = vweird.f32 %v4059
        %vm4066 = vweird.f32 %v4060
        %vm4067 = vmor %vm4065, %vm4066
        %v4068 = vsel %vm4067, %v4060, %v4064
        %v4069 = vand.u32 2147483647, %v4059
        %vm4070 = vcmp.eq.f32.partialorder %v4069, 8.507059e+37
        %v4071 = vand.u32 %v4059, 2147483648
        %v4072 = vor.u32 1.1754944e-38, %v4071
        %v4073 = vsel %vm4070, %v4072, %v4068
        %v4074 = vmul.f32 1.0, %v4073
        %v4075 = vxor.u32 %v3975, 2147483648
        %v4076 = vmul.f32 %v4075, 1.442695
        %v4077 = vpow.pop %v4076
        %v4078 = vadd.f32 %v4077, 1.0
        %v4079 = vrcp.pop %v4078
        %v4080 = vmul.f32 %v4078, %v4079
        %v4081 = vsub.f32 1.0, %v4080
        %v4082 = vmul.f32 %v4079, %v4081
        %v4083 = vadd.f32 %v4079, %v4082
        %vm4084 = vweird.f32 %v4078
        %vm4085 = vweird.f32 %v4079
        %vm4086 = vmor %vm4084, %vm4085
        %v4087 = vsel %vm4086, %v4079, %v4083
        %v4088 = vand.u32 2147483647, %v4078
        %vm4089 = vcmp.eq.f32.partialorder %v4088, 8.507059e+37
        %v4090 = vand.u32 %v4078, 2147483648
        %v4091 = vor.u32 1.1754944e-38, %v4090
        %v4092 = vsel %vm4089, %v4091, %v4087
        %v4093 = vmul.f32 1.0, %v4092
        %v4094 = vtanh.pop %v4014
        %v4095 = vxor.u32 %v4053, 2147483648
        %v4096 = vmul.f32 %v4095, 1.442695
        %v4097 = vpow.pop %v4096
        %v4098 = vadd.f32 %v4097, 1.0
        %v4099 = vrcp.pop %v4098
        %v4100 = vmul.f32 %v4098, %v4099
        %v4101 = vsub.f32 1.0, %v4100
        %v4102 = vmul.f32 %v4099, %v4101
        %v4103 = vadd.f32 %v4099, %v4102
        %vm4104 = vweird.f32 %v4098
        %vm4105 = vweird.f32 %v4099
        %vm4106 = vmor %vm4104, %vm4105
        %v4107 = vsel %vm4106, %v4099, %v4103
        %v4108 = vand.u32 2147483647, %v4098
        %vm4109 = vcmp.eq.f32.partialorder %v4108, 8.507059e+37
        %v4110 = vand.u32 %v4098, 2147483648
        %v4111 = vor.u32 1.1754944e-38, %v4110
        %v4112 = vsel %vm4109, %v4111, %v4107
        %v4113 = vmul.f32 1.0, %v4112
        %v4114 = vmul.f32 %v4093, %v3841
        %v4115 = vmul.f32 %v4074, %v4094
        %v4116 = vadd.f32 %v4114, %v4115
        %v4117 = vtanh.pop %v4116
        %v4118 = vmul.f32 %v4113, %v4117
        %v4119 = vpack.c.bf16 %v4118, %v4118
        %4120 = vmatpush.bf16.xpose.msra.mxu0 %v2470
        %4121 = vmatpush.bf16.xpose.msra.mxu0 %v2469
        %4122 = vmatpush.bf16.xpose.msra.mxu0 %v2468
        %4123 = vmatpush.bf16.xpose.msra.mxu0 %v2467
        %4124 = vmatpush.bf16.xpose.msra.mxu0 %v2466
        %4125 = vmatpush.bf16.xpose.msra.mxu0 %v2465
        %4126 = vmatpush.bf16.xpose.msra.mxu0 %v2464
        %4127 = vmatpush.bf16.xpose.msra.mxu0 %v2463
        %4128 = vmatmul.bf16.gmra.mxu0 %v4119
        %v4129 = vpop.f32.mrf.mxu0
        %v4130 = vadd.f32 %v2473, %v4129
        %v4131 = vpop.f32.mrf.mxu0
        %4132 = vdwg.mxu0
        %4133 = vmax.xlane.f32.xlu0 %v4130
        %v4134 = vpop.xlane.xlu0 %4133
        %v4135 = vsub.f32 %v4130, %v4134
        %v4136 = vmul.f32 %v4135, 1.442695
        %v4137 = vpow.pop %v4136
        %v4138 = vmul.f32 %v4137, %v2471
        %4139 = vadd.xlane.f32.xlu0 %v4138
        %v4140 = vpop.xlane.xlu0 %4139
        %v4141 = vmax.f32 %v4140, 1e-20
        %v4142 = vrcp.pop %v4141
        %v4143 = vmul.f32 %v4138, %v4142
        %v4144 = vpack.c.bf16 %v4143, %v4143
        %4145 = vmatpush.bf16.msra.mxu0 %v2470
        %4146 = vmatpush.bf16.msra.mxu0 %v2469
        %4147 = vmatpush.bf16.msra.mxu0 %v2468
        %4148 = vmatpush.bf16.msra.mxu0 %v2467
        %4149 = vmatpush.bf16.msra.mxu0 %v2466
        %4150 = vmatpush.bf16.msra.mxu0 %v2465
        %4151 = vmatpush.bf16.msra.mxu0 %v2464
        %4152 = vmatpush.bf16.msra.mxu0 %v2463
        %4153 = vmatmul.bf16.gmra.mxu0 %v4144
        %v4154 = vpop.f32.mrf.mxu0
        %v4155 = vadd.f32 0.0, %v4154
        %v4156 = vpop.f32.mrf.mxu0
        %4157 = vdwg.mxu0
        %4158 = vst [vmem:[#allocation2] sm:$0xf] %v4119
        %v4159 = vpack.c.bf16 %v4155, %v4155
        %4160 = vst [vmem:[#allocation2 + $0x4] sm:$0xf] %v4159
        %4161 = vst [vmem:[#allocation2 + $0x8] sm:$0xf] %v4119
        %v4162 = vld [vmem:[#allocation2] sm:$0xff]
        %v4163 = vld [vmem:[#allocation2 + $0x8] sm:$0xf]
        %v4166 = vunpack.c.l.b16 %v4162
        %v4167 = vunpack.c.h.b16 %v4162
        %v4168 = vunpack.c.l.b16 %v4163
        %v4169 = vpack.c.b16 %v4166, %v4166
        %v4170 = vpack.c.b16 %v4167, %v4167
        %v4171 = vpack.c.b16 %v4168, %v4168
        %4175 = vmatpush.bf16.msra.mxu0 %v2911
        %4176 = vmatpush.bf16.msra.mxu0 %v2907
        %4177 = vmatpush.bf16.msra.mxu0 %v2903
        %4178 = vmatpush.bf16.msra.mxu0 %v2899
        %4179 = vmatpush.bf16.msra.mxu0 %v2895
        %4180 = vmatpush.bf16.msra.mxu0 %v2891
        %4181 = vmatpush.bf16.msra.mxu0 %v2887
        %4182 = vmatpush.bf16.msra.mxu0 %v2883
        %4183 = vmatmul.bf16.gmra.mxu0 %v4169
        %v4184 = vpop.f32.mrf.mxu0
        %v4185 = vadd.f32 %v2576, %v4184
        %v4186 = vpop.f32.mrf.mxu0
        %4187 = vdwg.mxu0
        %4188 = vmatpush.bf16.msra.mxu0 %v2943
        %4189 = vmatpush.bf16.msra.mxu0 %v2939
        %4190 = vmatpush.bf16.msra.mxu0 %v2935
        %4191 = vmatpush.bf16.msra.mxu0 %v2931
        %4192 = vmatpush.bf16.msra.mxu0 %v2927
        %4193 = vmatpush.bf16.msra.mxu0 %v2923
        %4194 = vmatpush.bf16.msra.mxu0 %v2919
        %4195 = vmatpush.bf16.msra.mxu0 %v2915
        %4196 = vmatmul.bf16.gmra.mxu0 %v4170
        %v4197 = vpop.f32.mrf.mxu0
        %v4198 = vadd.f32 %v4185, %v4197
        %v4199 = vpop.f32.mrf.mxu0
        %4200 = vdwg.mxu0
        %4201 = vmatpush.bf16.msra.mxu0 %v2975
        %4202 = vmatpush.bf16.msra.mxu0 %v2971
        %4203 = vmatpush.bf16.msra.mxu0 %v2967
        %4204 = vmatpush.bf16.msra.mxu0 %v2963
        %4205 = vmatpush.bf16.msra.mxu0 %v2959
        %4206 = vmatpush.bf16.msra.mxu0 %v2955
        %4207 = vmatpush.bf16.msra.mxu0 %v2951
        %4208 = vmatpush.bf16.msra.mxu0 %v2947
        %4209 = vmatmul.bf16.gmra.mxu0 %v4171
        %v4210 = vpop.f32.mrf.mxu0
        %v4211 = vadd.f32 %v4198, %v4210
        %v4212 = vpop.f32.mrf.mxu0
        %4213 = vdwg.mxu0
        %4214 = vmatpush.bf16.msra.mxu0 %v2912
        %4215 = vmatpush.bf16.msra.mxu0 %v2908
        %4216 = vmatpush.bf16.msra.mxu0 %v2904
        %4217 = vmatpush.bf16.msra.mxu0 %v2900
        %4218 = vmatpush.bf16.msra.mxu0 %v2896
        %4219 = vmatpush.bf16.msra.mxu0 %v2892
        %4220 = vmatpush.bf16.msra.mxu0 %v2888
        %4221 = vmatpush.bf16.msra.mxu0 %v2884
        %4222 = vmatmul.bf16.gmra.mxu0 %v4169
        %v4223 = vpop.f32.mrf.mxu0
        %v4224 = vadd.f32 %v2577, %v4223
        %v4225 = vpop.f32.mrf.mxu0
        %4226 = vdwg.mxu0
        %4227 = vmatpush.bf16.msra.mxu0 %v2944
        %4228 = vmatpush.bf16.msra.mxu0 %v2940
        %4229 = vmatpush.bf16.msra.mxu0 %v2936
        %4230 = vmatpush.bf16.msra.mxu0 %v2932
        %4231 = vmatpush.bf16.msra.mxu0 %v2928
        %4232 = vmatpush.bf16.msra.mxu0 %v2924
        %4233 = vmatpush.bf16.msra.mxu0 %v2920
        %4234 = vmatpush.bf16.msra.mxu0 %v2916
        %4235 = vmatmul.bf16.gmra.mxu0 %v4170
        %v4236 = vpop.f32.mrf.mxu0
        %v4237 = vadd.f32 %v4224, %v4236
        %v4238 = vpop.f32.mrf.mxu0
        %4239 = vdwg.mxu0
        %4240 = vmatpush.bf16.msra.mxu0 %v2976
        %4241 = vmatpush.bf16.msra.mxu0 %v2972
        %4242 = vmatpush.bf16.msra.mxu0 %v2968
        %4243 = vmatpush.bf16.msra.mxu0 %v2964
        %4244 = vmatpush.bf16.msra.mxu0 %v2960
        %4245 = vmatpush.bf16.msra.mxu0 %v2956
        %4246 = vmatpush.bf16.msra.mxu0 %v2952
        %4247 = vmatpush.bf16.msra.mxu0 %v2948
        %4248 = vmatmul.bf16.gmra.mxu0 %v4171
        %v4249 = vpop.f32.mrf.mxu0
        %v4250 = vadd.f32 %v4237, %v4249
        %v4251 = vpop.f32.mrf.mxu0
        %4252 = vdwg.mxu0
        %4253 = vmatpush.bf16.msra.mxu0 %v2913
        %4254 = vmatpush.bf16.msra.mxu0 %v2909
        %4255 = vmatpush.bf16.msra.mxu0 %v2905
        %4256 = vmatpush.bf16.msra.mxu0 %v2901
        %4257 = vmatpush.bf16.msra.mxu0 %v2897
        %4258 = vmatpush.bf16.msra.mxu0 %v2893
        %4259 = vmatpush.bf16.msra.mxu0 %v2889
        %4260 = vmatpush.bf16.msra.mxu0 %v2885
        %4261 = vmatmul.bf16.gmra.mxu0 %v4169
        %v4262 = vpop.f32.mrf.mxu0
        %v4263 = vadd.f32 %v2578, %v4262
        %v4264 = vpop.f32.mrf.mxu0
        %4265 = vdwg.mxu0
        %4266 = vmatpush.bf16.msra.mxu0 %v2945
        %4267 = vmatpush.bf16.msra.mxu0 %v2941
        %4268 = vmatpush.bf16.msra.mxu0 %v2937
        %4269 = vmatpush.bf16.msra.mxu0 %v2933
        %4270 = vmatpush.bf16.msra.mxu0 %v2929
        %4271 = vmatpush.bf16.msra.mxu0 %v2925
        %4272 = vmatpush.bf16.msra.mxu0 %v2921
        %4273 = vmatpush.bf16.msra.mxu0 %v2917
        %4274 = vmatmul.bf16.gmra.mxu0 %v4170
        %v4275 = vpop.f32.mrf.mxu0
        %v4276 = vadd.f32 %v4263, %v4275
        %v4277 = vpop.f32.mrf.mxu0
        %4278 = vdwg.mxu0
        %4279 = vmatpush.bf16.msra.mxu0 %v2977
        %4280 = vmatpush.bf16.msra.mxu0 %v2973
        %4281 = vmatpush.bf16.msra.mxu0 %v2969
        %4282 = vmatpush.bf16.msra.mxu0 %v2965
        %4283 = vmatpush.bf16.msra.mxu0 %v2961
        %4284 = vmatpush.bf16.msra.mxu0 %v2957
        %4285 = vmatpush.bf16.msra.mxu0 %v2953
        %4286 = vmatpush.bf16.msra.mxu0 %v2949
        %4287 = vmatmul.bf16.gmra.mxu0 %v4171
        %v4288 = vpop.f32.mrf.mxu0
        %v4289 = vadd.f32 %v4276, %v4288
        %v4290 = vpop.f32.mrf.mxu0
        %4291 = vdwg.mxu0
        %4292 = vmatpush.bf16.msra.mxu0 %v2914
        %4293 = vmatpush.bf16.msra.mxu0 %v2910
        %4294 = vmatpush.bf16.msra.mxu0 %v2906
        %4295 = vmatpush.bf16.msra.mxu0 %v2902
        %4296 = vmatpush.bf16.msra.mxu0 %v2898
        %4297 = vmatpush.bf16.msra.mxu0 %v2894
        %4298 = vmatpush.bf16.msra.mxu0 %v2890
        %4299 = vmatpush.bf16.msra.mxu0 %v2886
        %4300 = vmatmul.bf16.gmra.mxu0 %v4169
        %v4301 = vpop.f32.mrf.mxu0
        %v4302 = vadd.f32 %v2579, %v4301
        %v4303 = vpop.f32.mrf.mxu0
        %4304 = vdwg.mxu0
        %4305 = vmatpush.bf16.msra.mxu0 %v2946
        %4306 = vmatpush.bf16.msra.mxu0 %v2942
        %4307 = vmatpush.bf16.msra.mxu0 %v2938
        %4308 = vmatpush.bf16.msra.mxu0 %v2934
        %4309 = vmatpush.bf16.msra.mxu0 %v2930
        %4310 = vmatpush.bf16.msra.mxu0 %v2926
        %4311 = vmatpush.bf16.msra.mxu0 %v2922
        %4312 = vmatpush.bf16.msra.mxu0 %v2918
        %4313 = vmatmul.bf16.gmra.mxu0 %v4170
        %v4314 = vpop.f32.mrf.mxu0
        %v4315 = vadd.f32 %v4302, %v4314
        %v4316 = vpop.f32.mrf.mxu0
        %4317 = vdwg.mxu0
        %4318 = vmatpush.bf16.msra.mxu0 %v2978
        %4319 = vmatpush.bf16.msra.mxu0 %v2974
        %4320 = vmatpush.bf16.msra.mxu0 %v2970
        %4321 = vmatpush.bf16.msra.mxu0 %v2966
        %4322 = vmatpush.bf16.msra.mxu0 %v2962
        %4323 = vmatpush.bf16.msra.mxu0 %v2958
        %4324 = vmatpush.bf16.msra.mxu0 %v2954
        %4325 = vmatpush.bf16.msra.mxu0 %v2950
        %4326 = vmatmul.bf16.gmra.mxu0 %v4171
        %v4327 = vpop.f32.mrf.mxu0
        %v4328 = vadd.f32 %v4315, %v4327
        %v4329 = vpop.f32.mrf.mxu0
        %4330 = vdwg.mxu0
        %v4331 = vxor.u32 %v4211, 2147483648
        %v4332 = vmul.f32 %v4331, 1.442695
        %v4333 = vpow.pop %v4332
        %v4334 = vadd.f32 %v4333, 1.0
        %v4335 = vrcp.pop %v4334
        %v4336 = vmul.f32 %v4334, %v4335
        %v4337 = vsub.f32 1.0, %v4336
        %v4338 = vmul.f32 %v4335, %v4337
        %v4339 = vadd.f32 %v4335, %v4338
        %vm4340 = vweird.f32 %v4334
        %vm4341 = vweird.f32 %v4335
        %vm4342 = vmor %vm4340, %vm4341
        %v4343 = vsel %vm4342, %v4335, %v4339
        %v4344 = vand.u32 2147483647, %v4334
        %vm4345 = vcmp.eq.f32.partialorder %v4344, 8.507059e+37
        %v4346 = vand.u32 %v4334, 2147483648
        %v4347 = vor.u32 1.1754944e-38, %v4346
        %v4348 = vsel %vm4345, %v4347, %v4343
        %v4349 = vmul.f32 1.0, %v4348
        %v4350 = vxor.u32 %v4250, 2147483648
        %v4351 = vmul.f32 %v4350, 1.442695
        %v4352 = vpow.pop %v4351
        %v4353 = vadd.f32 %v4352, 1.0
        %v4354 = vrcp.pop %v4353
        %v4355 = vmul.f32 %v4353, %v4354
        %v4356 = vsub.f32 1.0, %v4355
        %v4357 = vmul.f32 %v4354, %v4356
        %v4358 = vadd.f32 %v4354, %v4357
        %vm4359 = vweird.f32 %v4353
        %vm4360 = vweird.f32 %v4354
        %vm4361 = vmor %vm4359, %vm4360
        %v4362 = vsel %vm4361, %v4354, %v4358
        %v4363 = vand.u32 2147483647, %v4353
        %vm4364 = vcmp.eq.f32.partialorder %v4363, 8.507059e+37
        %v4365 = vand.u32 %v4353, 2147483648
        %v4366 = vor.u32 1.1754944e-38, %v4365
        %v4367 = vsel %vm4364, %v4366, %v4362
        %v4368 = vmul.f32 1.0, %v4367
        %v4369 = vtanh.pop %v4289
        %v4370 = vxor.u32 %v4328, 2147483648
        %v4371 = vmul.f32 %v4370, 1.442695
        %v4372 = vpow.pop %v4371
        %v4373 = vadd.f32 %v4372, 1.0
        %v4374 = vrcp.pop %v4373
        %v4375 = vmul.f32 %v4373, %v4374
        %v4376 = vsub.f32 1.0, %v4375
        %v4377 = vmul.f32 %v4374, %v4376
        %v4378 = vadd.f32 %v4374, %v4377
        %vm4379 = vweird.f32 %v4373
        %vm4380 = vweird.f32 %v4374
        %vm4381 = vmor %vm4379, %vm4380
        %v4382 = vsel %vm4381, %v4374, %v4378
        %v4383 = vand.u32 2147483647, %v4373
        %vm4384 = vcmp.eq.f32.partialorder %v4383, 8.507059e+37
        %v4385 = vand.u32 %v4373, 2147483648
        %v4386 = vor.u32 1.1754944e-38, %v4385
        %v4387 = vsel %vm4384, %v4386, %v4382
        %v4388 = vmul.f32 1.0, %v4387
        %v4389 = vmul.f32 %v4368, %v4116
        %v4390 = vmul.f32 %v4349, %v4369
        %v4391 = vadd.f32 %v4389, %v4390
        %v4392 = vtanh.pop %v4391
        %v4393 = vmul.f32 %v4388, %v4392
        %v4394 = vpack.c.bf16 %v4393, %v4393
        %4395 = vmatpush.bf16.xpose.msra.mxu0 %v2470
        %4396 = vmatpush.bf16.xpose.msra.mxu0 %v2469
        %4397 = vmatpush.bf16.xpose.msra.mxu0 %v2468
        %4398 = vmatpush.bf16.xpose.msra.mxu0 %v2467
        %4399 = vmatpush.bf16.xpose.msra.mxu0 %v2466
        %4400 = vmatpush.bf16.xpose.msra.mxu0 %v2465
        %4401 = vmatpush.bf16.xpose.msra.mxu0 %v2464
        %4402 = vmatpush.bf16.xpose.msra.mxu0 %v2463
        %4403 = vmatmul.bf16.gmra.mxu0 %v4394
        %v4404 = vpop.f32.mrf.mxu0
        %v4405 = vadd.f32 %v2473, %v4404
        %v4406 = vpop.f32.mrf.mxu0
        %4407 = vdwg.mxu0
        %4408 = vmax.xlane.f32.xlu0 %v4405
        %v4409 = vpop.xlane.xlu0 %4408
        %v4410 = vsub.f32 %v4405, %v4409
        %v4411 = vmul.f32 %v4410, 1.442695
        %v4412 = vpow.pop %v4411
        %v4413 = vmul.f32 %v4412, %v2471
        %4414 = vadd.xlane.f32.xlu0 %v4413
        %v4415 = vpop.xlane.xlu0 %4414
        %v4416 = vmax.f32 %v4415, 1e-20
        %v4417 = vrcp.pop %v4416
        %v4418 = vmul.f32 %v4413, %v4417
        %v4419 = vpack.c.bf16 %v4418, %v4418
        %4420 = vmatpush.bf16.msra.mxu0 %v2470
        %4421 = vmatpush.bf16.msra.mxu0 %v2469
        %4422 = vmatpush.bf16.msra.mxu0 %v2468
        %4423 = vmatpush.bf16.msra.mxu0 %v2467
        %4424 = vmatpush.bf16.msra.mxu0 %v2466
        %4425 = vmatpush.bf16.msra.mxu0 %v2465
        %4426 = vmatpush.bf16.msra.mxu0 %v2464
        %4427 = vmatpush.bf16.msra.mxu0 %v2463
        %4428 = vmatmul.bf16.gmra.mxu0 %v4419
        %v4429 = vpop.f32.mrf.mxu0
        %v4430 = vadd.f32 0.0, %v4429
        %v4431 = vpop.f32.mrf.mxu0
        %4432 = vdwg.mxu0
        %4433 = vst [vmem:[#allocation2] sm:$0xf] %v4394
        %v4434 = vpack.c.bf16 %v4430, %v4430
        %4435 = vst [vmem:[#allocation2 + $0x4] sm:$0xf] %v4434
        %4436 = vst [vmem:[#allocation2 + $0x8] sm:$0xf] %v4394
        %v4437 = vld [vmem:[#allocation2] sm:$0xff]
        %v4438 = vld [vmem:[#allocation2 + $0x8] sm:$0xf]
        %v4441 = vunpack.c.l.b16 %v4437
        %v4442 = vunpack.c.h.b16 %v4437
        %v4443 = vunpack.c.l.b16 %v4438
        %v4444 = vpack.c.b16 %v4441, %v4441
        %v4445 = vpack.c.b16 %v4442, %v4442
        %v4446 = vpack.c.b16 %v4443, %v4443
        %4450 = vmatpush.bf16.msra.mxu0 %v2911
        %4451 = vmatpush.bf16.msra.mxu0 %v2907
        %4452 = vmatpush.bf16.msra.mxu0 %v2903
        %4453 = vmatpush.bf16.msra.mxu0 %v2899
        %4454 = vmatpush.bf16.msra.mxu0 %v2895
        %4455 = vmatpush.bf16.msra.mxu0 %v2891
        %4456 = vmatpush.bf16.msra.mxu0 %v2887
        %4457 = vmatpush.bf16.msra.mxu0 %v2883
        %4458 = vmatmul.bf16.gmra.mxu0 %v4444
        %v4459 = vpop.f32.mrf.mxu0
        %v4460 = vadd.f32 %v2576, %v4459
        %v4461 = vpop.f32.mrf.mxu0
        %4462 = vdwg.mxu0
        %4463 = vmatpush.bf16.msra.mxu0 %v2943
        %4464 = vmatpush.bf16.msra.mxu0 %v2939
        %4465 = vmatpush.bf16.msra.mxu0 %v2935
        %4466 = vmatpush.bf16.msra.mxu0 %v2931
        %4467 = vmatpush.bf16.msra.mxu0 %v2927
        %4468 = vmatpush.bf16.msra.mxu0 %v2923
        %4469 = vmatpush.bf16.msra.mxu0 %v2919
        %4470 = vmatpush.bf16.msra.mxu0 %v2915
        %4471 = vmatmul.bf16.gmra.mxu0 %v4445
        %v4472 = vpop.f32.mrf.mxu0
        %v4473 = vadd.f32 %v4460, %v4472
        %v4474 = vpop.f32.mrf.mxu0
        %4475 = vdwg.mxu0
        %4476 = vmatpush.bf16.msra.mxu0 %v2975
        %4477 = vmatpush.bf16.msra.mxu0 %v2971
        %4478 = vmatpush.bf16.msra.mxu0 %v2967
        %4479 = vmatpush.bf16.msra.mxu0 %v2963
        %4480 = vmatpush.bf16.msra.mxu0 %v2959
        %4481 = vmatpush.bf16.msra.mxu0 %v2955
        %4482 = vmatpush.bf16.msra.mxu0 %v2951
        %4483 = vmatpush.bf16.msra.mxu0 %v2947
        %4484 = vmatmul.bf16.gmra.mxu0 %v4446
        %v4485 = vpop.f32.mrf.mxu0
        %v4486 = vadd.f32 %v4473, %v4485
        %v4487 = vpop.f32.mrf.mxu0
        %4488 = vdwg.mxu0
        %4489 = vmatpush.bf16.msra.mxu0 %v2912
        %4490 = vmatpush.bf16.msra.mxu0 %v2908
        %4491 = vmatpush.bf16.msra.mxu0 %v2904
        %4492 = vmatpush.bf16.msra.mxu0 %v2900
        %4493 = vmatpush.bf16.msra.mxu0 %v2896
        %4494 = vmatpush.bf16.msra.mxu0 %v2892
        %4495 = vmatpush.bf16.msra.mxu0 %v2888
        %4496 = vmatpush.bf16.msra.mxu0 %v2884
        %4497 = vmatmul.bf16.gmra.mxu0 %v4444
        %v4498 = vpop.f32.mrf.mxu0
        %v4499 = vadd.f32 %v2577, %v4498
        %v4500 = vpop.f32.mrf.mxu0
        %4501 = vdwg.mxu0
        %4502 = vmatpush.bf16.msra.mxu0 %v2944
        %4503 = vmatpush.bf16.msra.mxu0 %v2940
        %4504 = vmatpush.bf16.msra.mxu0 %v2936
        %4505 = vmatpush.bf16.msra.mxu0 %v2932
        %4506 = vmatpush.bf16.msra.mxu0 %v2928
        %4507 = vmatpush.bf16.msra.mxu0 %v2924
        %4508 = vmatpush.bf16.msra.mxu0 %v2920
        %4509 = vmatpush.bf16.msra.mxu0 %v2916
        %4510 = vmatmul.bf16.gmra.mxu0 %v4445
        %v4511 = vpop.f32.mrf.mxu0
        %v4512 = vadd.f32 %v4499, %v4511
        %v4513 = vpop.f32.mrf.mxu0
        %4514 = vdwg.mxu0
        %4515 = vmatpush.bf16.msra.mxu0 %v2976
        %4516 = vmatpush.bf16.msra.mxu0 %v2972
        %4517 = vmatpush.bf16.msra.mxu0 %v2968
        %4518 = vmatpush.bf16.msra.mxu0 %v2964
        %4519 = vmatpush.bf16.msra.mxu0 %v2960
        %4520 = vmatpush.bf16.msra.mxu0 %v2956
        %4521 = vmatpush.bf16.msra.mxu0 %v2952
        %4522 = vmatpush.bf16.msra.mxu0 %v2948
        %4523 = vmatmul.bf16.gmra.mxu0 %v4446
        %v4524 = vpop.f32.mrf.mxu0
        %v4525 = vadd.f32 %v4512, %v4524
        %v4526 = vpop.f32.mrf.mxu0
        %4527 = vdwg.mxu0
        %4528 = vmatpush.bf16.msra.mxu0 %v2913
        %4529 = vmatpush.bf16.msra.mxu0 %v2909
        %4530 = vmatpush.bf16.msra.mxu0 %v2905
        %4531 = vmatpush.bf16.msra.mxu0 %v2901
        %4532 = vmatpush.bf16.msra.mxu0 %v2897
        %4533 = vmatpush.bf16.msra.mxu0 %v2893
        %4534 = vmatpush.bf16.msra.mxu0 %v2889
        %4535 = vmatpush.bf16.msra.mxu0 %v2885
        %4536 = vmatmul.bf16.gmra.mxu0 %v4444
        %v4537 = vpop.f32.mrf.mxu0
        %v4538 = vadd.f32 %v2578, %v4537
        %v4539 = vpop.f32.mrf.mxu0
        %4540 = vdwg.mxu0
        %4541 = vmatpush.bf16.msra.mxu0 %v2945
        %4542 = vmatpush.bf16.msra.mxu0 %v2941
        %4543 = vmatpush.bf16.msra.mxu0 %v2937
        %4544 = vmatpush.bf16.msra.mxu0 %v2933
        %4545 = vmatpush.bf16.msra.mxu0 %v2929
        %4546 = vmatpush.bf16.msra.mxu0 %v2925
        %4547 = vmatpush.bf16.msra.mxu0 %v2921
        %4548 = vmatpush.bf16.msra.mxu0 %v2917
        %4549 = vmatmul.bf16.gmra.mxu0 %v4445
        %v4550 = vpop.f32.mrf.mxu0
        %v4551 = vadd.f32 %v4538, %v4550
        %v4552 = vpop.f32.mrf.mxu0
        %4553 = vdwg.mxu0
        %4554 = vmatpush.bf16.msra.mxu0 %v2977
        %4555 = vmatpush.bf16.msra.mxu0 %v2973
        %4556 = vmatpush.bf16.msra.mxu0 %v2969
        %4557 = vmatpush.bf16.msra.mxu0 %v2965
        %4558 = vmatpush.bf16.msra.mxu0 %v2961
        %4559 = vmatpush.bf16.msra.mxu0 %v2957
        %4560 = vmatpush.bf16.msra.mxu0 %v2953
        %4561 = vmatpush.bf16.msra.mxu0 %v2949
        %4562 = vmatmul.bf16.gmra.mxu0 %v4446
        %v4563 = vpop.f32.mrf.mxu0
        %v4564 = vadd.f32 %v4551, %v4563
        %v4565 = vpop.f32.mrf.mxu0
        %4566 = vdwg.mxu0
        %4567 = vmatpush.bf16.msra.mxu0 %v2914
        %4568 = vmatpush.bf16.msra.mxu0 %v2910
        %4569 = vmatpush.bf16.msra.mxu0 %v2906
        %4570 = vmatpush.bf16.msra.mxu0 %v2902
        %4571 = vmatpush.bf16.msra.mxu0 %v2898
        %4572 = vmatpush.bf16.msra.mxu0 %v2894
        %4573 = vmatpush.bf16.msra.mxu0 %v2890
        %4574 = vmatpush.bf16.msra.mxu0 %v2886
        %4575 = vmatmul.bf16.gmra.mxu0 %v4444
        %v4576 = vpop.f32.mrf.mxu0
        %v4577 = vadd.f32 %v2579, %v4576
        %v4578 = vpop.f32.mrf.mxu0
        %4579 = vdwg.mxu0
        %4580 = vmatpush.bf16.msra.mxu0 %v2946
        %4581 = vmatpush.bf16.msra.mxu0 %v2942
        %4582 = vmatpush.bf16.msra.mxu0 %v2938
        %4583 = vmatpush.bf16.msra.mxu0 %v2934
        %4584 = vmatpush.bf16.msra.mxu0 %v2930
        %4585 = vmatpush.bf16.msra.mxu0 %v2926
        %4586 = vmatpush.bf16.msra.mxu0 %v2922
        %4587 = vmatpush.bf16.msra.mxu0 %v2918
        %4588 = vmatmul.bf16.gmra.mxu0 %v4445
        %v4589 = vpop.f32.mrf.mxu0
        %v4590 = vadd.f32 %v4577, %v4589
        %v4591 = vpop.f32.mrf.mxu0
        %4592 = vdwg.mxu0
        %4593 = vmatpush.bf16.msra.mxu0 %v2978
        %4594 = vmatpush.bf16.msra.mxu0 %v2974
        %4595 = vmatpush.bf16.msra.mxu0 %v2970
        %4596 = vmatpush.bf16.msra.mxu0 %v2966
        %4597 = vmatpush.bf16.msra.mxu0 %v2962
        %4598 = vmatpush.bf16.msra.mxu0 %v2958
        %4599 = vmatpush.bf16.msra.mxu0 %v2954
        %4600 = vmatpush.bf16.msra.mxu0 %v2950
        %4601 = vmatmul.bf16.gmra.mxu0 %v4446
        %v4602 = vpop.f32.mrf.mxu0
        %v4603 = vadd.f32 %v4590, %v4602
        %v4604 = vpop.f32.mrf.mxu0
        %4605 = vdwg.mxu0
        %v4606 = vxor.u32 %v4486, 2147483648
        %v4607 = vmul.f32 %v4606, 1.442695
        %v4608 = vpow.pop %v4607
        %v4609 = vadd.f32 %v4608, 1.0
        %v4610 = vrcp.pop %v4609
        %v4611 = vmul.f32 %v4609, %v4610
        %v4612 = vsub.f32 1.0, %v4611
        %v4613 = vmul.f32 %v4610, %v4612
        %v4614 = vadd.f32 %v4610, %v4613
        %vm4615 = vweird.f32 %v4609
        %vm4616 = vweird.f32 %v4610
        %vm4617 = vmor %vm4615, %vm4616
        %v4618 = vsel %vm4617, %v4610, %v4614
        %v4619 = vand.u32 2147483647, %v4609
        %vm4620 = vcmp.eq.f32.partialorder %v4619, 8.507059e+37
        %v4621 = vand.u32 %v4609, 2147483648
        %v4622 = vor.u32 1.1754944e-38, %v4621
        %v4623 = vsel %vm4620, %v4622, %v4618
        %v4624 = vmul.f32 1.0, %v4623
        %v4625 = vxor.u32 %v4525, 2147483648
        %v4626 = vmul.f32 %v4625, 1.442695
        %v4627 = vpow.pop %v4626
        %v4628 = vadd.f32 %v4627, 1.0
        %v4629 = vrcp.pop %v4628
        %v4630 = vmul.f32 %v4628, %v4629
        %v4631 = vsub.f32 1.0, %v4630
        %v4632 = vmul.f32 %v4629, %v4631
        %v4633 = vadd.f32 %v4629, %v4632
        %vm4634 = vweird.f32 %v4628
        %vm4635 = vweird.f32 %v4629
        %vm4636 = vmor %vm4634, %vm4635
        %v4637 = vsel %vm4636, %v4629, %v4633
        %v4638 = vand.u32 2147483647, %v4628
        %vm4639 = vcmp.eq.f32.partialorder %v4638, 8.507059e+37
        %v4640 = vand.u32 %v4628, 2147483648
        %v4641 = vor.u32 1.1754944e-38, %v4640
        %v4642 = vsel %vm4639, %v4641, %v4637
        %v4643 = vmul.f32 1.0, %v4642
        %v4644 = vtanh.pop %v4564
        %v4645 = vxor.u32 %v4603, 2147483648
        %v4646 = vmul.f32 %v4645, 1.442695
        %v4647 = vpow.pop %v4646
        %v4648 = vadd.f32 %v4647, 1.0
        %v4649 = vrcp.pop %v4648
        %v4650 = vmul.f32 %v4648, %v4649
        %v4651 = vsub.f32 1.0, %v4650
        %v4652 = vmul.f32 %v4649, %v4651
        %v4653 = vadd.f32 %v4649, %v4652
        %vm4654 = vweird.f32 %v4648
        %vm4655 = vweird.f32 %v4649
        %vm4656 = vmor %vm4654, %vm4655
        %v4657 = vsel %vm4656, %v4649, %v4653
        %v4658 = vand.u32 2147483647, %v4648
        %vm4659 = vcmp.eq.f32.partialorder %v4658, 8.507059e+37
        %v4660 = vand.u32 %v4648, 2147483648
        %v4661 = vor.u32 1.1754944e-38, %v4660
        %v4662 = vsel %vm4659, %v4661, %v4657
        %v4663 = vmul.f32 1.0, %v4662
        %v4664 = vmul.f32 %v4643, %v4391
        %v4665 = vmul.f32 %v4624, %v4644
        %v4666 = vadd.f32 %v4664, %v4665
        %v4667 = vtanh.pop %v4666
        %v4668 = vmul.f32 %v4663, %v4667
        %v4669 = vpack.c.bf16 %v4668, %v4668
        %4670 = vmatpush.bf16.xpose.msra.mxu0 %v2470
        %4671 = vmatpush.bf16.xpose.msra.mxu0 %v2469
        %4672 = vmatpush.bf16.xpose.msra.mxu0 %v2468
        %4673 = vmatpush.bf16.xpose.msra.mxu0 %v2467
        %4674 = vmatpush.bf16.xpose.msra.mxu0 %v2466
        %4675 = vmatpush.bf16.xpose.msra.mxu0 %v2465
        %4676 = vmatpush.bf16.xpose.msra.mxu0 %v2464
        %4677 = vmatpush.bf16.xpose.msra.mxu0 %v2463
        %4678 = vmatmul.bf16.gmra.mxu0 %v4669
        %v4679 = vpop.f32.mrf.mxu0
        %v4680 = vadd.f32 %v2473, %v4679
        %v4681 = vpop.f32.mrf.mxu0
        %4682 = vdwg.mxu0
        %4683 = vmax.xlane.f32.xlu0 %v4680
        %v4684 = vpop.xlane.xlu0 %4683
        %v4685 = vsub.f32 %v4680, %v4684
        %v4686 = vmul.f32 %v4685, 1.442695
        %v4687 = vpow.pop %v4686
        %v4688 = vmul.f32 %v4687, %v2471
        %4689 = vadd.xlane.f32.xlu0 %v4688
        %v4690 = vpop.xlane.xlu0 %4689
        %v4691 = vmax.f32 %v4690, 1e-20
        %v4692 = vrcp.pop %v4691
        %v4693 = vmul.f32 %v4688, %v4692
        %v4694 = vpack.c.bf16 %v4693, %v4693
        %4695 = vmatpush.bf16.msra.mxu0 %v2470
        %4696 = vmatpush.bf16.msra.mxu0 %v2469
        %4697 = vmatpush.bf16.msra.mxu0 %v2468
        %4698 = vmatpush.bf16.msra.mxu0 %v2467
        %4699 = vmatpush.bf16.msra.mxu0 %v2466
        %4700 = vmatpush.bf16.msra.mxu0 %v2465
        %4701 = vmatpush.bf16.msra.mxu0 %v2464
        %4702 = vmatpush.bf16.msra.mxu0 %v2463
        %4703 = vmatmul.bf16.gmra.mxu0 %v4694
        %v4704 = vpop.f32.mrf.mxu0
        %v4705 = vadd.f32 0.0, %v4704
        %v4706 = vpop.f32.mrf.mxu0
        %4707 = vdwg.mxu0
        %4708 = vst [vmem:[#allocation2] sm:$0xf] %v4669
        %v4709 = vpack.c.bf16 %v4705, %v4705
        %4710 = vst [vmem:[#allocation2 + $0x4] sm:$0xf] %v4709
        %4711 = vst [vmem:[#allocation2 + $0x8] sm:$0xf] %v4669
        %v4712 = vld [vmem:[#allocation2] sm:$0xff]
        %v4713 = vld [vmem:[#allocation14] sm:$0xf]
        %v4714 = vld [vmem:[#allocation14 + $0x4] sm:$0xf]
        %v4715 = vld [vmem:[#allocation14 + $0x8] sm:$0xf]
        %v4716 = vld [vmem:[#allocation14 + $0xc] sm:$0xf]
        %v4717 = vld [vmem:[#allocation14 + $0x10] sm:$0xf]
        %v4718 = vld [vmem:[#allocation14 + $0x14] sm:$0xf]
        %v4719 = vld [vmem:[#allocation14 + $0x18] sm:$0xf]
        %v4720 = vld [vmem:[#allocation14 + $0x1c] sm:$0xf]
        %v4721 = vld [vmem:[#allocation14 + $0x20] sm:$0xf]
        %v4722 = vld [vmem:[#allocation14 + $0x24] sm:$0xf]
        %v4723 = vld [vmem:[#allocation14 + $0x28] sm:$0xf]
        %v4724 = vld [vmem:[#allocation14 + $0x2c] sm:$0xf]
        %v4725 = vld [vmem:[#allocation14 + $0x30] sm:$0xf]
        %v4726 = vld [vmem:[#allocation14 + $0x34] sm:$0xf]
        %v4727 = vld [vmem:[#allocation14 + $0x38] sm:$0xf]
        %v4728 = vld [vmem:[#allocation14 + $0x3c] sm:$0xf]
        %v4729 = vld [vmem:[#allocation14 + $0x40] sm:$0xf]
        %v4730 = vld [vmem:[#allocation14 + $0x44] sm:$0xf]
        %v4731 = vld [vmem:[#allocation14 + $0x48] sm:$0xf]
        %v4732 = vld [vmem:[#allocation14 + $0x4c] sm:$0xf]
        %v4733 = vld [vmem:[#allocation14 + $0x50] sm:$0xf]
        %v4734 = vld [vmem:[#allocation14 + $0x54] sm:$0xf]
        %v4735 = vld [vmem:[#allocation14 + $0x58] sm:$0xf]
        %v4736 = vld [vmem:[#allocation14 + $0x5c] sm:$0xf]
        %v4737 = vld [vmem:[#allocation14 + $0x60] sm:$0xf]
        %v4738 = vld [vmem:[#allocation14 + $0x64] sm:$0xf]
        %v4739 = vld [vmem:[#allocation14 + $0x68] sm:$0xf]
        %v4740 = vld [vmem:[#allocation14 + $0x6c] sm:$0xf]
        %v4741 = vld [vmem:[#allocation14 + $0x70] sm:$0xf]
        %v4742 = vld [vmem:[#allocation14 + $0x74] sm:$0xf]
        %v4743 = vld [vmem:[#allocation14 + $0x78] sm:$0xf]
        %v4744 = vld [vmem:[#allocation14 + $0x7c] sm:$0xf]
        %v4745 = vld [vmem:[#allocation16] sm:$0x1]
        %v4747 = vperm.slane %v4745, 0
        %v4750 = vunpack.c.l.b16 %v4712
        %v4751 = vunpack.c.h.b16 %v4712
        %v4752 = vpack.c.b16 %v4750, %v4750
        %v4753 = vpack.c.b16 %v4751, %v4751
        %v4788 = vunpack.c.l.b16 %v4713
        %v4789 = vunpack.c.l.b16 %v4714
        %v4790 = vunpack.c.l.b16 %v4715
        %v4791 = vunpack.c.l.b16 %v4716
        %v4792 = vunpack.c.l.b16 %v4717
        %v4793 = vunpack.c.l.b16 %v4718
        %v4794 = vunpack.c.l.b16 %v4719
        %v4795 = vunpack.c.l.b16 %v4720
        %v4796 = vunpack.c.l.b16 %v4721
        %v4797 = vunpack.c.l.b16 %v4722
        %v4798 = vunpack.c.l.b16 %v4723
        %v4799 = vunpack.c.l.b16 %v4724
        %v4800 = vunpack.c.l.b16 %v4725
        %v4801 = vunpack.c.l.b16 %v4726
        %v4802 = vunpack.c.l.b16 %v4727
        %v4803 = vunpack.c.l.b16 %v4728
        %v4804 = vunpack.c.l.b16 %v4729
        %v4805 = vunpack.c.l.b16 %v4730
        %v4806 = vunpack.c.l.b16 %v4731
        %v4807 = vunpack.c.l.b16 %v4732
        %v4808 = vunpack.c.l.b16 %v4733
        %v4809 = vunpack.c.l.b16 %v4734
        %v4810 = vunpack.c.l.b16 %v4735
        %v4811 = vunpack.c.l.b16 %v4736
        %v4812 = vunpack.c.l.b16 %v4737
        %v4813 = vunpack.c.l.b16 %v4738
        %v4814 = vunpack.c.l.b16 %v4739
        %v4815 = vunpack.c.l.b16 %v4740
        %v4816 = vunpack.c.l.b16 %v4741
        %v4817 = vunpack.c.l.b16 %v4742
        %v4818 = vunpack.c.l.b16 %v4743
        %v4819 = vunpack.c.l.b16 %v4744
        %v4820 = vpack.c.b16 %v4789, %v4788
        %v4821 = vpack.c.b16 %v4791, %v4790
        %v4822 = vpack.c.b16 %v4793, %v4792
        %v4823 = vpack.c.b16 %v4795, %v4794
        %v4824 = vpack.c.b16 %v4797, %v4796
        %v4825 = vpack.c.b16 %v4799, %v4798
        %v4826 = vpack.c.b16 %v4801, %v4800
        %v4827 = vpack.c.b16 %v4803, %v4802
        %v4828 = vpack.c.b16 %v4805, %v4804
        %v4829 = vpack.c.b16 %v4807, %v4806
        %v4830 = vpack.c.b16 %v4809, %v4808
        %v4831 = vpack.c.b16 %v4811, %v4810
        %v4832 = vpack.c.b16 %v4813, %v4812
        %v4833 = vpack.c.b16 %v4815, %v4814
        %v4834 = vpack.c.b16 %v4817, %v4816
        %v4835 = vpack.c.b16 %v4819, %v4818
        %4852 = vmatpush.bf16.msra.mxu0 %v4827
        %4853 = vmatpush.bf16.msra.mxu0 %v4826
        %4854 = vmatpush.bf16.msra.mxu0 %v4825
        %4855 = vmatpush.bf16.msra.mxu0 %v4824
        %4856 = vmatpush.bf16.msra.mxu0 %v4823
        %4857 = vmatpush.bf16.msra.mxu0 %v4822
        %4858 = vmatpush.bf16.msra.mxu0 %v4821
        %4859 = vmatpush.bf16.msra.mxu0 %v4820
        %4860 = vmatmul.bf16.gmra.mxu0 %v4752
        %v4861 = vpop.f32.mrf.mxu0
        %v4862 = vadd.f32 %v4747, %v4861
        %v4863 = vpop.f32.mrf.mxu0
        %4864 = vdwg.mxu0
        %4865 = vmatpush.bf16.msra.mxu0 %v4835
        %4866 = vmatpush.bf16.msra.mxu0 %v4834
        %4867 = vmatpush.bf16.msra.mxu0 %v4833
        %4868 = vmatpush.bf16.msra.mxu0 %v4832
        %4869 = vmatpush.bf16.msra.mxu0 %v4831
        %4870 = vmatpush.bf16.msra.mxu0 %v4830
        %4871 = vmatpush.bf16.msra.mxu0 %v4829
        %4872 = vmatpush.bf16.msra.mxu0 %v4828
        %4873 = vmatmul.bf16.gmra.mxu0 %v4753
        %v4874 = vpop.f32.mrf.mxu0
        %v4875 = vadd.f32 %v4862, %v4874
        %v4876 = vpop.f32.mrf.mxu0
        %4877 = vdwg.mxu0
        %v4878 = vmax.f32 %v4875, 0.0
        %v4879 = vpack.c.bf16 %v4878, %v4878
        %v4880 = vld [vmem:[#allocation17] sm:$0xf]
        %v4881 = vld [vmem:[#allocation17 + $0x4] sm:$0xf]
        %v4882 = vld [vmem:[#allocation17 + $0x8] sm:$0xf]
        %v4883 = vld [vmem:[#allocation17 + $0xc] sm:$0xf]
        %v4884 = vld [vmem:[#allocation17 + $0x10] sm:$0xf]
        %v4885 = vld [vmem:[#allocation17 + $0x14] sm:$0xf]
        %v4886 = vld [vmem:[#allocation17 + $0x18] sm:$0xf]
        %v4887 = vld [vmem:[#allocation17 + $0x1c] sm:$0xf]
        %v4888 = vld [vmem:[#allocation17 + $0x20] sm:$0xf]
        %v4889 = vld [vmem:[#allocation17 + $0x24] sm:$0xf]
        %v4890 = vld [vmem:[#allocation17 + $0x28] sm:$0xf]
        %v4891 = vld [vmem:[#allocation17 + $0x2c] sm:$0xf]
        %v4892 = vld [vmem:[#allocation17 + $0x30] sm:$0xf]
        %v4893 = vld [vmem:[#allocation17 + $0x34] sm:$0xf]
        %v4894 = vld [vmem:[#allocation17 + $0x38] sm:$0xf]
        %v4895 = vld [vmem:[#allocation17 + $0x3c] sm:$0xf]
        %v4896 = vld [vmem:[#allocation19] sm:$0x1]
        %v4898 = vperm.slane %v4896, 0
        %v4916 = vunpack.c.l.b16 %v4880
        %v4917 = vunpack.c.l.b16 %v4881
        %v4918 = vunpack.c.l.b16 %v4882
        %v4919 = vunpack.c.l.b16 %v4883
        %v4920 = vunpack.c.l.b16 %v4884
        %v4921 = vunpack.c.l.b16 %v4885
        %v4922 = vunpack.c.l.b16 %v4886
        %v4923 = vunpack.c.l.b16 %v4887
        %v4924 = vunpack.c.l.b16 %v4888
        %v4925 = vunpack.c.l.b16 %v4889
        %v4926 = vunpack.c.l.b16 %v4890
        %v4927 = vunpack.c.l.b16 %v4891
        %v4928 = vunpack.c.l.b16 %v4892
        %v4929 = vunpack.c.l.b16 %v4893
        %v4930 = vunpack.c.l.b16 %v4894
        %v4931 = vunpack.c.l.b16 %v4895
        %v4932 = vpack.c.b16 %v4917, %v4916
        %v4933 = vpack.c.b16 %v4919, %v4918
        %v4934 = vpack.c.b16 %v4921, %v4920
        %v4935 = vpack.c.b16 %v4923, %v4922
        %v4936 = vpack.c.b16 %v4925, %v4924
        %v4937 = vpack.c.b16 %v4927, %v4926
        %v4938 = vpack.c.b16 %v4929, %v4928
        %v4939 = vpack.c.b16 %v4931, %v4930
        %4948 = vmatpush.bf16.msra.mxu0 %v4939
        %4949 = vmatpush.bf16.msra.mxu0 %v4938
        %4950 = vmatpush.bf16.msra.mxu0 %v4937
        %4951 = vmatpush.bf16.msra.mxu0 %v4936
        %4952 = vmatpush.bf16.msra.mxu0 %v4935
        %4953 = vmatpush.bf16.msra.mxu0 %v4934
        %4954 = vmatpush.bf16.msra.mxu0 %v4933
        %4955 = vmatpush.bf16.msra.mxu0 %v4932
        %4956 = vmatmul.bf16.gmra.mxu0 %v4879
        %v4957 = vpop.f32.mrf.mxu0
        %v4958 = vadd.f32 %v4898, %v4957
        %v4959 = vpop.f32.mrf.mxu0
        %4960 = vdwg.mxu0
        %v4961 = vmax.f32 %v4958, 0.0
        %v4962 = vpack.c.bf16 %v4961, %v4961
        %v4963 = vld [vmem:[#allocation20] sm:$0xf]
        %v4964 = vld [vmem:[#allocation20 + $0x4] sm:$0xf]
        %v4965 = vld [vmem:[#allocation20 + $0x8] sm:$0xf]
        %v4966 = vld [vmem:[#allocation20 + $0xc] sm:$0xf]
        %v4967 = vld [vmem:[#allocation20 + $0x10] sm:$0xf]
        %v4968 = vld [vmem:[#allocation20 + $0x14] sm:$0xf]
        %v4969 = vld [vmem:[#allocation20 + $0x18] sm:$0xf]
        %v4970 = vld [vmem:[#allocation20 + $0x1c] sm:$0xf]
        %v4971 = vld [vmem:[#allocation20 + $0x20] sm:$0xf]
        %v4972 = vld [vmem:[#allocation20 + $0x24] sm:$0xf]
        %v4973 = vld [vmem:[#allocation20 + $0x28] sm:$0xf]
        %v4974 = vld [vmem:[#allocation20 + $0x2c] sm:$0xf]
        %v4975 = vld [vmem:[#allocation20 + $0x30] sm:$0xf]
        %v4976 = vld [vmem:[#allocation20 + $0x34] sm:$0xf]
        %v4977 = vld [vmem:[#allocation20 + $0x38] sm:$0xf]
        %v4978 = vld [vmem:[#allocation20 + $0x3c] sm:$0xf]
        %v4979 = vld [vmem:[#allocation22] sm:$0x1]
        %v4981 = vperm.slane %v4979, 0
        %v4999 = vunpack.c.l.b16 %v4963
        %v5000 = vunpack.c.l.b16 %v4964
        %v5001 = vunpack.c.l.b16 %v4965
        %v5002 = vunpack.c.l.b16 %v4966
        %v5003 = vunpack.c.l.b16 %v4967
        %v5004 = vunpack.c.l.b16 %v4968
        %v5005 = vunpack.c.l.b16 %v4969
        %v5006 = vunpack.c.l.b16 %v4970
        %v5007 = vunpack.c.l.b16 %v4971
        %v5008 = vunpack.c.l.b16 %v4972
        %v5009 = vunpack.c.l.b16 %v4973
        %v5010 = vunpack.c.l.b16 %v4974
        %v5011 = vunpack.c.l.b16 %v4975
        %v5012 = vunpack.c.l.b16 %v4976
        %v5013 = vunpack.c.l.b16 %v4977
        %v5014 = vunpack.c.l.b16 %v4978
        %v5015 = vpack.c.b16 %v5000, %v4999
        %v5016 = vpack.c.b16 %v5002, %v5001
        %v5017 = vpack.c.b16 %v5004, %v5003
        %v5018 = vpack.c.b16 %v5006, %v5005
        %v5019 = vpack.c.b16 %v5008, %v5007
        %v5020 = vpack.c.b16 %v5010, %v5009
        %v5021 = vpack.c.b16 %v5012, %v5011
        %v5022 = vpack.c.b16 %v5014, %v5013
        %5031 = vmatpush.bf16.msra.mxu0 %v5022
        %5032 = vmatpush.bf16.msra.mxu0 %v5021
        %5033 = vmatpush.bf16.msra.mxu0 %v5020
        %5034 = vmatpush.bf16.msra.mxu0 %v5019
        %5035 = vmatpush.bf16.msra.mxu0 %v5018
        %5036 = vmatpush.bf16.msra.mxu0 %v5017
        %5037 = vmatpush.bf16.msra.mxu0 %v5016
        %5038 = vmatpush.bf16.msra.mxu0 %v5015
        %5039 = vmatmul.bf16.gmra.mxu0 %v4962
        %v5040 = vpop.f32.mrf.mxu0
        %v5041 = vadd.f32 %v4981, %v5040
        %v5042 = vpop.f32.mrf.mxu0
        %5043 = vdwg.mxu0
        %5044 = vst [vmem:[%s805] sm:$0xff] %v5041
        %p5045 = scmp.lt.s32.totalorder %s39, 1
        %s5046 = scalar_select %p5045, %s39, 1
        %s5047 = smul.addr %s5046, 8
        %s5048 = scalar_lea.vmem %s17, %s5047
        // Predicated region
        $region141: #{rtgn_gat_forward.1} parent=87 // pred_check
          %p5049 = pneg %p429
        $region142: #{rtgn_gat_forward.1} parent=87 // pred_check_branch
          %5051 = sbr.rel (%p5049) target = $region144
        $region143: #{rtgn_gat_forward.1} parent=87 // pred_region
          _
        $region144: #{rtgn_gat_forward.1} parent=87 // pred_fallthru
          _
      $region88: #{rtgn_gat_forward.1} parent=5 // pred_fallthru
        _
      %p5052 = scmp.le.s32.totalorder 2, %s34
      // Predicated region
      $region145: #{rtgn_gat_forward.1} parent=5 // pred_check
        %p5053 = pneg %p5052
      $region146: #{rtgn_gat_forward.1} parent=5 // pred_check_branch
        %5055 = sbr.rel (%p5053) target = $region148
      $region147: #{rtgn_gat_forward.1} parent=5 // pred_region
        %s5056 = ssub.s32 %s34, 2
        // Predicated region
        $region149: #{rtgn_gat_forward.1} parent=147 // pred_check
          %p5057 = pneg %p435
        $region150: #{rtgn_gat_forward.1} parent=147 // pred_check_branch
          %5059 = sbr.rel (%p5057) target = $region152
        $region151: #{rtgn_gat_forward.1} parent=147 // pred_region
          %p5060 = scmp.lt.s32.totalorder %s40, 1
          %s5061 = scalar_select %p5060, %s40, 1
          %s5062 = smul.addr %s5061, 8
          %s5063 = scalar_lea.vmem %s17, %s5062
        $region152: #{rtgn_gat_forward.1} parent=147 // pred_fallthru
          _
      $region148: #{rtgn_gat_forward.1} parent=5 // pred_fallthru
        _
    $region6: #{rtgn_gat_forward.1} parent=1 // loop_footer
      %s38 = sadd.s32 1, %s34
    $region7: #{rtgn_gat_forward.1} parent=1 // loop_footer_branch
      %33 = sbr.rel target = $region3
    $region8: #{rtgn_gat_forward.1} parent=1 // loop_exit
      _
    %5064 = vsyncpa [#allocation4], 1
    %s5065 = scalar_lea.sflag [#allocation4], 1
    %5066 = vsyncpa %s5065, 1
    %5067 = vsyncpa [#allocation6], 1
    %s5068 = scalar_lea.sflag [#allocation6], 1
    %5069 = vsyncpa %s5068, 1
    %5070 = vsyncpa [#allocation9], 1
    %5071 = vsyncpa [#allocation12], 1
    %5072 = vsyncpa [#allocation15], 1
    %5073 = vsyncpa [#allocation18], 1
    %5074 = vsyncpa [#allocation21], 1

</llo_original>
